<compile_context>
chip_gen: v7x
topology: tpu7x:2x2x1
jax: 0.10.0
libtpu: 0.0.40
codegen_flags: <defaults>
</compile_context>

<pallas_src>
import functools

import jax
import jax.numpy as jnp
from jax.experimental import pallas as pl
from jax.experimental.pallas import tpu as pltpu


_NEG_BIG = -1e30  # fill for padded softmax rows: exp -> 0 without inf arithmetic


def _fm_attention_kernel(xt_ref, wc_ref, b1_ref, w2_ref, out_ref,
                         logit_ref, proj_ref, *, num, af, n_pairs, p_pad):
    """One grid step: Bt batch elements (on lanes), all P = num*(num-1)/2 pairs.

    xt_ref  : (num, D, Bt)  embeddings, batch on lanes (bf16 or f32)
    wc_ref  : (AF+1, D)     rows [:AF] = att[0].weight, row [AF] = p.weight
    b1_ref  : (AF, 1)       att[0].bias (column)
    w2_ref  : (1, AF)       att[2].weight (row)
    out_ref : (1, Bt)       per-batch-element scalar output (lane dense)
    logit_ref, proj_ref : (P_pad, Bt) VMEM scratch for the deferred softmax
    """
    wc = wc_ref[...]
    b1 = b1_ref[...]
    w2 = w2_ref[...]
    bt = out_ref.shape[1]

    # Initialize padded softmax rows: exp -> 0 and zero numerator contribution.
    if p_pad > n_pairs:
        pad = p_pad - n_pairs
        logit_ref[pl.ds(n_pairs, pad), :] = jnp.full((pad, bt), _NEG_BIG, jnp.float32)
        proj_ref[pl.ds(n_pairs, pad), :] = jnp.zeros((pad, bt), jnp.float32)

    # Static nested unroll over the (i < j) pairs; the xt[i] slab stays in vregs across
    # its inner-j iterations (halves vld pressure vs. a flat pair list).
    p = 0
    for i in range(num):
        xi = xt_ref[i].astype(jnp.float32)                          # (D, Bt)
        for j in range(i + 1, num):
            a = xi * xt_ref[j].astype(jnp.float32)                  # (D, Bt) pair product
            # One MXU contraction yields hidden pre-activations (rows :AF) AND <a, wp>
            # (row AF) -- no per-pair VPU projection / XLU reduce needed.
            h = jnp.dot(wc, a, preferred_element_type=jnp.float32)  # (AF+1, Bt)
            hid = jnp.maximum(h[:af, :] + b1, 0.0)                  # (AF, Bt)  ReLU
            logit = jnp.dot(w2, hid, preferred_element_type=jnp.float32)  # (1, Bt) MXU
            logit_ref[pl.ds(p, 1), :] = logit
            proj_ref[pl.ds(p, 1), :] = h[af:af + 1, :]
            p += 1

    # Deferred, fully dense softmax over the pair (sublane) axis.
    logits = logit_ref[...]                                          # (P_pad, Bt)
    projs = proj_ref[...]                                            # (P_pad, Bt)
    m = jnp.max(logits, axis=0, keepdims=True)                       # (1, Bt)
    e = jnp.exp(logits - m)                                          # dense EUP exps
    denom = jnp.sum(e, axis=0, keepdims=True)                        # (1, Bt)
    numer = jnp.sum(e * projs, axis=0, keepdims=True)                # (1, Bt)
    out_ref[...] = numer * pl.reciprocal(denom, approx=False)


def fm_attention(x, w1t, b1, w2, wp, *, block_b=None, input_dtype=jnp.bfloat16):
    """Forward pass of FMAttention.

    x   : (B, num, D) float32
    w1t : (AF, D)  == torch att[0].weight
    b1  : (AF,)    == torch att[0].bias
    w2  : (AF,)    == torch att[2].weight[0]
    wp  : (D,)     == torch p.weight[0]
    returns (B,) float32 (matches torch forward's squeeze(1)).
    """
    B, num, D = x.shape
    AF = w1t.shape[0]
    n_pairs = num * (num - 1) // 2
    p_pad = max(8, ((n_pairs + 7) // 8) * 8)

    # Batch tile (lane axis).  The VMEM footprint is tiny (~Bt KiB); the real ceiling is
    # vreg pressure from the (D, Bt) f32 slabs and the (AF+1, Bt) matmul result, so cap
    # at 512 by default.  Once B >= 256 ensure >= 2 grid steps so the "parallel" axis
    # shards across both v7x TensorCores.  Sweep {256, 512, 1024} on real shapes.
    if block_b is None:
        if B <= 128:
            block_b = B
        elif B < 256:
            block_b = 128
        else:
            block_b = min(512, max(128, ((B // 2) // 128) * 128))
    bt = int(block_b)
    nb = pl.cdiv(B, bt)
    b_pad = nb * bt
    if b_pad != B:
        # TODO(synk): handle a ragged batch tail with masking / a smaller final block
        # instead of a padded copy when B % bt != 0 on production shapes.
        x = jnp.pad(x, ((0, b_pad - B), (0, 0), (0, 0)))

    # Batch goes on lanes once.  bf16 halves HBM traffic for both this transpose and the
    # kernel's single read of the embeddings; the kernel upcasts to f32 right after load
    # so VPU math stays f32 on every chip generation (v5e has no bf16 VALU).
    # TODO(synk): have the upstream producer emit embeddings already in (num, D, B)
    # layout to remove this extra HBM pass entirely.
    xt = jnp.transpose(x.astype(input_dtype), (1, 2, 0))             # (num, D, B_pad)

    # Stack the final projection under the attention weight so one MXU contraction
    # produces both the hidden pre-activations and <att_x, wp>.
    wc = jnp.concatenate(
        [w1t.astype(jnp.float32), wp.reshape(1, D).astype(jnp.float32)], axis=0
    )                                                                 # (AF+1, D)
    b1c = b1.reshape(AF, 1).astype(jnp.float32)
    w2r = w2.reshape(1, AF).astype(jnp.float32)

    kernel = functools.partial(
        _fm_attention_kernel, num=num, af=AF, n_pairs=n_pairs, p_pad=p_pad
    )

    out = pl.pallas_call(
        kernel,
        out_shape=jax.ShapeDtypeStruct((1, b_pad), jnp.float32),
        grid_spec=pltpu.PrefetchScalarGridSpec(
            num_scalar_prefetch=0,
            grid=(nb,),
            in_specs=[
                pl.BlockSpec((num, D, bt), lambda b: (0, 0, b)),      # embeddings (x^T)
                pl.BlockSpec((AF + 1, D), lambda b: (0, 0)),          # [w1t; wp]
                pl.BlockSpec((AF, 1), lambda b: (0, 0)),              # b1
                pl.BlockSpec((1, AF), lambda b: (0, 0)),              # w2 row
            ],
            out_specs=pl.BlockSpec((1, bt), lambda b: (0, b)),        # lane-dense output
            scratch_shapes=[
                pltpu.VMEM((p_pad, bt), jnp.float32),                 # per-pair logits
                pltpu.VMEM((p_pad, bt), jnp.float32),                 # per-pair <att_x, wp>
            ],
        ),
        compiler_params=pltpu.CompilerParams(
            dimension_semantics=("parallel",),
        ),
    )(xt, wc, b1c, w2r)
    return out[0, :B]


if __name__ == "__main__":
    # Small shapes consistent with the module: embed_dim=32, attention_factor=16,
    # batch=2, num feature fields=8 -> 28 (i<j) pairs.
    B, num, D, AF = 2, 8, 32, 16

    key = jax.random.PRNGKey(0)
    k_x, k_w1, k_b1, k_w2, k_wp = jax.random.split(key, 5)
    x = jax.random.normal(k_x, (B, num, D), jnp.float32)

    # Deterministic synthetic parameters in torch layouts:
    #   att[0].weight (AF, D), att[0].bias (AF,),
    #   att[2].weight (1, AF) -> (AF,), p.weight (1, D) -> (D,)
    w1t = 0.1 * jax.random.normal(k_w1, (AF, D), jnp.float32)
    b1 = 0.1 * jax.random.normal(k_b1, (AF,), jnp.float32)
    w2 = 0.1 * jax.random.normal(k_w2, (AF,), jnp.float32)
    wp = 0.1 * jax.random.normal(k_wp, (D,), jnp.float32)

    out = jax.jit(fm_attention)(x, w1t, b1, w2, wp)
    out = jax.block_until_ready(out)
    assert out.shape == (B,)

    # Pure-JAX reference of the same forward.  Use the same bf16-quantised embeddings
    # the kernel consumes (all subsequent math is f32 in both), so the check isolates
    # kernel math from input quantisation.
    xq = x.astype(jnp.bfloat16).astype(jnp.float32)
    ii, jj = jnp.triu_indices(num, k=1)
    att_x = xq[:, ii, :] * xq[:, jj, :]                               # (B, P, D)
    h_ref = jnp.maximum(jnp.einsum("bpd,fd->bpf", att_x, w1t) + b1, 0.0)
    logits_ref = jnp.einsum("bpf,f->bp", h_ref, w2)
    score_ref = jax.nn.softmax(logits_ref, axis=1)
    att_out_ref = jnp.sum(att_x * score_ref[..., None], axis=1)       # (B, D)
    ref = att_out_ref @ wp                                            # (B,)

    assert jnp.allclose(out, ref, atol=1e-3, rtol=1e-3), (out, ref)

    print("KERNEL_OK")
</pallas_src>

<mosaic_0001>
module attributes {stable_mosaic.version = 11 : i64} {
  func.func @_fm_attention_kernel(%arg0: i32, %arg1: memref<8x32x2xbf16, #tpu.memory_space<vmem>>, %arg2: memref<17x32xf32, #tpu.memory_space<vmem>>, %arg3: memref<16x1xf32, #tpu.memory_space<vmem>>, %arg4: memref<1x16xf32, #tpu.memory_space<vmem>>, %arg5: memref<1x2xf32, #tpu.memory_space<vmem>>, %arg6: memref<32x2xf32, #tpu.memory_space<vmem>>, %arg7: memref<32x2xf32, #tpu.memory_space<vmem>>) attributes {dimension_semantics = [#tpu.dimension_semantics<parallel>], iteration_bounds = array<i64: 1>, scalar_prefetch = 0 : i64, scratch_operands = 2 : i64, tpu.core_type = #tpu.core_type<tc>, window_params = [{transform_indices = @transform_0, window_bounds = array<i64: 8, 32, 2>}, {pipeline_mode = #tpu.pipeline_mode<synchronous>, transform_indices = @transform_1, window_bounds = array<i64: 17, 32>}, {pipeline_mode = #tpu.pipeline_mode<synchronous>, transform_indices = @transform_2, window_bounds = array<i64: 16, 1>}, {pipeline_mode = #tpu.pipeline_mode<synchronous>, transform_indices = @transform_3, window_bounds = array<i64: 1, 16>}, {transform_indices = @transform_4, window_bounds = array<i64: 1, 2>}]} {
    %c0 = arith.constant 0 : index
    %c0_0 = arith.constant 0 : index
    %0 = vector.load %arg2[%c0, %c0_0] : memref<17x32xf32, #tpu.memory_space<vmem>>, vector<17x32xf32>
    %c0_1 = arith.constant 0 : index
    %c0_2 = arith.constant 0 : index
    %1 = vector.load %arg3[%c0_1, %c0_2] : memref<16x1xf32, #tpu.memory_space<vmem>>, vector<16x1xf32>
    %c0_3 = arith.constant 0 : index
    %c0_4 = arith.constant 0 : index
    %2 = vector.load %arg4[%c0_3, %c0_4] : memref<1x16xf32, #tpu.memory_space<vmem>>, vector<1x16xf32>
    %cst = arith.constant -1.000000e+30 : f32
    %3 = vector.broadcast %cst : f32 to vector<4x2xf32>
    %c28 = arith.constant 28 : index
    %c0_5 = arith.constant 0 : index
    %4 = vector.load %arg6[%c28, %c0_5] : memref<32x2xf32, #tpu.memory_space<vmem>>, vector<4x2xf32>
    tpu.vector_store %arg6[%c28, %c0_5], %3 {strides = array<i32>} : memref<32x2xf32, #tpu.memory_space<vmem>>, vector<4x2xf32>,
    %cst_6 = arith.constant 0.000000e+00 : f32
    %5 = vector.broadcast %cst_6 : f32 to vector<4x2xf32>
    %c28_7 = arith.constant 28 : index
    %c0_8 = arith.constant 0 : index
    %6 = vector.load %arg7[%c28_7, %c0_8] : memref<32x2xf32, #tpu.memory_space<vmem>>, vector<4x2xf32>
    tpu.vector_store %arg7[%c28_7, %c0_8], %5 {strides = array<i32>} : memref<32x2xf32, #tpu.memory_space<vmem>>, vector<4x2xf32>,
    %c0_9 = arith.constant 0 : index
    %c0_10 = arith.constant 0 : index
    %c0_11 = arith.constant 0 : index
    %7 = vector.load %arg1[%c0_9, %c0_10, %c0_11] : memref<8x32x2xbf16, #tpu.memory_space<vmem>>, vector<1x32x2xbf16>
    %8 = vector.shape_cast %7 : vector<1x32x2xbf16> to vector<32x2xbf16>
    %9 = arith.extf %8 : vector<32x2xbf16> to vector<32x2xf32>
    %c1 = arith.constant 1 : index
    %c0_12 = arith.constant 0 : index
    %c0_13 = arith.constant 0 : index
    %10 = vector.load %arg1[%c1, %c0_12, %c0_13] : memref<8x32x2xbf16, #tpu.memory_space<vmem>>, vector<1x32x2xbf16>
    %11 = vector.shape_cast %10 : vector<1x32x2xbf16> to vector<32x2xbf16>
    %12 = arith.extf %11 : vector<32x2xbf16> to vector<32x2xf32>
    %13 = arith.mulf %9, %12 : vector<32x2xf32>
    %cst_14 = arith.constant dense<0.000000e+00> : vector<17x2xf32>
    %14 = tpu.matmul %0, %13, %cst_14 {dimension_numbers = #tpu.dot_dimension_numbers<[1], [0], [0], [1], [0, 0, 1, 1], [], []>} : vector<17x32xf32>, vector<32x2xf32>, vector<17x2xf32> -> vector<17x2xf32>
    %15 = vector.extract_strided_slice %14 {offsets = [0, 0], sizes = [16, 2], strides = [1, 1]} : vector<17x2xf32> to vector<16x2xf32>
    %16 = vector.broadcast %1 : vector<16x1xf32> to vector<16x2xf32>
    %17 = arith.addf %15, %16 : vector<16x2xf32>
    %cst_15 = arith.constant 0.000000e+00 : f32
    %18 = vector.broadcast %cst_15 : f32 to vector<16x2xf32>
    %19 = arith.maximumf %17, %18 : vector<16x2xf32>
    %cst_16 = arith.constant dense<0.000000e+00> : vector<1x2xf32>
    %20 = tpu.matmul %2, %19, %cst_16 {dimension_numbers = #tpu.dot_dimension_numbers<[1], [0], [0], [1], [0, 0, 1, 1], [], []>} : vector<1x16xf32>, vector<16x2xf32>, vector<1x2xf32> -> vector<1x2xf32>
    %c0_17 = arith.constant 0 : index
    %c0_18 = arith.constant 0 : index
    %21 = vector.load %arg6[%c0_17, %c0_18] : memref<32x2xf32, #tpu.memory_space<vmem>>, vector<1x2xf32>
    tpu.vector_store %arg6[%c0_17, %c0_18], %20 {strides = array<i32>} : memref<32x2xf32, #tpu.memory_space<vmem>>, vector<1x2xf32>,
    %22 = vector.extract_strided_slice %14 {offsets = [16, 0], sizes = [1, 2], strides = [1, 1]} : vector<17x2xf32> to vector<1x2xf32>
    %c0_19 = arith.constant 0 : index
    %c0_20 = arith.constant 0 : index
    %23 = vector.load %arg7[%c0_19, %c0_20] : memref<32x2xf32, #tpu.memory_space<vmem>>, vector<1x2xf32>
    tpu.vector_store %arg7[%c0_19, %c0_20], %22 {strides = array<i32>} : memref<32x2xf32, #tpu.memory_space<vmem>>, vector<1x2xf32>,
    %c2 = arith.constant 2 : index
    %c0_21 = arith.constant 0 : index
    %c0_22 = arith.constant 0 : index
    %24 = vector.load %arg1[%c2, %c0_21, %c0_22] : memref<8x32x2xbf16, #tpu.memory_space<vmem>>, vector<1x32x2xbf16>
    %25 = vector.shape_cast %24 : vector<1x32x2xbf16> to vector<32x2xbf16>
    %26 = arith.extf %25 : vector<32x2xbf16> to vector<32x2xf32>
    %27 = arith.mulf %9, %26 : vector<32x2xf32>
    %cst_23 = arith.constant dense<0.000000e+00> : vector<17x2xf32>
    %28 = tpu.matmul %0, %27, %cst_23 {dimension_numbers = #tpu.dot_dimension_numbers<[1], [0], [0], [1], [0, 0, 1, 1], [], []>} : vector<17x32xf32>, vector<32x2xf32>, vector<17x2xf32> -> vector<17x2xf32>
    %29 = vector.extract_strided_slice %28 {offsets = [0, 0], sizes = [16, 2], strides = [1, 1]} : vector<17x2xf32> to vector<16x2xf32>
    %30 = vector.broadcast %1 : vector<16x1xf32> to vector<16x2xf32>
    %31 = arith.addf %29, %30 : vector<16x2xf32>
    %cst_24 = arith.constant 0.000000e+00 : f32
    %32 = vector.broadcast %cst_24 : f32 to vector<16x2xf32>
    %33 = arith.maximumf %31, %32 : vector<16x2xf32>
    %cst_25 = arith.constant dense<0.000000e+00> : vector<1x2xf32>
    %34 = tpu.matmul %2, %33, %cst_25 {dimension_numbers = #tpu.dot_dimension_numbers<[1], [0], [0], [1], [0, 0, 1, 1], [], []>} : vector<1x16xf32>, vector<16x2xf32>, vector<1x2xf32> -> vector<1x2xf32>
    %c1_26 = arith.constant 1 : index
    %c0_27 = arith.constant 0 : index
    %35 = vector.load %arg6[%c1_26, %c0_27] : memref<32x2xf32, #tpu.memory_space<vmem>>, vector<1x2xf32>
    tpu.vector_store %arg6[%c1_26, %c0_27], %34 {strides = array<i32>} : memref<32x2xf32, #tpu.memory_space<vmem>>, vector<1x2xf32>,
    %36 = vector.extract_strided_slice %28 {offsets = [16, 0], sizes = [1, 2], strides = [1, 1]} : vector<17x2xf32> to vector<1x2xf32>
    %c1_28 = arith.constant 1 : index
    %c0_29 = arith.constant 0 : index
    %37 = vector.load %arg7[%c1_28, %c0_29] : memref<32x2xf32, #tpu.memory_space<vmem>>, vector<1x2xf32>
    tpu.vector_store %arg7[%c1_28, %c0_29], %36 {strides = array<i32>} : memref<32x2xf32, #tpu.memory_space<vmem>>, vector<1x2xf32>,
    %c3 = arith.constant 3 : index
    %c0_30 = arith.constant 0 : index
    %c0_31 = arith.constant 0 : index
    %38 = vector.load %arg1[%c3, %c0_30, %c0_31] : memref<8x32x2xbf16, #tpu.memory_space<vmem>>, vector<1x32x2xbf16>
    %39 = vector.shape_cast %38 : vector<1x32x2xbf16> to vector<32x2xbf16>
    %40 = arith.extf %39 : vector<32x2xbf16> to vector<32x2xf32>
    %41 = arith.mulf %9, %40 : vector<32x2xf32>
    %cst_32 = arith.constant dense<0.000000e+00> : vector<17x2xf32>
    %42 = tpu.matmul %0, %41, %cst_32 {dimension_numbers = #tpu.dot_dimension_numbers<[1], [0], [0], [1], [0, 0, 1, 1], [], []>} : vector<17x32xf32>, vector<32x2xf32>, vector<17x2xf32> -> vector<17x2xf32>
    %43 = vector.extract_strided_slice %42 {offsets = [0, 0], sizes = [16, 2], strides = [1, 1]} : vector<17x2xf32> to vector<16x2xf32>
    %44 = vector.broadcast %1 : vector<16x1xf32> to vector<16x2xf32>
    %45 = arith.addf %43, %44 : vector<16x2xf32>
    %cst_33 = arith.constant 0.000000e+00 : f32
    %46 = vector.broadcast %cst_33 : f32 to vector<16x2xf32>
    %47 = arith.maximumf %45, %46 : vector<16x2xf32>
    %cst_34 = arith.constant dense<0.000000e+00> : vector<1x2xf32>
    %48 = tpu.matmul %2, %47, %cst_34 {dimension_numbers = #tpu.dot_dimension_numbers<[1], [0], [0], [1], [0, 0, 1, 1], [], []>} : vector<1x16xf32>, vector<16x2xf32>, vector<1x2xf32> -> vector<1x2xf32>
    %c2_35 = arith.constant 2 : index
    %c0_36 = arith.constant 0 : index
    %49 = vector.load %arg6[%c2_35, %c0_36] : memref<32x2xf32, #tpu.memory_space<vmem>>, vector<1x2xf32>
    tpu.vector_store %arg6[%c2_35, %c0_36], %48 {strides = array<i32>} : memref<32x2xf32, #tpu.memory_space<vmem>>, vector<1x2xf32>,
    %50 = vector.extract_strided_slice %42 {offsets = [16, 0], sizes = [1, 2], strides = [1, 1]} : vector<17x2xf32> to vector<1x2xf32>
    %c2_37 = arith.constant 2 : index
    %c0_38 = arith.constant 0 : index
    %51 = vector.load %arg7[%c2_37, %c0_38] : memref<32x2xf32, #tpu.memory_space<vmem>>, vector<1x2xf32>
    tpu.vector_store %arg7[%c2_37, %c0_38], %50 {strides = array<i32>} : memref<32x2xf32, #tpu.memory_space<vmem>>, vector<1x2xf32>,
    %c4 = arith.constant 4 : index
    %c0_39 = arith.constant 0 : index
    %c0_40 = arith.constant 0 : index
    %52 = vector.load %arg1[%c4, %c0_39, %c0_40] : memref<8x32x2xbf16, #tpu.memory_space<vmem>>, vector<1x32x2xbf16>
    %53 = vector.shape_cast %52 : vector<1x32x2xbf16> to vector<32x2xbf16>
    %54 = arith.extf %53 : vector<32x2xbf16> to vector<32x2xf32>
    %55 = arith.mulf %9, %54 : vector<32x2xf32>
    %cst_41 = arith.constant dense<0.000000e+00> : vector<17x2xf32>
    %56 = tpu.matmul %0, %55, %cst_41 {dimension_numbers = #tpu.dot_dimension_numbers<[1], [0], [0], [1], [0, 0, 1, 1], [], []>} : vector<17x32xf32>, vector<32x2xf32>, vector<17x2xf32> -> vector<17x2xf32>
    %57 = vector.extract_strided_slice %56 {offsets = [0, 0], sizes = [16, 2], strides = [1, 1]} : vector<17x2xf32> to vector<16x2xf32>
    %58 = vector.broadcast %1 : vector<16x1xf32> to vector<16x2xf32>
    %59 = arith.addf %57, %58 : vector<16x2xf32>
    %cst_42 = arith.constant 0.000000e+00 : f32
    %60 = vector.broadcast %cst_42 : f32 to vector<16x2xf32>
    %61 = arith.maximumf %59, %60 : vector<16x2xf32>
    %cst_43 = arith.constant dense<0.000000e+00> : vector<1x2xf32>
    %62 = tpu.matmul %2, %61, %cst_43 {dimension_numbers = #tpu.dot_dimension_numbers<[1], [0], [0], [1], [0, 0, 1, 1], [], []>} : vector<1x16xf32>, vector<16x2xf32>, vector<1x2xf32> -> vector<1x2xf32>
    %c3_44 = arith.constant 3 : index
    %c0_45 = arith.constant 0 : index
    %63 = vector.load %arg6[%c3_44, %c0_45] : memref<32x2xf32, #tpu.memory_space<vmem>>, vector<1x2xf32>
    tpu.vector_store %arg6[%c3_44, %c0_45], %62 {strides = array<i32>} : memref<32x2xf32, #tpu.memory_space<vmem>>, vector<1x2xf32>,
    %64 = vector.extract_strided_slice %56 {offsets = [16, 0], sizes = [1, 2], strides = [1, 1]} : vector<17x2xf32> to vector<1x2xf32>
    %c3_46 = arith.constant 3 : index
    %c0_47 = arith.constant 0 : index
    %65 = vector.load %arg7[%c3_46, %c0_47] : memref<32x2xf32, #tpu.memory_space<vmem>>, vector<1x2xf32>
    tpu.vector_store %arg7[%c3_46, %c0_47], %64 {strides = array<i32>} : memref<32x2xf32, #tpu.memory_space<vmem>>, vector<1x2xf32>,
    %c5 = arith.constant 5 : index
    %c0_48 = arith.constant 0 : index
    %c0_49 = arith.constant 0 : index
    %66 = vector.load %arg1[%c5, %c0_48, %c0_49] : memref<8x32x2xbf16, #tpu.memory_space<vmem>>, vector<1x32x2xbf16>
    %67 = vector.shape_cast %66 : vector<1x32x2xbf16> to vector<32x2xbf16>
    %68 = arith.extf %67 : vector<32x2xbf16> to vector<32x2xf32>
    %69 = arith.mulf %9, %68 : vector<32x2xf32>
    %cst_50 = arith.constant dense<0.000000e+00> : vector<17x2xf32>
    %70 = tpu.matmul %0, %69, %cst_50 {dimension_numbers = #tpu.dot_dimension_numbers<[1], [0], [0], [1], [0, 0, 1, 1], [], []>} : vector<17x32xf32>, vector<32x2xf32>, vector<17x2xf32> -> vector<17x2xf32>
    %71 = vector.extract_strided_slice %70 {offsets = [0, 0], sizes = [16, 2], strides = [1, 1]} : vector<17x2xf32> to vector<16x2xf32>
    %72 = vector.broadcast %1 : vector<16x1xf32> to vector<16x2xf32>
    %73 = arith.addf %71, %72 : vector<16x2xf32>
    %cst_51 = arith.constant 0.000000e+00 : f32
    %74 = vector.broadcast %cst_51 : f32 to vector<16x2xf32>
    %75 = arith.maximumf %73, %74 : vector<16x2xf32>
    %cst_52 = arith.constant dense<0.000000e+00> : vector<1x2xf32>
    %76 = tpu.matmul %2, %75, %cst_52 {dimension_numbers = #tpu.dot_dimension_numbers<[1], [0], [0], [1], [0, 0, 1, 1], [], []>} : vector<1x16xf32>, vector<16x2xf32>, vector<1x2xf32> -> vector<1x2xf32>
    %c4_53 = arith.constant 4 : index
    %c0_54 = arith.constant 0 : index
    %77 = vector.load %arg6[%c4_53, %c0_54] : memref<32x2xf32, #tpu.memory_space<vmem>>, vector<1x2xf32>
    tpu.vector_store %arg6[%c4_53, %c0_54], %76 {strides = array<i32>} : memref<32x2xf32, #tpu.memory_space<vmem>>, vector<1x2xf32>,
    %78 = vector.extract_strided_slice %70 {offsets = [16, 0], sizes = [1, 2], strides = [1, 1]} : vector<17x2xf32> to vector<1x2xf32>
    %c4_55 = arith.constant 4 : index
    %c0_56 = arith.constant 0 : index
    %79 = vector.load %arg7[%c4_55, %c0_56] : memref<32x2xf32, #tpu.memory_space<vmem>>, vector<1x2xf32>
    tpu.vector_store %arg7[%c4_55, %c0_56], %78 {strides = array<i32>} : memref<32x2xf32, #tpu.memory_space<vmem>>, vector<1x2xf32>,
    %c6 = arith.constant 6 : index
    %c0_57 = arith.constant 0 : index
    %c0_58 = arith.constant 0 : index
    %80 = vector.load %arg1[%c6, %c0_57, %c0_58] : memref<8x32x2xbf16, #tpu.memory_space<vmem>>, vector<1x32x2xbf16>
    %81 = vector.shape_cast %80 : vector<1x32x2xbf16> to vector<32x2xbf16>
    %82 = arith.extf %81 : vector<32x2xbf16> to vector<32x2xf32>
    %83 = arith.mulf %9, %82 : vector<32x2xf32>
    %cst_59 = arith.constant dense<0.000000e+00> : vector<17x2xf32>
    %84 = tpu.matmul %0, %83, %cst_59 {dimension_numbers = #tpu.dot_dimension_numbers<[1], [0], [0], [1], [0, 0, 1, 1], [], []>} : vector<17x32xf32>, vector<32x2xf32>, vector<17x2xf32> -> vector<17x2xf32>
    %85 = vector.extract_strided_slice %84 {offsets = [0, 0], sizes = [16, 2], strides = [1, 1]} : vector<17x2xf32> to vector<16x2xf32>
    %86 = vector.broadcast %1 : vector<16x1xf32> to vector<16x2xf32>
    %87 = arith.addf %85, %86 : vector<16x2xf32>
    %cst_60 = arith.constant 0.000000e+00 : f32
    %88 = vector.broadcast %cst_60 : f32 to vector<16x2xf32>
    %89 = arith.maximumf %87, %88 : vector<16x2xf32>
    %cst_61 = arith.constant dense<0.000000e+00> : vector<1x2xf32>
    %90 = tpu.matmul %2, %89, %cst_61 {dimension_numbers = #tpu.dot_dimension_numbers<[1], [0], [0], [1], [0, 0, 1, 1], [], []>} : vector<1x16xf32>, vector<16x2xf32>, vector<1x2xf32> -> vector<1x2xf32>
    %c5_62 = arith.constant 5 : index
    %c0_63 = arith.constant 0 : index
    %91 = vector.load %arg6[%c5_62, %c0_63] : memref<32x2xf32, #tpu.memory_space<vmem>>, vector<1x2xf32>
    tpu.vector_store %arg6[%c5_62, %c0_63], %90 {strides = array<i32>} : memref<32x2xf32, #tpu.memory_space<vmem>>, vector<1x2xf32>,
    %92 = vector.extract_strided_slice %84 {offsets = [16, 0], sizes = [1, 2], strides = [1, 1]} : vector<17x2xf32> to vector<1x2xf32>
    %c5_64 = arith.constant 5 : index
    %c0_65 = arith.constant 0 : index
    %93 = vector.load %arg7[%c5_64, %c0_65] : memref<32x2xf32, #tpu.memory_space<vmem>>, vector<1x2xf32>
    tpu.vector_store %arg7[%c5_64, %c0_65], %92 {strides = array<i32>} : memref<32x2xf32, #tpu.memory_space<vmem>>, vector<1x2xf32>,
    %c7 = arith.constant 7 : index
    %c0_66 = arith.constant 0 : index
    %c0_67 = arith.constant 0 : index
    %94 = vector.load %arg1[%c7, %c0_66, %c0_67] : memref<8x32x2xbf16, #tpu.memory_space<vmem>>, vector<1x32x2xbf16>
    %95 = vector.shape_cast %94 : vector<1x32x2xbf16> to vector<32x2xbf16>
    %96 = arith.extf %95 : vector<32x2xbf16> to vector<32x2xf32>
    %97 = arith.mulf %9, %96 : vector<32x2xf32>
    %cst_68 = arith.constant dense<0.000000e+00> : vector<17x2xf32>
    %98 = tpu.matmul %0, %97, %cst_68 {dimension_numbers = #tpu.dot_dimension_numbers<[1], [0], [0], [1], [0, 0, 1, 1], [], []>} : vector<17x32xf32>, vector<32x2xf32>, vector<17x2xf32> -> vector<17x2xf32>
    %99 = vector.extract_strided_slice %98 {offsets = [0, 0], sizes = [16, 2], strides = [1, 1]} : vector<17x2xf32> to vector<16x2xf32>
    %100 = vector.broadcast %1 : vector<16x1xf32> to vector<16x2xf32>
    %101 = arith.addf %99, %100 : vector<16x2xf32>
    %cst_69 = arith.constant 0.000000e+00 : f32
    %102 = vector.broadcast %cst_69 : f32 to vector<16x2xf32>
    %103 = arith.maximumf %101, %102 : vector<16x2xf32>
    %cst_70 = arith.constant dense<0.000000e+00> : vector<1x2xf32>
    %104 = tpu.matmul %2, %103, %cst_70 {dimension_numbers = #tpu.dot_dimension_numbers<[1], [0], [0], [1], [0, 0, 1, 1], [], []>} : vector<1x16xf32>, vector<16x2xf32>, vector<1x2xf32> -> vector<1x2xf32>
    %c6_71 = arith.constant 6 : index
    %c0_72 = arith.constant 0 : index
    %105 = vector.load %arg6[%c6_71, %c0_72] : memref<32x2xf32, #tpu.memory_space<vmem>>, vector<1x2xf32>
    tpu.vector_store %arg6[%c6_71, %c0_72], %104 {strides = array<i32>} : memref<32x2xf32, #tpu.memory_space<vmem>>, vector<1x2xf32>,
    %106 = vector.extract_strided_slice %98 {offsets = [16, 0], sizes = [1, 2], strides = [1, 1]} : vector<17x2xf32> to vector<1x2xf32>
    %c6_73 = arith.constant 6 : index
    %c0_74 = arith.constant 0 : index
    %107 = vector.load %arg7[%c6_73, %c0_74] : memref<32x2xf32, #tpu.memory_space<vmem>>, vector<1x2xf32>
    tpu.vector_store %arg7[%c6_73, %c0_74], %106 {strides = array<i32>} : memref<32x2xf32, #tpu.memory_space<vmem>>, vector<1x2xf32>,
    %c1_75 = arith.constant 1 : index
    %c0_76 = arith.constant 0 : index
    %c0_77 = arith.constant 0 : index
    %108 = vector.load %arg1[%c1_75, %c0_76, %c0_77] : memref<8x32x2xbf16, #tpu.memory_space<vmem>>, vector<1x32x2xbf16>
    %109 = vector.shape_cast %108 : vector<1x32x2xbf16> to vector<32x2xbf16>
    %110 = arith.extf %109 : vector<32x2xbf16> to vector<32x2xf32>
    %c2_78 = arith.constant 2 : index
    %c0_79 = arith.constant 0 : index
    %c0_80 = arith.constant 0 : index
    %111 = vector.load %arg1[%c2_78, %c0_79, %c0_80] : memref<8x32x2xbf16, #tpu.memory_space<vmem>>, vector<1x32x2xbf16>
    %112 = vector.shape_cast %111 : vector<1x32x2xbf16> to vector<32x2xbf16>
    %113 = arith.extf %112 : vector<32x2xbf16> to vector<32x2xf32>
    %114 = arith.mulf %110, %113 : vector<32x2xf32>
    %cst_81 = arith.constant dense<0.000000e+00> : vector<17x2xf32>
    %115 = tpu.matmul %0, %114, %cst_81 {dimension_numbers = #tpu.dot_dimension_numbers<[1], [0], [0], [1], [0, 0, 1, 1], [], []>} : vector<17x32xf32>, vector<32x2xf32>, vector<17x2xf32> -> vector<17x2xf32>
    %116 = vector.extract_strided_slice %115 {offsets = [0, 0], sizes = [16, 2], strides = [1, 1]} : vector<17x2xf32> to vector<16x2xf32>
    %117 = vector.broadcast %1 : vector<16x1xf32> to vector<16x2xf32>
    %118 = arith.addf %116, %117 : vector<16x2xf32>
    %cst_82 = arith.constant 0.000000e+00 : f32
    %119 = vector.broadcast %cst_82 : f32 to vector<16x2xf32>
    %120 = arith.maximumf %118, %119 : vector<16x2xf32>
    %cst_83 = arith.constant dense<0.000000e+00> : vector<1x2xf32>
    %121 = tpu.matmul %2, %120, %cst_83 {dimension_numbers = #tpu.dot_dimension_numbers<[1], [0], [0], [1], [0, 0, 1, 1], [], []>} : vector<1x16xf32>, vector<16x2xf32>, vector<1x2xf32> -> vector<1x2xf32>
    %c7_84 = arith.constant 7 : index
    %c0_85 = arith.constant 0 : index
    %122 = vector.load %arg6[%c7_84, %c0_85] : memref<32x2xf32, #tpu.memory_space<vmem>>, vector<1x2xf32>
    tpu.vector_store %arg6[%c7_84, %c0_85], %121 {strides = array<i32>} : memref<32x2xf32, #tpu.memory_space<vmem>>, vector<1x2xf32>,
    %123 = vector.extract_strided_slice %115 {offsets = [16, 0], sizes = [1, 2], strides = [1, 1]} : vector<17x2xf32> to vector<1x2xf32>
    %c7_86 = arith.constant 7 : index
    %c0_87 = arith.constant 0 : index
    %124 = vector.load %arg7[%c7_86, %c0_87] : memref<32x2xf32, #tpu.memory_space<vmem>>, vector<1x2xf32>
    tpu.vector_store %arg7[%c7_86, %c0_87], %123 {strides = array<i32>} : memref<32x2xf32, #tpu.memory_space<vmem>>, vector<1x2xf32>,
    %c3_88 = arith.constant 3 : index
    %c0_89 = arith.constant 0 : index
    %c0_90 = arith.constant 0 : index
    %125 = vector.load %arg1[%c3_88, %c0_89, %c0_90] : memref<8x32x2xbf16, #tpu.memory_space<vmem>>, vector<1x32x2xbf16>
    %126 = vector.shape_cast %125 : vector<1x32x2xbf16> to vector<32x2xbf16>
    %127 = arith.extf %126 : vector<32x2xbf16> to vector<32x2xf32>
    %128 = arith.mulf %110, %127 : vector<32x2xf32>
    %cst_91 = arith.constant dense<0.000000e+00> : vector<17x2xf32>
    %129 = tpu.matmul %0, %128, %cst_91 {dimension_numbers = #tpu.dot_dimension_numbers<[1], [0], [0], [1], [0, 0, 1, 1], [], []>} : vector<17x32xf32>, vector<32x2xf32>, vector<17x2xf32> -> vector<17x2xf32>
    %130 = vector.extract_strided_slice %129 {offsets = [0, 0], sizes = [16, 2], strides = [1, 1]} : vector<17x2xf32> to vector<16x2xf32>
    %131 = vector.broadcast %1 : vector<16x1xf32> to vector<16x2xf32>
    %132 = arith.addf %130, %131 : vector<16x2xf32>
    %cst_92 = arith.constant 0.000000e+00 : f32
    %133 = vector.broadcast %cst_92 : f32 to vector<16x2xf32>
    %134 = arith.maximumf %132, %133 : vector<16x2xf32>
    %cst_93 = arith.constant dense<0.000000e+00> : vector<1x2xf32>
    %135 = tpu.matmul %2, %134, %cst_93 {dimension_numbers = #tpu.dot_dimension_numbers<[1], [0], [0], [1], [0, 0, 1, 1], [], []>} : vector<1x16xf32>, vector<16x2xf32>, vector<1x2xf32> -> vector<1x2xf32>
    %c8 = arith.constant 8 : index
    %c0_94 = arith.constant 0 : index
    %136 = vector.load %arg6[%c8, %c0_94] : memref<32x2xf32, #tpu.memory_space<vmem>>, vector<1x2xf32>
    tpu.vector_store %arg6[%c8, %c0_94], %135 {strides = array<i32>} : memref<32x2xf32, #tpu.memory_space<vmem>>, vector<1x2xf32>,
    %137 = vector.extract_strided_slice %129 {offsets = [16, 0], sizes = [1, 2], strides = [1, 1]} : vector<17x2xf32> to vector<1x2xf32>
    %c8_95 = arith.constant 8 : index
    %c0_96 = arith.constant 0 : index
    %138 = vector.load %arg7[%c8_95, %c0_96] : memref<32x2xf32, #tpu.memory_space<vmem>>, vector<1x2xf32>
    tpu.vector_store %arg7[%c8_95, %c0_96], %137 {strides = array<i32>} : memref<32x2xf32, #tpu.memory_space<vmem>>, vector<1x2xf32>,
    %c4_97 = arith.constant 4 : index
    %c0_98 = arith.constant 0 : index
    %c0_99 = arith.constant 0 : index
    %139 = vector.load %arg1[%c4_97, %c0_98, %c0_99] : memref<8x32x2xbf16, #tpu.memory_space<vmem>>, vector<1x32x2xbf16>
    %140 = vector.shape_cast %139 : vector<1x32x2xbf16> to vector<32x2xbf16>
    %141 = arith.extf %140 : vector<32x2xbf16> to vector<32x2xf32>
    %142 = arith.mulf %110, %141 : vector<32x2xf32>
    %cst_100 = arith.constant dense<0.000000e+00> : vector<17x2xf32>
    %143 = tpu.matmul %0, %142, %cst_100 {dimension_numbers = #tpu.dot_dimension_numbers<[1], [0], [0], [1], [0, 0, 1, 1], [], []>} : vector<17x32xf32>, vector<32x2xf32>, vector<17x2xf32> -> vector<17x2xf32>
    %144 = vector.extract_strided_slice %143 {offsets = [0, 0], sizes = [16, 2], strides = [1, 1]} : vector<17x2xf32> to vector<16x2xf32>
    %145 = vector.broadcast %1 : vector<16x1xf32> to vector<16x2xf32>
    %146 = arith.addf %144, %145 : vector<16x2xf32>
    %cst_101 = arith.constant 0.000000e+00 : f32
    %147 = vector.broadcast %cst_101 : f32 to vector<16x2xf32>
    %148 = arith.maximumf %146, %147 : vector<16x2xf32>
    %cst_102 = arith.constant dense<0.000000e+00> : vector<1x2xf32>
    %149 = tpu.matmul %2, %148, %cst_102 {dimension_numbers = #tpu.dot_dimension_numbers<[1], [0], [0], [1], [0, 0, 1, 1], [], []>} : vector<1x16xf32>, vector<16x2xf32>, vector<1x2xf32> -> vector<1x2xf32>
    %c9 = arith.constant 9 : index
    %c0_103 = arith.constant 0 : index
    %150 = vector.load %arg6[%c9, %c0_103] : memref<32x2xf32, #tpu.memory_space<vmem>>, vector<1x2xf32>
    tpu.vector_store %arg6[%c9, %c0_103], %149 {strides = array<i32>} : memref<32x2xf32, #tpu.memory_space<vmem>>, vector<1x2xf32>,
    %151 = vector.extract_strided_slice %143 {offsets = [16, 0], sizes = [1, 2], strides = [1, 1]} : vector<17x2xf32> to vector<1x2xf32>
    %c9_104 = arith.constant 9 : index
    %c0_105 = arith.constant 0 : index
    %152 = vector.load %arg7[%c9_104, %c0_105] : memref<32x2xf32, #tpu.memory_space<vmem>>, vector<1x2xf32>
    tpu.vector_store %arg7[%c9_104, %c0_105], %151 {strides = array<i32>} : memref<32x2xf32, #tpu.memory_space<vmem>>, vector<1x2xf32>,
    %c5_106 = arith.constant 5 : index
    %c0_107 = arith.constant 0 : index
    %c0_108 = arith.constant 0 : index
    %153 = vector.load %arg1[%c5_106, %c0_107, %c0_108] : memref<8x32x2xbf16, #tpu.memory_space<vmem>>, vector<1x32x2xbf16>
    %154 = vector.shape_cast %153 : vector<1x32x2xbf16> to vector<32x2xbf16>
    %155 = arith.extf %154 : vector<32x2xbf16> to vector<32x2xf32>
    %156 = arith.mulf %110, %155 : vector<32x2xf32>
    %cst_109 = arith.constant dense<0.000000e+00> : vector<17x2xf32>
    %157 = tpu.matmul %0, %156, %cst_109 {dimension_numbers = #tpu.dot_dimension_numbers<[1], [0], [0], [1], [0, 0, 1, 1], [], []>} : vector<17x32xf32>, vector<32x2xf32>, vector<17x2xf32> -> vector<17x2xf32>
    %158 = vector.extract_strided_slice %157 {offsets = [0, 0], sizes = [16, 2], strides = [1, 1]} : vector<17x2xf32> to vector<16x2xf32>
    %159 = vector.broadcast %1 : vector<16x1xf32> to vector<16x2xf32>
    %160 = arith.addf %158, %159 : vector<16x2xf32>
    %cst_110 = arith.constant 0.000000e+00 : f32
    %161 = vector.broadcast %cst_110 : f32 to vector<16x2xf32>
    %162 = arith.maximumf %160, %161 : vector<16x2xf32>
    %cst_111 = arith.constant dense<0.000000e+00> : vector<1x2xf32>
    %163 = tpu.matmul %2, %162, %cst_111 {dimension_numbers = #tpu.dot_dimension_numbers<[1], [0], [0], [1], [0, 0, 1, 1], [], []>} : vector<1x16xf32>, vector<16x2xf32>, vector<1x2xf32> -> vector<1x2xf32>
    %c10 = arith.constant 10 : index
    %c0_112 = arith.constant 0 : index
    %164 = vector.load %arg6[%c10, %c0_112] : memref<32x2xf32, #tpu.memory_space<vmem>>, vector<1x2xf32>
    tpu.vector_store %arg6[%c10, %c0_112], %163 {strides = array<i32>} : memref<32x2xf32, #tpu.memory_space<vmem>>, vector<1x2xf32>,
    %165 = vector.extract_strided_slice %157 {offsets = [16, 0], sizes = [1, 2], strides = [1, 1]} : vector<17x2xf32> to vector<1x2xf32>
    %c10_113 = arith.constant 10 : index
    %c0_114 = arith.constant 0 : index
    %166 = vector.load %arg7[%c10_113, %c0_114] : memref<32x2xf32, #tpu.memory_space<vmem>>, vector<1x2xf32>
    tpu.vector_store %arg7[%c10_113, %c0_114], %165 {strides = array<i32>} : memref<32x2xf32, #tpu.memory_space<vmem>>, vector<1x2xf32>,
    %c6_115 = arith.constant 6 : index
    %c0_116 = arith.constant 0 : index
    %c0_117 = arith.constant 0 : index
    %167 = vector.load %arg1[%c6_115, %c0_116, %c0_117] : memref<8x32x2xbf16, #tpu.memory_space<vmem>>, vector<1x32x2xbf16>
    %168 = vector.shape_cast %167 : vector<1x32x2xbf16> to vector<32x2xbf16>
    %169 = arith.extf %168 : vector<32x2xbf16> to vector<32x2xf32>
    %170 = arith.mulf %110, %169 : vector<32x2xf32>
    %cst_118 = arith.constant dense<0.000000e+00> : vector<17x2xf32>
    %171 = tpu.matmul %0, %170, %cst_118 {dimension_numbers = #tpu.dot_dimension_numbers<[1], [0], [0], [1], [0, 0, 1, 1], [], []>} : vector<17x32xf32>, vector<32x2xf32>, vector<17x2xf32> -> vector<17x2xf32>
    %172 = vector.extract_strided_slice %171 {offsets = [0, 0], sizes = [16, 2], strides = [1, 1]} : vector<17x2xf32> to vector<16x2xf32>
    %173 = vector.broadcast %1 : vector<16x1xf32> to vector<16x2xf32>
    %174 = arith.addf %172, %173 : vector<16x2xf32>
    %cst_119 = arith.constant 0.000000e+00 : f32
    %175 = vector.broadcast %cst_119 : f32 to vector<16x2xf32>
    %176 = arith.maximumf %174, %175 : vector<16x2xf32>
    %cst_120 = arith.constant dense<0.000000e+00> : vector<1x2xf32>
    %177 = tpu.matmul %2, %176, %cst_120 {dimension_numbers = #tpu.dot_dimension_numbers<[1], [0], [0], [1], [0, 0, 1, 1], [], []>} : vector<1x16xf32>, vector<16x2xf32>, vector<1x2xf32> -> vector<1x2xf32>
    %c11 = arith.constant 11 : index
    %c0_121 = arith.constant 0 : index
    %178 = vector.load %arg6[%c11, %c0_121] : memref<32x2xf32, #tpu.memory_space<vmem>>, vector<1x2xf32>
    tpu.vector_store %arg6[%c11, %c0_121], %177 {strides = array<i32>} : memref<32x2xf32, #tpu.memory_space<vmem>>, vector<1x2xf32>,
    %179 = vector.extract_strided_slice %171 {offsets = [16, 0], sizes = [1, 2], strides = [1, 1]} : vector<17x2xf32> to vector<1x2xf32>
    %c11_122 = arith.constant 11 : index
    %c0_123 = arith.constant 0 : index
    %180 = vector.load %arg7[%c11_122, %c0_123] : memref<32x2xf32, #tpu.memory_space<vmem>>, vector<1x2xf32>
    tpu.vector_store %arg7[%c11_122, %c0_123], %179 {strides = array<i32>} : memref<32x2xf32, #tpu.memory_space<vmem>>, vector<1x2xf32>,
    %c7_124 = arith.constant 7 : index
    %c0_125 = arith.constant 0 : index
    %c0_126 = arith.constant 0 : index
    %181 = vector.load %arg1[%c7_124, %c0_125, %c0_126] : memref<8x32x2xbf16, #tpu.memory_space<vmem>>, vector<1x32x2xbf16>
    %182 = vector.shape_cast %181 : vector<1x32x2xbf16> to vector<32x2xbf16>
    %183 = arith.extf %182 : vector<32x2xbf16> to vector<32x2xf32>
    %184 = arith.mulf %110, %183 : vector<32x2xf32>
    %cst_127 = arith.constant dense<0.000000e+00> : vector<17x2xf32>
    %185 = tpu.matmul %0, %184, %cst_127 {dimension_numbers = #tpu.dot_dimension_numbers<[1], [0], [0], [1], [0, 0, 1, 1], [], []>} : vector<17x32xf32>, vector<32x2xf32>, vector<17x2xf32> -> vector<17x2xf32>
    %186 = vector.extract_strided_slice %185 {offsets = [0, 0], sizes = [16, 2], strides = [1, 1]} : vector<17x2xf32> to vector<16x2xf32>
    %187 = vector.broadcast %1 : vector<16x1xf32> to vector<16x2xf32>
    %188 = arith.addf %186, %187 : vector<16x2xf32>
    %cst_128 = arith.constant 0.000000e+00 : f32
    %189 = vector.broadcast %cst_128 : f32 to vector<16x2xf32>
    %190 = arith.maximumf %188, %189 : vector<16x2xf32>
    %cst_129 = arith.constant dense<0.000000e+00> : vector<1x2xf32>
    %191 = tpu.matmul %2, %190, %cst_129 {dimension_numbers = #tpu.dot_dimension_numbers<[1], [0], [0], [1], [0, 0, 1, 1], [], []>} : vector<1x16xf32>, vector<16x2xf32>, vector<1x2xf32> -> vector<1x2xf32>
    %c12 = arith.constant 12 : index
    %c0_130 = arith.constant 0 : index
    %192 = vector.load %arg6[%c12, %c0_130] : memref<32x2xf32, #tpu.memory_space<vmem>>, vector<1x2xf32>
    tpu.vector_store %arg6[%c12, %c0_130], %191 {strides = array<i32>} : memref<32x2xf32, #tpu.memory_space<vmem>>, vector<1x2xf32>,
    %193 = vector.extract_strided_slice %185 {offsets = [16, 0], sizes = [1, 2], strides = [1, 1]} : vector<17x2xf32> to vector<1x2xf32>
    %c12_131 = arith.constant 12 : index
    %c0_132 = arith.constant 0 : index
    %194 = vector.load %arg7[%c12_131, %c0_132] : memref<32x2xf32, #tpu.memory_space<vmem>>, vector<1x2xf32>
    tpu.vector_store %arg7[%c12_131, %c0_132], %193 {strides = array<i32>} : memref<32x2xf32, #tpu.memory_space<vmem>>, vector<1x2xf32>,
    %c2_133 = arith.constant 2 : index
    %c0_134 = arith.constant 0 : index
    %c0_135 = arith.constant 0 : index
    %195 = vector.load %arg1[%c2_133, %c0_134, %c0_135] : memref<8x32x2xbf16, #tpu.memory_space<vmem>>, vector<1x32x2xbf16>
    %196 = vector.shape_cast %195 : vector<1x32x2xbf16> to vector<32x2xbf16>
    %197 = arith.extf %196 : vector<32x2xbf16> to vector<32x2xf32>
    %c3_136 = arith.constant 3 : index
    %c0_137 = arith.constant 0 : index
    %c0_138 = arith.constant 0 : index
    %198 = vector.load %arg1[%c3_136, %c0_137, %c0_138] : memref<8x32x2xbf16, #tpu.memory_space<vmem>>, vector<1x32x2xbf16>
    %199 = vector.shape_cast %198 : vector<1x32x2xbf16> to vector<32x2xbf16>
    %200 = arith.extf %199 : vector<32x2xbf16> to vector<32x2xf32>
    %201 = arith.mulf %197, %200 : vector<32x2xf32>
    %cst_139 = arith.constant dense<0.000000e+00> : vector<17x2xf32>
    %202 = tpu.matmul %0, %201, %cst_139 {dimension_numbers = #tpu.dot_dimension_numbers<[1], [0], [0], [1], [0, 0, 1, 1], [], []>} : vector<17x32xf32>, vector<32x2xf32>, vector<17x2xf32> -> vector<17x2xf32>
    %203 = vector.extract_strided_slice %202 {offsets = [0, 0], sizes = [16, 2], strides = [1, 1]} : vector<17x2xf32> to vector<16x2xf32>
    %204 = vector.broadcast %1 : vector<16x1xf32> to vector<16x2xf32>
    %205 = arith.addf %203, %204 : vector<16x2xf32>
    %cst_140 = arith.constant 0.000000e+00 : f32
    %206 = vector.broadcast %cst_140 : f32 to vector<16x2xf32>
    %207 = arith.maximumf %205, %206 : vector<16x2xf32>
    %cst_141 = arith.constant dense<0.000000e+00> : vector<1x2xf32>
    %208 = tpu.matmul %2, %207, %cst_141 {dimension_numbers = #tpu.dot_dimension_numbers<[1], [0], [0], [1], [0, 0, 1, 1], [], []>} : vector<1x16xf32>, vector<16x2xf32>, vector<1x2xf32> -> vector<1x2xf32>
    %c13 = arith.constant 13 : index
    %c0_142 = arith.constant 0 : index
    %209 = vector.load %arg6[%c13, %c0_142] : memref<32x2xf32, #tpu.memory_space<vmem>>, vector<1x2xf32>
    tpu.vector_store %arg6[%c13, %c0_142], %208 {strides = array<i32>} : memref<32x2xf32, #tpu.memory_space<vmem>>, vector<1x2xf32>,
    %210 = vector.extract_strided_slice %202 {offsets = [16, 0], sizes = [1, 2], strides = [1, 1]} : vector<17x2xf32> to vector<1x2xf32>
    %c13_143 = arith.constant 13 : index
    %c0_144 = arith.constant 0 : index
    %211 = vector.load %arg7[%c13_143, %c0_144] : memref<32x2xf32, #tpu.memory_space<vmem>>, vector<1x2xf32>
    tpu.vector_store %arg7[%c13_143, %c0_144], %210 {strides = array<i32>} : memref<32x2xf32, #tpu.memory_space<vmem>>, vector<1x2xf32>,
    %c4_145 = arith.constant 4 : index
    %c0_146 = arith.constant 0 : index
    %c0_147 = arith.constant 0 : index
    %212 = vector.load %arg1[%c4_145, %c0_146, %c0_147] : memref<8x32x2xbf16, #tpu.memory_space<vmem>>, vector<1x32x2xbf16>
    %213 = vector.shape_cast %212 : vector<1x32x2xbf16> to vector<32x2xbf16>
    %214 = arith.extf %213 : vector<32x2xbf16> to vector<32x2xf32>
    %215 = arith.mulf %197, %214 : vector<32x2xf32>
    %cst_148 = arith.constant dense<0.000000e+00> : vector<17x2xf32>
    %216 = tpu.matmul %0, %215, %cst_148 {dimension_numbers = #tpu.dot_dimension_numbers<[1], [0], [0], [1], [0, 0, 1, 1], [], []>} : vector<17x32xf32>, vector<32x2xf32>, vector<17x2xf32> -> vector<17x2xf32>
    %217 = vector.extract_strided_slice %216 {offsets = [0, 0], sizes = [16, 2], strides = [1, 1]} : vector<17x2xf32> to vector<16x2xf32>
    %218 = vector.broadcast %1 : vector<16x1xf32> to vector<16x2xf32>
    %219 = arith.addf %217, %218 : vector<16x2xf32>
    %cst_149 = arith.constant 0.000000e+00 : f32
    %220 = vector.broadcast %cst_149 : f32 to vector<16x2xf32>
    %221 = arith.maximumf %219, %220 : vector<16x2xf32>
    %cst_150 = arith.constant dense<0.000000e+00> : vector<1x2xf32>
    %222 = tpu.matmul %2, %221, %cst_150 {dimension_numbers = #tpu.dot_dimension_numbers<[1], [0], [0], [1], [0, 0, 1, 1], [], []>} : vector<1x16xf32>, vector<16x2xf32>, vector<1x2xf32> -> vector<1x2xf32>
    %c14 = arith.constant 14 : index
    %c0_151 = arith.constant 0 : index
    %223 = vector.load %arg6[%c14, %c0_151] : memref<32x2xf32, #tpu.memory_space<vmem>>, vector<1x2xf32>
    tpu.vector_store %arg6[%c14, %c0_151], %222 {strides = array<i32>} : memref<32x2xf32, #tpu.memory_space<vmem>>, vector<1x2xf32>,
    %224 = vector.extract_strided_slice %216 {offsets = [16, 0], sizes = [1, 2], strides = [1, 1]} : vector<17x2xf32> to vector<1x2xf32>
    %c14_152 = arith.constant 14 : index
    %c0_153 = arith.constant 0 : index
    %225 = vector.load %arg7[%c14_152, %c0_153] : memref<32x2xf32, #tpu.memory_space<vmem>>, vector<1x2xf32>
    tpu.vector_store %arg7[%c14_152, %c0_153], %224 {strides = array<i32>} : memref<32x2xf32, #tpu.memory_space<vmem>>, vector<1x2xf32>,
    %c5_154 = arith.constant 5 : index
    %c0_155 = arith.constant 0 : index
    %c0_156 = arith.constant 0 : index
    %226 = vector.load %arg1[%c5_154, %c0_155, %c0_156] : memref<8x32x2xbf16, #tpu.memory_space<vmem>>, vector<1x32x2xbf16>
    %227 = vector.shape_cast %226 : vector<1x32x2xbf16> to vector<32x2xbf16>
    %228 = arith.extf %227 : vector<32x2xbf16> to vector<32x2xf32>
    %229 = arith.mulf %197, %228 : vector<32x2xf32>
    %cst_157 = arith.constant dense<0.000000e+00> : vector<17x2xf32>
    %230 = tpu.matmul %0, %229, %cst_157 {dimension_numbers = #tpu.dot_dimension_numbers<[1], [0], [0], [1], [0, 0, 1, 1], [], []>} : vector<17x32xf32>, vector<32x2xf32>, vector<17x2xf32> -> vector<17x2xf32>
    %231 = vector.extract_strided_slice %230 {offsets = [0, 0], sizes = [16, 2], strides = [1, 1]} : vector<17x2xf32> to vector<16x2xf32>
    %232 = vector.broadcast %1 : vector<16x1xf32> to vector<16x2xf32>
    %233 = arith.addf %231, %232 : vector<16x2xf32>
    %cst_158 = arith.constant 0.000000e+00 : f32
    %234 = vector.broadcast %cst_158 : f32 to vector<16x2xf32>
    %235 = arith.maximumf %233, %234 : vector<16x2xf32>
    %cst_159 = arith.constant dense<0.000000e+00> : vector<1x2xf32>
    %236 = tpu.matmul %2, %235, %cst_159 {dimension_numbers = #tpu.dot_dimension_numbers<[1], [0], [0], [1], [0, 0, 1, 1], [], []>} : vector<1x16xf32>, vector<16x2xf32>, vector<1x2xf32> -> vector<1x2xf32>
    %c15 = arith.constant 15 : index
    %c0_160 = arith.constant 0 : index
    %237 = vector.load %arg6[%c15, %c0_160] : memref<32x2xf32, #tpu.memory_space<vmem>>, vector<1x2xf32>
    tpu.vector_store %arg6[%c15, %c0_160], %236 {strides = array<i32>} : memref<32x2xf32, #tpu.memory_space<vmem>>, vector<1x2xf32>,
    %238 = vector.extract_strided_slice %230 {offsets = [16, 0], sizes = [1, 2], strides = [1, 1]} : vector<17x2xf32> to vector<1x2xf32>
    %c15_161 = arith.constant 15 : index
    %c0_162 = arith.constant 0 : index
    %239 = vector.load %arg7[%c15_161, %c0_162] : memref<32x2xf32, #tpu.memory_space<vmem>>, vector<1x2xf32>
    tpu.vector_store %arg7[%c15_161, %c0_162], %238 {strides = array<i32>} : memref<32x2xf32, #tpu.memory_space<vmem>>, vector<1x2xf32>,
    %c6_163 = arith.constant 6 : index
    %c0_164 = arith.constant 0 : index
    %c0_165 = arith.constant 0 : index
    %240 = vector.load %arg1[%c6_163, %c0_164, %c0_165] : memref<8x32x2xbf16, #tpu.memory_space<vmem>>, vector<1x32x2xbf16>
    %241 = vector.shape_cast %240 : vector<1x32x2xbf16> to vector<32x2xbf16>
    %242 = arith.extf %241 : vector<32x2xbf16> to vector<32x2xf32>
    %243 = arith.mulf %197, %242 : vector<32x2xf32>
    %cst_166 = arith.constant dense<0.000000e+00> : vector<17x2xf32>
    %244 = tpu.matmul %0, %243, %cst_166 {dimension_numbers = #tpu.dot_dimension_numbers<[1], [0], [0], [1], [0, 0, 1, 1], [], []>} : vector<17x32xf32>, vector<32x2xf32>, vector<17x2xf32> -> vector<17x2xf32>
    %245 = vector.extract_strided_slice %244 {offsets = [0, 0], sizes = [16, 2], strides = [1, 1]} : vector<17x2xf32> to vector<16x2xf32>
    %246 = vector.broadcast %1 : vector<16x1xf32> to vector<16x2xf32>
    %247 = arith.addf %245, %246 : vector<16x2xf32>
    %cst_167 = arith.constant 0.000000e+00 : f32
    %248 = vector.broadcast %cst_167 : f32 to vector<16x2xf32>
    %249 = arith.maximumf %247, %248 : vector<16x2xf32>
    %cst_168 = arith.constant dense<0.000000e+00> : vector<1x2xf32>
    %250 = tpu.matmul %2, %249, %cst_168 {dimension_numbers = #tpu.dot_dimension_numbers<[1], [0], [0], [1], [0, 0, 1, 1], [], []>} : vector<1x16xf32>, vector<16x2xf32>, vector<1x2xf32> -> vector<1x2xf32>
    %c16 = arith.constant 16 : index
    %c0_169 = arith.constant 0 : index
    %251 = vector.load %arg6[%c16, %c0_169] : memref<32x2xf32, #tpu.memory_space<vmem>>, vector<1x2xf32>
    tpu.vector_store %arg6[%c16, %c0_169], %250 {strides = array<i32>} : memref<32x2xf32, #tpu.memory_space<vmem>>, vector<1x2xf32>,
    %252 = vector.extract_strided_slice %244 {offsets = [16, 0], sizes = [1, 2], strides = [1, 1]} : vector<17x2xf32> to vector<1x2xf32>
    %c16_170 = arith.constant 16 : index
    %c0_171 = arith.constant 0 : index
    %253 = vector.load %arg7[%c16_170, %c0_171] : memref<32x2xf32, #tpu.memory_space<vmem>>, vector<1x2xf32>
    tpu.vector_store %arg7[%c16_170, %c0_171], %252 {strides = array<i32>} : memref<32x2xf32, #tpu.memory_space<vmem>>, vector<1x2xf32>,
    %c7_172 = arith.constant 7 : index
    %c0_173 = arith.constant 0 : index
    %c0_174 = arith.constant 0 : index
    %254 = vector.load %arg1[%c7_172, %c0_173, %c0_174] : memref<8x32x2xbf16, #tpu.memory_space<vmem>>, vector<1x32x2xbf16>
    %255 = vector.shape_cast %254 : vector<1x32x2xbf16> to vector<32x2xbf16>
    %256 = arith.extf %255 : vector<32x2xbf16> to vector<32x2xf32>
    %257 = arith.mulf %197, %256 : vector<32x2xf32>
    %cst_175 = arith.constant dense<0.000000e+00> : vector<17x2xf32>
    %258 = tpu.matmul %0, %257, %cst_175 {dimension_numbers = #tpu.dot_dimension_numbers<[1], [0], [0], [1], [0, 0, 1, 1], [], []>} : vector<17x32xf32>, vector<32x2xf32>, vector<17x2xf32> -> vector<17x2xf32>
    %259 = vector.extract_strided_slice %258 {offsets = [0, 0], sizes = [16, 2], strides = [1, 1]} : vector<17x2xf32> to vector<16x2xf32>
    %260 = vector.broadcast %1 : vector<16x1xf32> to vector<16x2xf32>
    %261 = arith.addf %259, %260 : vector<16x2xf32>
    %cst_176 = arith.constant 0.000000e+00 : f32
    %262 = vector.broadcast %cst_176 : f32 to vector<16x2xf32>
    %263 = arith.maximumf %261, %262 : vector<16x2xf32>
    %cst_177 = arith.constant dense<0.000000e+00> : vector<1x2xf32>
    %264 = tpu.matmul %2, %263, %cst_177 {dimension_numbers = #tpu.dot_dimension_numbers<[1], [0], [0], [1], [0, 0, 1, 1], [], []>} : vector<1x16xf32>, vector<16x2xf32>, vector<1x2xf32> -> vector<1x2xf32>
    %c17 = arith.constant 17 : index
    %c0_178 = arith.constant 0 : index
    %265 = vector.load %arg6[%c17, %c0_178] : memref<32x2xf32, #tpu.memory_space<vmem>>, vector<1x2xf32>
    tpu.vector_store %arg6[%c17, %c0_178], %264 {strides = array<i32>} : memref<32x2xf32, #tpu.memory_space<vmem>>, vector<1x2xf32>,
    %266 = vector.extract_strided_slice %258 {offsets = [16, 0], sizes = [1, 2], strides = [1, 1]} : vector<17x2xf32> to vector<1x2xf32>
    %c17_179 = arith.constant 17 : index
    %c0_180 = arith.constant 0 : index
    %267 = vector.load %arg7[%c17_179, %c0_180] : memref<32x2xf32, #tpu.memory_space<vmem>>, vector<1x2xf32>
    tpu.vector_store %arg7[%c17_179, %c0_180], %266 {strides = array<i32>} : memref<32x2xf32, #tpu.memory_space<vmem>>, vector<1x2xf32>,
    %c3_181 = arith.constant 3 : index
    %c0_182 = arith.constant 0 : index
    %c0_183 = arith.constant 0 : index
    %268 = vector.load %arg1[%c3_181, %c0_182, %c0_183] : memref<8x32x2xbf16, #tpu.memory_space<vmem>>, vector<1x32x2xbf16>
    %269 = vector.shape_cast %268 : vector<1x32x2xbf16> to vector<32x2xbf16>
    %270 = arith.extf %269 : vector<32x2xbf16> to vector<32x2xf32>
    %c4_184 = arith.constant 4 : index
    %c0_185 = arith.constant 0 : index
    %c0_186 = arith.constant 0 : index
    %271 = vector.load %arg1[%c4_184, %c0_185, %c0_186] : memref<8x32x2xbf16, #tpu.memory_space<vmem>>, vector<1x32x2xbf16>
    %272 = vector.shape_cast %271 : vector<1x32x2xbf16> to vector<32x2xbf16>
    %273 = arith.extf %272 : vector<32x2xbf16> to vector<32x2xf32>
    %274 = arith.mulf %270, %273 : vector<32x2xf32>
    %cst_187 = arith.constant dense<0.000000e+00> : vector<17x2xf32>
    %275 = tpu.matmul %0, %274, %cst_187 {dimension_numbers = #tpu.dot_dimension_numbers<[1], [0], [0], [1], [0, 0, 1, 1], [], []>} : vector<17x32xf32>, vector<32x2xf32>, vector<17x2xf32> -> vector<17x2xf32>
    %276 = vector.extract_strided_slice %275 {offsets = [0, 0], sizes = [16, 2], strides = [1, 1]} : vector<17x2xf32> to vector<16x2xf32>
    %277 = vector.broadcast %1 : vector<16x1xf32> to vector<16x2xf32>
    %278 = arith.addf %276, %277 : vector<16x2xf32>
    %cst_188 = arith.constant 0.000000e+00 : f32
    %279 = vector.broadcast %cst_188 : f32 to vector<16x2xf32>
    %280 = arith.maximumf %278, %279 : vector<16x2xf32>
    %cst_189 = arith.constant dense<0.000000e+00> : vector<1x2xf32>
    %281 = tpu.matmul %2, %280, %cst_189 {dimension_numbers = #tpu.dot_dimension_numbers<[1], [0], [0], [1], [0, 0, 1, 1], [], []>} : vector<1x16xf32>, vector<16x2xf32>, vector<1x2xf32> -> vector<1x2xf32>
    %c18 = arith.constant 18 : index
    %c0_190 = arith.constant 0 : index
    %282 = vector.load %arg6[%c18, %c0_190] : memref<32x2xf32, #tpu.memory_space<vmem>>, vector<1x2xf32>
    tpu.vector_store %arg6[%c18, %c0_190], %281 {strides = array<i32>} : memref<32x2xf32, #tpu.memory_space<vmem>>, vector<1x2xf32>,
    %283 = vector.extract_strided_slice %275 {offsets = [16, 0], sizes = [1, 2], strides = [1, 1]} : vector<17x2xf32> to vector<1x2xf32>
    %c18_191 = arith.constant 18 : index
    %c0_192 = arith.constant 0 : index
    %284 = vector.load %arg7[%c18_191, %c0_192] : memref<32x2xf32, #tpu.memory_space<vmem>>, vector<1x2xf32>
    tpu.vector_store %arg7[%c18_191, %c0_192], %283 {strides = array<i32>} : memref<32x2xf32, #tpu.memory_space<vmem>>, vector<1x2xf32>,
    %c5_193 = arith.constant 5 : index
    %c0_194 = arith.constant 0 : index
    %c0_195 = arith.constant 0 : index
    %285 = vector.load %arg1[%c5_193, %c0_194, %c0_195] : memref<8x32x2xbf16, #tpu.memory_space<vmem>>, vector<1x32x2xbf16>
    %286 = vector.shape_cast %285 : vector<1x32x2xbf16> to vector<32x2xbf16>
    %287 = arith.extf %286 : vector<32x2xbf16> to vector<32x2xf32>
    %288 = arith.mulf %270, %287 : vector<32x2xf32>
    %cst_196 = arith.constant dense<0.000000e+00> : vector<17x2xf32>
    %289 = tpu.matmul %0, %288, %cst_196 {dimension_numbers = #tpu.dot_dimension_numbers<[1], [0], [0], [1], [0, 0, 1, 1], [], []>} : vector<17x32xf32>, vector<32x2xf32>, vector<17x2xf32> -> vector<17x2xf32>
    %290 = vector.extract_strided_slice %289 {offsets = [0, 0], sizes = [16, 2], strides = [1, 1]} : vector<17x2xf32> to vector<16x2xf32>
    %291 = vector.broadcast %1 : vector<16x1xf32> to vector<16x2xf32>
    %292 = arith.addf %290, %291 : vector<16x2xf32>
    %cst_197 = arith.constant 0.000000e+00 : f32
    %293 = vector.broadcast %cst_197 : f32 to vector<16x2xf32>
    %294 = arith.maximumf %292, %293 : vector<16x2xf32>
    %cst_198 = arith.constant dense<0.000000e+00> : vector<1x2xf32>
    %295 = tpu.matmul %2, %294, %cst_198 {dimension_numbers = #tpu.dot_dimension_numbers<[1], [0], [0], [1], [0, 0, 1, 1], [], []>} : vector<1x16xf32>, vector<16x2xf32>, vector<1x2xf32> -> vector<1x2xf32>
    %c19 = arith.constant 19 : index
    %c0_199 = arith.constant 0 : index
    %296 = vector.load %arg6[%c19, %c0_199] : memref<32x2xf32, #tpu.memory_space<vmem>>, vector<1x2xf32>
    tpu.vector_store %arg6[%c19, %c0_199], %295 {strides = array<i32>} : memref<32x2xf32, #tpu.memory_space<vmem>>, vector<1x2xf32>,
    %297 = vector.extract_strided_slice %289 {offsets = [16, 0], sizes = [1, 2], strides = [1, 1]} : vector<17x2xf32> to vector<1x2xf32>
    %c19_200 = arith.constant 19 : index
    %c0_201 = arith.constant 0 : index
    %298 = vector.load %arg7[%c19_200, %c0_201] : memref<32x2xf32, #tpu.memory_space<vmem>>, vector<1x2xf32>
    tpu.vector_store %arg7[%c19_200, %c0_201], %297 {strides = array<i32>} : memref<32x2xf32, #tpu.memory_space<vmem>>, vector<1x2xf32>,
    %c6_202 = arith.constant 6 : index
    %c0_203 = arith.constant 0 : index
    %c0_204 = arith.constant 0 : index
    %299 = vector.load %arg1[%c6_202, %c0_203, %c0_204] : memref<8x32x2xbf16, #tpu.memory_space<vmem>>, vector<1x32x2xbf16>
    %300 = vector.shape_cast %299 : vector<1x32x2xbf16> to vector<32x2xbf16>
    %301 = arith.extf %300 : vector<32x2xbf16> to vector<32x2xf32>
    %302 = arith.mulf %270, %301 : vector<32x2xf32>
    %cst_205 = arith.constant dense<0.000000e+00> : vector<17x2xf32>
    %303 = tpu.matmul %0, %302, %cst_205 {dimension_numbers = #tpu.dot_dimension_numbers<[1], [0], [0], [1], [0, 0, 1, 1], [], []>} : vector<17x32xf32>, vector<32x2xf32>, vector<17x2xf32> -> vector<17x2xf32>
    %304 = vector.extract_strided_slice %303 {offsets = [0, 0], sizes = [16, 2], strides = [1, 1]} : vector<17x2xf32> to vector<16x2xf32>
    %305 = vector.broadcast %1 : vector<16x1xf32> to vector<16x2xf32>
    %306 = arith.addf %304, %305 : vector<16x2xf32>
    %cst_206 = arith.constant 0.000000e+00 : f32
    %307 = vector.broadcast %cst_206 : f32 to vector<16x2xf32>
    %308 = arith.maximumf %306, %307 : vector<16x2xf32>
    %cst_207 = arith.constant dense<0.000000e+00> : vector<1x2xf32>
    %309 = tpu.matmul %2, %308, %cst_207 {dimension_numbers = #tpu.dot_dimension_numbers<[1], [0], [0], [1], [0, 0, 1, 1], [], []>} : vector<1x16xf32>, vector<16x2xf32>, vector<1x2xf32> -> vector<1x2xf32>
    %c20 = arith.constant 20 : index
    %c0_208 = arith.constant 0 : index
    %310 = vector.load %arg6[%c20, %c0_208] : memref<32x2xf32, #tpu.memory_space<vmem>>, vector<1x2xf32>
    tpu.vector_store %arg6[%c20, %c0_208], %309 {strides = array<i32>} : memref<32x2xf32, #tpu.memory_space<vmem>>, vector<1x2xf32>,
    %311 = vector.extract_strided_slice %303 {offsets = [16, 0], sizes = [1, 2], strides = [1, 1]} : vector<17x2xf32> to vector<1x2xf32>
    %c20_209 = arith.constant 20 : index
    %c0_210 = arith.constant 0 : index
    %312 = vector.load %arg7[%c20_209, %c0_210] : memref<32x2xf32, #tpu.memory_space<vmem>>, vector<1x2xf32>
    tpu.vector_store %arg7[%c20_209, %c0_210], %311 {strides = array<i32>} : memref<32x2xf32, #tpu.memory_space<vmem>>, vector<1x2xf32>,
    %c7_211 = arith.constant 7 : index
    %c0_212 = arith.constant 0 : index
    %c0_213 = arith.constant 0 : index
    %313 = vector.load %arg1[%c7_211, %c0_212, %c0_213] : memref<8x32x2xbf16, #tpu.memory_space<vmem>>, vector<1x32x2xbf16>
    %314 = vector.shape_cast %313 : vector<1x32x2xbf16> to vector<32x2xbf16>
    %315 = arith.extf %314 : vector<32x2xbf16> to vector<32x2xf32>
    %316 = arith.mulf %270, %315 : vector<32x2xf32>
    %cst_214 = arith.constant dense<0.000000e+00> : vector<17x2xf32>
    %317 = tpu.matmul %0, %316, %cst_214 {dimension_numbers = #tpu.dot_dimension_numbers<[1], [0], [0], [1], [0, 0, 1, 1], [], []>} : vector<17x32xf32>, vector<32x2xf32>, vector<17x2xf32> -> vector<17x2xf32>
    %318 = vector.extract_strided_slice %317 {offsets = [0, 0], sizes = [16, 2], strides = [1, 1]} : vector<17x2xf32> to vector<16x2xf32>
    %319 = vector.broadcast %1 : vector<16x1xf32> to vector<16x2xf32>
    %320 = arith.addf %318, %319 : vector<16x2xf32>
    %cst_215 = arith.constant 0.000000e+00 : f32
    %321 = vector.broadcast %cst_215 : f32 to vector<16x2xf32>
    %322 = arith.maximumf %320, %321 : vector<16x2xf32>
    %cst_216 = arith.constant dense<0.000000e+00> : vector<1x2xf32>
    %323 = tpu.matmul %2, %322, %cst_216 {dimension_numbers = #tpu.dot_dimension_numbers<[1], [0], [0], [1], [0, 0, 1, 1], [], []>} : vector<1x16xf32>, vector<16x2xf32>, vector<1x2xf32> -> vector<1x2xf32>
    %c21 = arith.constant 21 : index
    %c0_217 = arith.constant 0 : index
    %324 = vector.load %arg6[%c21, %c0_217] : memref<32x2xf32, #tpu.memory_space<vmem>>, vector<1x2xf32>
    tpu.vector_store %arg6[%c21, %c0_217], %323 {strides = array<i32>} : memref<32x2xf32, #tpu.memory_space<vmem>>, vector<1x2xf32>,
    %325 = vector.extract_strided_slice %317 {offsets = [16, 0], sizes = [1, 2], strides = [1, 1]} : vector<17x2xf32> to vector<1x2xf32>
    %c21_218 = arith.constant 21 : index
    %c0_219 = arith.constant 0 : index
    %326 = vector.load %arg7[%c21_218, %c0_219] : memref<32x2xf32, #tpu.memory_space<vmem>>, vector<1x2xf32>
    tpu.vector_store %arg7[%c21_218, %c0_219], %325 {strides = array<i32>} : memref<32x2xf32, #tpu.memory_space<vmem>>, vector<1x2xf32>,
    %c4_220 = arith.constant 4 : index
    %c0_221 = arith.constant 0 : index
    %c0_222 = arith.constant 0 : index
    %327 = vector.load %arg1[%c4_220, %c0_221, %c0_222] : memref<8x32x2xbf16, #tpu.memory_space<vmem>>, vector<1x32x2xbf16>
    %328 = vector.shape_cast %327 : vector<1x32x2xbf16> to vector<32x2xbf16>
    %329 = arith.extf %328 : vector<32x2xbf16> to vector<32x2xf32>
    %c5_223 = arith.constant 5 : index
    %c0_224 = arith.constant 0 : index
    %c0_225 = arith.constant 0 : index
    %330 = vector.load %arg1[%c5_223, %c0_224, %c0_225] : memref<8x32x2xbf16, #tpu.memory_space<vmem>>, vector<1x32x2xbf16>
    %331 = vector.shape_cast %330 : vector<1x32x2xbf16> to vector<32x2xbf16>
    %332 = arith.extf %331 : vector<32x2xbf16> to vector<32x2xf32>
    %333 = arith.mulf %329, %332 : vector<32x2xf32>
    %cst_226 = arith.constant dense<0.000000e+00> : vector<17x2xf32>
    %334 = tpu.matmul %0, %333, %cst_226 {dimension_numbers = #tpu.dot_dimension_numbers<[1], [0], [0], [1], [0, 0, 1, 1], [], []>} : vector<17x32xf32>, vector<32x2xf32>, vector<17x2xf32> -> vector<17x2xf32>
    %335 = vector.extract_strided_slice %334 {offsets = [0, 0], sizes = [16, 2], strides = [1, 1]} : vector<17x2xf32> to vector<16x2xf32>
    %336 = vector.broadcast %1 : vector<16x1xf32> to vector<16x2xf32>
    %337 = arith.addf %335, %336 : vector<16x2xf32>
    %cst_227 = arith.constant 0.000000e+00 : f32
    %338 = vector.broadcast %cst_227 : f32 to vector<16x2xf32>
    %339 = arith.maximumf %337, %338 : vector<16x2xf32>
    %cst_228 = arith.constant dense<0.000000e+00> : vector<1x2xf32>
    %340 = tpu.matmul %2, %339, %cst_228 {dimension_numbers = #tpu.dot_dimension_numbers<[1], [0], [0], [1], [0, 0, 1, 1], [], []>} : vector<1x16xf32>, vector<16x2xf32>, vector<1x2xf32> -> vector<1x2xf32>
    %c22 = arith.constant 22 : index
    %c0_229 = arith.constant 0 : index
    %341 = vector.load %arg6[%c22, %c0_229] : memref<32x2xf32, #tpu.memory_space<vmem>>, vector<1x2xf32>
    tpu.vector_store %arg6[%c22, %c0_229], %340 {strides = array<i32>} : memref<32x2xf32, #tpu.memory_space<vmem>>, vector<1x2xf32>,
    %342 = vector.extract_strided_slice %334 {offsets = [16, 0], sizes = [1, 2], strides = [1, 1]} : vector<17x2xf32> to vector<1x2xf32>
    %c22_230 = arith.constant 22 : index
    %c0_231 = arith.constant 0 : index
    %343 = vector.load %arg7[%c22_230, %c0_231] : memref<32x2xf32, #tpu.memory_space<vmem>>, vector<1x2xf32>
    tpu.vector_store %arg7[%c22_230, %c0_231], %342 {strides = array<i32>} : memref<32x2xf32, #tpu.memory_space<vmem>>, vector<1x2xf32>,
    %c6_232 = arith.constant 6 : index
    %c0_233 = arith.constant 0 : index
    %c0_234 = arith.constant 0 : index
    %344 = vector.load %arg1[%c6_232, %c0_233, %c0_234] : memref<8x32x2xbf16, #tpu.memory_space<vmem>>, vector<1x32x2xbf16>
    %345 = vector.shape_cast %344 : vector<1x32x2xbf16> to vector<32x2xbf16>
    %346 = arith.extf %345 : vector<32x2xbf16> to vector<32x2xf32>
    %347 = arith.mulf %329, %346 : vector<32x2xf32>
    %cst_235 = arith.constant dense<0.000000e+00> : vector<17x2xf32>
    %348 = tpu.matmul %0, %347, %cst_235 {dimension_numbers = #tpu.dot_dimension_numbers<[1], [0], [0], [1], [0, 0, 1, 1], [], []>} : vector<17x32xf32>, vector<32x2xf32>, vector<17x2xf32> -> vector<17x2xf32>
    %349 = vector.extract_strided_slice %348 {offsets = [0, 0], sizes = [16, 2], strides = [1, 1]} : vector<17x2xf32> to vector<16x2xf32>
    %350 = vector.broadcast %1 : vector<16x1xf32> to vector<16x2xf32>
    %351 = arith.addf %349, %350 : vector<16x2xf32>
    %cst_236 = arith.constant 0.000000e+00 : f32
    %352 = vector.broadcast %cst_236 : f32 to vector<16x2xf32>
    %353 = arith.maximumf %351, %352 : vector<16x2xf32>
    %cst_237 = arith.constant dense<0.000000e+00> : vector<1x2xf32>
    %354 = tpu.matmul %2, %353, %cst_237 {dimension_numbers = #tpu.dot_dimension_numbers<[1], [0], [0], [1], [0, 0, 1, 1], [], []>} : vector<1x16xf32>, vector<16x2xf32>, vector<1x2xf32> -> vector<1x2xf32>
    %c23 = arith.constant 23 : index
    %c0_238 = arith.constant 0 : index
    %355 = vector.load %arg6[%c23, %c0_238] : memref<32x2xf32, #tpu.memory_space<vmem>>, vector<1x2xf32>
    tpu.vector_store %arg6[%c23, %c0_238], %354 {strides = array<i32>} : memref<32x2xf32, #tpu.memory_space<vmem>>, vector<1x2xf32>,
    %356 = vector.extract_strided_slice %348 {offsets = [16, 0], sizes = [1, 2], strides = [1, 1]} : vector<17x2xf32> to vector<1x2xf32>
    %c23_239 = arith.constant 23 : index
    %c0_240 = arith.constant 0 : index
    %357 = vector.load %arg7[%c23_239, %c0_240] : memref<32x2xf32, #tpu.memory_space<vmem>>, vector<1x2xf32>
    tpu.vector_store %arg7[%c23_239, %c0_240], %356 {strides = array<i32>} : memref<32x2xf32, #tpu.memory_space<vmem>>, vector<1x2xf32>,
    %c7_241 = arith.constant 7 : index
    %c0_242 = arith.constant 0 : index
    %c0_243 = arith.constant 0 : index
    %358 = vector.load %arg1[%c7_241, %c0_242, %c0_243] : memref<8x32x2xbf16, #tpu.memory_space<vmem>>, vector<1x32x2xbf16>
    %359 = vector.shape_cast %358 : vector<1x32x2xbf16> to vector<32x2xbf16>
    %360 = arith.extf %359 : vector<32x2xbf16> to vector<32x2xf32>
    %361 = arith.mulf %329, %360 : vector<32x2xf32>
    %cst_244 = arith.constant dense<0.000000e+00> : vector<17x2xf32>
    %362 = tpu.matmul %0, %361, %cst_244 {dimension_numbers = #tpu.dot_dimension_numbers<[1], [0], [0], [1], [0, 0, 1, 1], [], []>} : vector<17x32xf32>, vector<32x2xf32>, vector<17x2xf32> -> vector<17x2xf32>
    %363 = vector.extract_strided_slice %362 {offsets = [0, 0], sizes = [16, 2], strides = [1, 1]} : vector<17x2xf32> to vector<16x2xf32>
    %364 = vector.broadcast %1 : vector<16x1xf32> to vector<16x2xf32>
    %365 = arith.addf %363, %364 : vector<16x2xf32>
    %cst_245 = arith.constant 0.000000e+00 : f32
    %366 = vector.broadcast %cst_245 : f32 to vector<16x2xf32>
    %367 = arith.maximumf %365, %366 : vector<16x2xf32>
    %cst_246 = arith.constant dense<0.000000e+00> : vector<1x2xf32>
    %368 = tpu.matmul %2, %367, %cst_246 {dimension_numbers = #tpu.dot_dimension_numbers<[1], [0], [0], [1], [0, 0, 1, 1], [], []>} : vector<1x16xf32>, vector<16x2xf32>, vector<1x2xf32> -> vector<1x2xf32>
    %c24 = arith.constant 24 : index
    %c0_247 = arith.constant 0 : index
    %369 = vector.load %arg6[%c24, %c0_247] : memref<32x2xf32, #tpu.memory_space<vmem>>, vector<1x2xf32>
    tpu.vector_store %arg6[%c24, %c0_247], %368 {strides = array<i32>} : memref<32x2xf32, #tpu.memory_space<vmem>>, vector<1x2xf32>,
    %370 = vector.extract_strided_slice %362 {offsets = [16, 0], sizes = [1, 2], strides = [1, 1]} : vector<17x2xf32> to vector<1x2xf32>
    %c24_248 = arith.constant 24 : index
    %c0_249 = arith.constant 0 : index
    %371 = vector.load %arg7[%c24_248, %c0_249] : memref<32x2xf32, #tpu.memory_space<vmem>>, vector<1x2xf32>
    tpu.vector_store %arg7[%c24_248, %c0_249], %370 {strides = array<i32>} : memref<32x2xf32, #tpu.memory_space<vmem>>, vector<1x2xf32>,
    %c5_250 = arith.constant 5 : index
    %c0_251 = arith.constant 0 : index
    %c0_252 = arith.constant 0 : index
    %372 = vector.load %arg1[%c5_250, %c0_251, %c0_252] : memref<8x32x2xbf16, #tpu.memory_space<vmem>>, vector<1x32x2xbf16>
    %373 = vector.shape_cast %372 : vector<1x32x2xbf16> to vector<32x2xbf16>
    %374 = arith.extf %373 : vector<32x2xbf16> to vector<32x2xf32>
    %c6_253 = arith.constant 6 : index
    %c0_254 = arith.constant 0 : index
    %c0_255 = arith.constant 0 : index
    %375 = vector.load %arg1[%c6_253, %c0_254, %c0_255] : memref<8x32x2xbf16, #tpu.memory_space<vmem>>, vector<1x32x2xbf16>
    %376 = vector.shape_cast %375 : vector<1x32x2xbf16> to vector<32x2xbf16>
    %377 = arith.extf %376 : vector<32x2xbf16> to vector<32x2xf32>
    %378 = arith.mulf %374, %377 : vector<32x2xf32>
    %cst_256 = arith.constant dense<0.000000e+00> : vector<17x2xf32>
    %379 = tpu.matmul %0, %378, %cst_256 {dimension_numbers = #tpu.dot_dimension_numbers<[1], [0], [0], [1], [0, 0, 1, 1], [], []>} : vector<17x32xf32>, vector<32x2xf32>, vector<17x2xf32> -> vector<17x2xf32>
    %380 = vector.extract_strided_slice %379 {offsets = [0, 0], sizes = [16, 2], strides = [1, 1]} : vector<17x2xf32> to vector<16x2xf32>
    %381 = vector.broadcast %1 : vector<16x1xf32> to vector<16x2xf32>
    %382 = arith.addf %380, %381 : vector<16x2xf32>
    %cst_257 = arith.constant 0.000000e+00 : f32
    %383 = vector.broadcast %cst_257 : f32 to vector<16x2xf32>
    %384 = arith.maximumf %382, %383 : vector<16x2xf32>
    %cst_258 = arith.constant dense<0.000000e+00> : vector<1x2xf32>
    %385 = tpu.matmul %2, %384, %cst_258 {dimension_numbers = #tpu.dot_dimension_numbers<[1], [0], [0], [1], [0, 0, 1, 1], [], []>} : vector<1x16xf32>, vector<16x2xf32>, vector<1x2xf32> -> vector<1x2xf32>
    %c25 = arith.constant 25 : index
    %c0_259 = arith.constant 0 : index
    %386 = vector.load %arg6[%c25, %c0_259] : memref<32x2xf32, #tpu.memory_space<vmem>>, vector<1x2xf32>
    tpu.vector_store %arg6[%c25, %c0_259], %385 {strides = array<i32>} : memref<32x2xf32, #tpu.memory_space<vmem>>, vector<1x2xf32>,
    %387 = vector.extract_strided_slice %379 {offsets = [16, 0], sizes = [1, 2], strides = [1, 1]} : vector<17x2xf32> to vector<1x2xf32>
    %c25_260 = arith.constant 25 : index
    %c0_261 = arith.constant 0 : index
    %388 = vector.load %arg7[%c25_260, %c0_261] : memref<32x2xf32, #tpu.memory_space<vmem>>, vector<1x2xf32>
    tpu.vector_store %arg7[%c25_260, %c0_261], %387 {strides = array<i32>} : memref<32x2xf32, #tpu.memory_space<vmem>>, vector<1x2xf32>,
    %c7_262 = arith.constant 7 : index
    %c0_263 = arith.constant 0 : index
    %c0_264 = arith.constant 0 : index
    %389 = vector.load %arg1[%c7_262, %c0_263, %c0_264] : memref<8x32x2xbf16, #tpu.memory_space<vmem>>, vector<1x32x2xbf16>
    %390 = vector.shape_cast %389 : vector<1x32x2xbf16> to vector<32x2xbf16>
    %391 = arith.extf %390 : vector<32x2xbf16> to vector<32x2xf32>
    %392 = arith.mulf %374, %391 : vector<32x2xf32>
    %cst_265 = arith.constant dense<0.000000e+00> : vector<17x2xf32>
    %393 = tpu.matmul %0, %392, %cst_265 {dimension_numbers = #tpu.dot_dimension_numbers<[1], [0], [0], [1], [0, 0, 1, 1], [], []>} : vector<17x32xf32>, vector<32x2xf32>, vector<17x2xf32> -> vector<17x2xf32>
    %394 = vector.extract_strided_slice %393 {offsets = [0, 0], sizes = [16, 2], strides = [1, 1]} : vector<17x2xf32> to vector<16x2xf32>
    %395 = vector.broadcast %1 : vector<16x1xf32> to vector<16x2xf32>
    %396 = arith.addf %394, %395 : vector<16x2xf32>
    %cst_266 = arith.constant 0.000000e+00 : f32
    %397 = vector.broadcast %cst_266 : f32 to vector<16x2xf32>
    %398 = arith.maximumf %396, %397 : vector<16x2xf32>
    %cst_267 = arith.constant dense<0.000000e+00> : vector<1x2xf32>
    %399 = tpu.matmul %2, %398, %cst_267 {dimension_numbers = #tpu.dot_dimension_numbers<[1], [0], [0], [1], [0, 0, 1, 1], [], []>} : vector<1x16xf32>, vector<16x2xf32>, vector<1x2xf32> -> vector<1x2xf32>
    %c26 = arith.constant 26 : index
    %c0_268 = arith.constant 0 : index
    %400 = vector.load %arg6[%c26, %c0_268] : memref<32x2xf32, #tpu.memory_space<vmem>>, vector<1x2xf32>
    tpu.vector_store %arg6[%c26, %c0_268], %399 {strides = array<i32>} : memref<32x2xf32, #tpu.memory_space<vmem>>, vector<1x2xf32>,
    %401 = vector.extract_strided_slice %393 {offsets = [16, 0], sizes = [1, 2], strides = [1, 1]} : vector<17x2xf32> to vector<1x2xf32>
    %c26_269 = arith.constant 26 : index
    %c0_270 = arith.constant 0 : index
    %402 = vector.load %arg7[%c26_269, %c0_270] : memref<32x2xf32, #tpu.memory_space<vmem>>, vector<1x2xf32>
    tpu.vector_store %arg7[%c26_269, %c0_270], %401 {strides = array<i32>} : memref<32x2xf32, #tpu.memory_space<vmem>>, vector<1x2xf32>,
    %c6_271 = arith.constant 6 : index
    %c0_272 = arith.constant 0 : index
    %c0_273 = arith.constant 0 : index
    %403 = vector.load %arg1[%c6_271, %c0_272, %c0_273] : memref<8x32x2xbf16, #tpu.memory_space<vmem>>, vector<1x32x2xbf16>
    %404 = vector.shape_cast %403 : vector<1x32x2xbf16> to vector<32x2xbf16>
    %405 = arith.extf %404 : vector<32x2xbf16> to vector<32x2xf32>
    %c7_274 = arith.constant 7 : index
    %c0_275 = arith.constant 0 : index
    %c0_276 = arith.constant 0 : index
    %406 = vector.load %arg1[%c7_274, %c0_275, %c0_276] : memref<8x32x2xbf16, #tpu.memory_space<vmem>>, vector<1x32x2xbf16>
    %407 = vector.shape_cast %406 : vector<1x32x2xbf16> to vector<32x2xbf16>
    %408 = arith.extf %407 : vector<32x2xbf16> to vector<32x2xf32>
    %409 = arith.mulf %405, %408 : vector<32x2xf32>
    %cst_277 = arith.constant dense<0.000000e+00> : vector<17x2xf32>
    %410 = tpu.matmul %0, %409, %cst_277 {dimension_numbers = #tpu.dot_dimension_numbers<[1], [0], [0], [1], [0, 0, 1, 1], [], []>} : vector<17x32xf32>, vector<32x2xf32>, vector<17x2xf32> -> vector<17x2xf32>
    %411 = vector.extract_strided_slice %410 {offsets = [0, 0], sizes = [16, 2], strides = [1, 1]} : vector<17x2xf32> to vector<16x2xf32>
    %412 = vector.broadcast %1 : vector<16x1xf32> to vector<16x2xf32>
    %413 = arith.addf %411, %412 : vector<16x2xf32>
    %cst_278 = arith.constant 0.000000e+00 : f32
    %414 = vector.broadcast %cst_278 : f32 to vector<16x2xf32>
    %415 = arith.maximumf %413, %414 : vector<16x2xf32>
    %cst_279 = arith.constant dense<0.000000e+00> : vector<1x2xf32>
    %416 = tpu.matmul %2, %415, %cst_279 {dimension_numbers = #tpu.dot_dimension_numbers<[1], [0], [0], [1], [0, 0, 1, 1], [], []>} : vector<1x16xf32>, vector<16x2xf32>, vector<1x2xf32> -> vector<1x2xf32>
    %c27 = arith.constant 27 : index
    %c0_280 = arith.constant 0 : index
    %417 = vector.load %arg6[%c27, %c0_280] : memref<32x2xf32, #tpu.memory_space<vmem>>, vector<1x2xf32>
    tpu.vector_store %arg6[%c27, %c0_280], %416 {strides = array<i32>} : memref<32x2xf32, #tpu.memory_space<vmem>>, vector<1x2xf32>,
    %418 = vector.extract_strided_slice %410 {offsets = [16, 0], sizes = [1, 2], strides = [1, 1]} : vector<17x2xf32> to vector<1x2xf32>
    %c27_281 = arith.constant 27 : index
    %c0_282 = arith.constant 0 : index
    %419 = vector.load %arg7[%c27_281, %c0_282] : memref<32x2xf32, #tpu.memory_space<vmem>>, vector<1x2xf32>
    tpu.vector_store %arg7[%c27_281, %c0_282], %418 {strides = array<i32>} : memref<32x2xf32, #tpu.memory_space<vmem>>, vector<1x2xf32>,
    %c0_283 = arith.constant 0 : index
    %c0_284 = arith.constant 0 : index
    %420 = vector.load %arg6[%c0_283, %c0_284] : memref<32x2xf32, #tpu.memory_space<vmem>>, vector<32x2xf32>
    %c0_285 = arith.constant 0 : index
    %c0_286 = arith.constant 0 : index
    %421 = vector.load %arg7[%c0_285, %c0_286] : memref<32x2xf32, #tpu.memory_space<vmem>>, vector<32x2xf32>
    %cst_287 = arith.constant dense<0xFF800000> : vector<2xf32>
    %422 = vector.multi_reduction <maximumf>, %420, %cst_287 [0] : vector<32x2xf32> to vector<2xf32>
    %423 = vector.shape_cast %422 : vector<2xf32> to vector<1x2xf32>
    %424 = vector.broadcast %423 : vector<1x2xf32> to vector<32x2xf32>
    %425 = arith.subf %420, %424 : vector<32x2xf32>
    %426 = math.exp %425 : vector<32x2xf32>
    %cst_288 = arith.constant dense<0.000000e+00> : vector<2xf32>
    %427 = vector.multi_reduction <add>, %426, %cst_288 [0] : vector<32x2xf32> to vector<2xf32>
    %428 = vector.shape_cast %427 : vector<2xf32> to vector<1x2xf32>
    %429 = arith.mulf %426, %421 : vector<32x2xf32>
    %cst_289 = arith.constant dense<0.000000e+00> : vector<2xf32>
    %430 = vector.multi_reduction <add>, %429, %cst_289 [0] : vector<32x2xf32> to vector<2xf32>
    %431 = vector.shape_cast %430 : vector<2xf32> to vector<1x2xf32>
    %432 = tpu.reciprocal %428 : vector<1x2xf32> -> vector<1x2xf32>
    %433 = arith.mulf %431, %432 : vector<1x2xf32>
    %c0_290 = arith.constant 0 : index
    %c0_291 = arith.constant 0 : index
    %434 = vector.load %arg5[%c0_290, %c0_291] : memref<1x2xf32, #tpu.memory_space<vmem>>, vector<1x2xf32>
    tpu.vector_store %arg5[%c0_290, %c0_291], %433 {strides = array<i32>} : memref<1x2xf32, #tpu.memory_space<vmem>>, vector<1x2xf32>,
    return
  }
  func.func @transform_0(%arg0: i32) -> (i32, i32, i32) {
    %c0_i32 = arith.constant 0 : i32
    %c0_i32_0 = arith.constant 0 : i32
    %c0_i32_1 = arith.constant 0 : i32
    return %c0_i32, %c0_i32_0, %arg0 : i32, i32, i32
  }
  func.func @transform_1(%arg0: i32) -> (i32, i32) {
    %c0_i32 = arith.constant 0 : i32
    %c0_i32_0 = arith.constant 0 : i32
    %c0_i32_1 = arith.constant 0 : i32
    return %c0_i32, %c0_i32_0 : i32, i32
  }
  func.func @transform_2(%arg0: i32) -> (i32, i32) {
    %c0_i32 = arith.constant 0 : i32
    %c0_i32_0 = arith.constant 0 : i32
    %c0_i32_1 = arith.constant 0 : i32
    return %c0_i32, %c0_i32_0 : i32, i32
  }
  func.func @transform_3(%arg0: i32) -> (i32, i32) {
    %c0_i32 = arith.constant 0 : i32
    %c0_i32_0 = arith.constant 0 : i32
    %c0_i32_1 = arith.constant 0 : i32
    return %c0_i32, %c0_i32_0 : i32, i32
  }
  func.func @transform_4(%arg0: i32) -> (i32, i32) {
    %c0_i32 = arith.constant 0 : i32
    %c0_i32_0 = arith.constant 0 : i32
    return %c0_i32, %arg0 : i32, i32
  }
}

</mosaic_0001>

<llo_original>
// kernel: fm_attention.1
$region0: #{fm_attention.1}
  #allocation0 [shape = 'u32[]', space=smem, size = 0x4, offset = 0x4, fixed_abs, tag = 'smem constant byte address 0x4 - core index']
  #allocation1 [shape = 'u32[144,128]{1,0:T(1,128)}', space=vmem, size = 0x12000, scoped, tag = 'internal scratch']
  #allocation2 [shape = 'f32[32,2]{1,0:T(8,128)}', space=vmem, size = 0x4000, scoped, tag = 'scratch operand']
  #allocation3 [shape = 'f32[32,2]{1,0:T(8,128)}', space=vmem, size = 0x4000, scoped, tag = 'scratch operand']
  %s0 = inlined_call_operand.vmem [shape: bf16[8,32,2], index: 0, kind: input, shape index: {}]
  %s1 = inlined_call_operand.vmem [shape: f32[17,32], index: 1, kind: input, shape index: {}]
  %s2 = inlined_call_operand.vmem [shape: f32[16,1], index: 2, kind: input, shape index: {}]
  %s3 = inlined_call_operand.vmem [shape: f32[1,16], index: 3, kind: input, shape index: {}]
  %s4 = inlined_call_operand.hbm [shape: f32[1,2], index: 4, kind: output, shape index: {}]
  %s5 = sld [smem:[#allocation0]]
  $region26: #{fm_attention.1} parent=0
    _
  %s7 = ssub.s32 1, %s5
  %s8 = scalar_select 0, %s7, %s5
  $region1: #{fm_attention.1} parent=0
    #allocation4 [shape = 'u8[512]{0}', space=vmem, size = 0x400, scoped, tag = 'output window, operand 0, single buffered']
    #allocation5 [shape = 's32[1]{0}', space=sflag, size = 0x4, scoped, tag = 'scoped memory for fm_attention.1']
    %9 = vsyncpa [#allocation5], 0
    // Predicated region
    $region2: #{fm_attention.1} parent=1 // pred_check
      _
    $region3: #{fm_attention.1} parent=1 // pred_check_branch
      %11 = sbr.rel (0) target = $region5
    $region4: #{fm_attention.1} parent=1 // pred_region
      _
    $region5: #{fm_attention.1} parent=1 // pred_fallthru
      _
    // Predicated region
    $region6: #{fm_attention.1} parent=1 // pred_check
      _
    $region7: #{fm_attention.1} parent=1 // pred_check_branch
      %13 = sbr.rel (0) target = $region9
    $region8: #{fm_attention.1} parent=1 // pred_region
      _
    $region9: #{fm_attention.1} parent=1 // pred_fallthru
      _
    // Predicated region
    $region10: #{fm_attention.1} parent=1 // pred_check
      _
    $region11: #{fm_attention.1} parent=1 // pred_check_branch
      %15 = sbr.rel (0) target = $region13
    $region12: #{fm_attention.1} parent=1 // pred_region
      _
    $region13: #{fm_attention.1} parent=1 // pred_fallthru
      _
    // Predicated region
    $region14: #{fm_attention.1} parent=1 // pred_check
      _
    $region15: #{fm_attention.1} parent=1 // pred_check_branch
      %17 = sbr.rel (0) target = $region17
    $region16: #{fm_attention.1} parent=1 // pred_region
      _
    $region17: #{fm_attention.1} parent=1 // pred_fallthru
      _
    %v18 = vld [vmem:[%s1] sm:$0xff]
    %v19 = vld [vmem:[%s1 + $0x8] sm:$0xff]
    %v20 = vld [vmem:[%s1 + $0x10] sm:$0x1]
    %v21 = vld [vmem:[%s2] sm:$0xff]
    %v22 = vld [vmem:[%s2 + $0x8] sm:$0xff]
    %v23 = vld [vmem:[%s3] sm:$0x1]
    %vm24 = vcmask 11264
    %25 = vst.msk [vmem:[#allocation2 + $0x1c] sm:$0xf] %vm24, -1e+30
    %26 = vst.msk [vmem:[#allocation3 + $0x1c] sm:$0xf] %vm24, 0.0
    %v27 = vld [vmem:[%s0] sm:$0xf]
    %v28 = vld [vmem:[%s0 + $0x4] sm:$0xf]
    %v29 = vld [vmem:[%s0 + $0x8] sm:$0xf]
    %v30 = vld [vmem:[%s0 + $0xc] sm:$0xf]
    %v31 = vunpack.c.l.bf16 %v27
    %v32 = vunpack.c.l.bf16 %v28
    %v33 = vunpack.c.l.bf16 %v29
    %v34 = vunpack.c.l.bf16 %v30
    %s35 = scalar_lea.vmem %s0, 16
    %v36 = vld [vmem:[%s35] sm:$0xf]
    %v37 = vld [vmem:[%s35 + $0x4] sm:$0xf]
    %v38 = vld [vmem:[%s35 + $0x8] sm:$0xf]
    %v39 = vld [vmem:[%s35 + $0xc] sm:$0xf]
    %v40 = vunpack.c.l.bf16 %v36
    %v41 = vunpack.c.l.bf16 %v37
    %v42 = vunpack.c.l.bf16 %v38
    %v43 = vunpack.c.l.bf16 %v39
    %v44 = vmul.f32 %v31, %v40
    %v45 = vmul.f32 %v32, %v41
    %v46 = vmul.f32 %v33, %v42
    %v47 = vmul.f32 %v34, %v43
    %vm48 = vcmask 261120
    %v50 = vsel %vm48, %v18, 0
    %v53 = vsel %vm48, %v19, 0
    %v56 = vsel %vm48, %v20, 0
    %58 = vmatprep.subr.mxu0 0.0
    %59 = vmatpush1.msra.mxu0 %v44
    %60 = vmatprep.subr.mxu0 0.0
    %61 = vmatpush1.msra.mxu0 %v45
    %62 = vmatprep.subr.mxu0 0.0
    %63 = vmatpush1.msra.mxu0 %v46
    %64 = vmatprep.subr.mxu0 0.0
    %65 = vmatpush1.msra.mxu0 %v47
    %66 = vmatprep.subr.mxu0 0.0
    %67 = vmatpush1.msra.mxu0 0.0
    %68 = vmatprep.subr.mxu0 0.0
    %69 = vmatpush1.msra.mxu0 0.0
    %70 = vmatprep.subr.mxu0 0.0
    %71 = vmatpush1.msra.mxu0 0.0
    %72 = vmatprep.subr.mxu0 0.0
    %73 = vmatpush1.msra.mxu0 0.0
    %74 = vmatprep.subr.mxu0 0.0
    %75 = vmatpush1.msra.mxu0 0.0
    %76 = vmatprep.subr.mxu0 0.0
    %77 = vmatpush1.msra.mxu0 0.0
    %78 = vmatprep.subr.mxu0 0.0
    %79 = vmatpush1.msra.mxu0 0.0
    %80 = vmatprep.subr.mxu0 0.0
    %81 = vmatpush1.msra.mxu0 0.0
    %82 = vmatprep.subr.mxu0 0.0
    %83 = vmatpush1.msra.mxu0 0.0
    %84 = vmatprep.subr.mxu0 0.0
    %85 = vmatpush1.msra.mxu0 0.0
    %86 = vmatprep.subr.mxu0 0.0
    %87 = vmatpush1.msra.mxu0 0.0
    %88 = vmatprep.subr.mxu0 0.0
    %89 = vmatpush1.msra.mxu0 0.0
    %90 = vmatprep.subr.mxu0 0.0
    %91 = vmatpush1.msra.mxu0 0.0
    %92 = vmatprep.subr.mxu0 0.0
    %93 = vmatpush1.msra.mxu0 0.0
    %94 = vmatprep.subr.mxu0 0.0
    %95 = vmatpush1.msra.mxu0 0.0
    %96 = vmatprep.subr.mxu0 0.0
    %97 = vmatpush1.msra.mxu0 0.0
    %98 = vmatprep.subr.mxu0 0.0
    %99 = vmatpush1.msra.mxu0 0.0
    %100 = vmatprep.subr.mxu0 0.0
    %101 = vmatpush1.msra.mxu0 0.0
    %102 = vmatprep.subr.mxu0 0.0
    %103 = vmatpush1.msra.mxu0 0.0
    %104 = vmatprep.subr.mxu0 0.0
    %105 = vmatpush1.msra.mxu0 0.0
    %106 = vmatprep.subr.mxu0 0.0
    %107 = vmatpush1.msra.mxu0 0.0
    %108 = vmatprep.subr.mxu0 0.0
    %109 = vmatpush1.msra.mxu0 0.0
    %110 = vmatprep.subr.mxu0 0.0
    %111 = vmatpush1.msra.mxu0 0.0
    %112 = vmatprep.subr.mxu0 0.0
    %113 = vmatpush1.msra.mxu0 0.0
    %114 = vmatprep.subr.mxu0 0.0
    %115 = vmatpush1.msra.mxu0 0.0
    %116 = vmatprep.subr.mxu0 0.0
    %117 = vmatpush1.msra.mxu0 0.0
    %118 = vmatprep.subr.mxu0 0.0
    %119 = vmatpush1.msra.mxu0 0.0
    %120 = vmatprep.subr.mxu0 0.0
    %121 = vmatpush1.msra.mxu0 0.0
    %122 = vmatprep.mubr.f32.mxu0 0.0
    %123 = vmatmul.mubr.f32.gmra.mrb[0].mxu0 %v50
    %v124 = vpop.f32.mrb[0].mxu0
    %v125 = vadd.f32 0.0, %v124
    %v126 = vpop.f32.mrb[0].mxu0
    %127 = vmatprep.mubr.f32.mxu0 0.0
    %128 = vmatmul.mubr.f32.gmra.mrb[0].mxu0 %v53
    %v129 = vpop.f32.mrb[0].mxu0
    %v130 = vadd.f32 0.0, %v129
    %v131 = vpop.f32.mrb[0].mxu0
    %132 = vmatprep.mubr.f32.mxu0 0.0
    %133 = vmatmul.mubr.f32.gmra.mrb[0].mxu0 %v56
    %v134 = vpop.f32.mrb[0].mxu0
    %v135 = vadd.f32 0.0, %v134
    %v136 = vpop.f32.mrb[0].mxu0
    %137 = vdwg.mxu0
    %139 = vset.pattern.permute.xlu0 0
    %140 = vperm.xlu0 %139, %v21
    %v141 = vpop.permute.xlu0 %140
    %144 = vset.pattern.permute.xlu0 0
    %145 = vperm.xlu0 %144, %v22
    %v146 = vpop.permute.xlu0 %145
    %v148 = vadd.f32 %v125, %v141
    %v149 = vadd.f32 %v130, %v146
    %v150 = vmax.f32 %v148, 0.0
    %v151 = vmax.f32 %v149, 0.0
    %vm152 = vcmask 130048
    %v154 = vsel %vm152, %v23, 0
    %156 = vmatprep.subr.mxu0 0.0
    %157 = vmatpush1.msra.mxu0 %v150
    %158 = vmatprep.subr.mxu0 0.0
    %159 = vmatpush1.msra.mxu0 %v151
    %160 = vmatprep.subr.mxu0 0.0
    %161 = vmatpush1.msra.mxu0 0.0
    %162 = vmatprep.subr.mxu0 0.0
    %163 = vmatpush1.msra.mxu0 0.0
    %164 = vmatprep.subr.mxu0 0.0
    %165 = vmatpush1.msra.mxu0 0.0
    %166 = vmatprep.subr.mxu0 0.0
    %167 = vmatpush1.msra.mxu0 0.0
    %168 = vmatprep.subr.mxu0 0.0
    %169 = vmatpush1.msra.mxu0 0.0
    %170 = vmatprep.subr.mxu0 0.0
    %171 = vmatpush1.msra.mxu0 0.0
    %172 = vmatprep.subr.mxu0 0.0
    %173 = vmatpush1.msra.mxu0 0.0
    %174 = vmatprep.subr.mxu0 0.0
    %175 = vmatpush1.msra.mxu0 0.0
    %176 = vmatprep.subr.mxu0 0.0
    %177 = vmatpush1.msra.mxu0 0.0
    %178 = vmatprep.subr.mxu0 0.0
    %179 = vmatpush1.msra.mxu0 0.0
    %180 = vmatprep.subr.mxu0 0.0
    %181 = vmatpush1.msra.mxu0 0.0
    %182 = vmatprep.subr.mxu0 0.0
    %183 = vmatpush1.msra.mxu0 0.0
    %184 = vmatprep.subr.mxu0 0.0
    %185 = vmatpush1.msra.mxu0 0.0
    %186 = vmatprep.subr.mxu0 0.0
    %187 = vmatpush1.msra.mxu0 0.0
    %188 = vmatprep.subr.mxu0 0.0
    %189 = vmatpush1.msra.mxu0 0.0
    %190 = vmatprep.subr.mxu0 0.0
    %191 = vmatpush1.msra.mxu0 0.0
    %192 = vmatprep.subr.mxu0 0.0
    %193 = vmatpush1.msra.mxu0 0.0
    %194 = vmatprep.subr.mxu0 0.0
    %195 = vmatpush1.msra.mxu0 0.0
    %196 = vmatprep.subr.mxu0 0.0
    %197 = vmatpush1.msra.mxu0 0.0
    %198 = vmatprep.subr.mxu0 0.0
    %199 = vmatpush1.msra.mxu0 0.0
    %200 = vmatprep.subr.mxu0 0.0
    %201 = vmatpush1.msra.mxu0 0.0
    %202 = vmatprep.subr.mxu0 0.0
    %203 = vmatpush1.msra.mxu0 0.0
    %204 = vmatprep.subr.mxu0 0.0
    %205 = vmatpush1.msra.mxu0 0.0
    %206 = vmatprep.subr.mxu0 0.0
    %207 = vmatpush1.msra.mxu0 0.0
    %208 = vmatprep.subr.mxu0 0.0
    %209 = vmatpush1.msra.mxu0 0.0
    %210 = vmatprep.subr.mxu0 0.0
    %211 = vmatpush1.msra.mxu0 0.0
    %212 = vmatprep.subr.mxu0 0.0
    %213 = vmatpush1.msra.mxu0 0.0
    %214 = vmatprep.subr.mxu0 0.0
    %215 = vmatpush1.msra.mxu0 0.0
    %216 = vmatprep.subr.mxu0 0.0
    %217 = vmatpush1.msra.mxu0 0.0
    %218 = vmatprep.subr.mxu0 0.0
    %219 = vmatpush1.msra.mxu0 0.0
    %220 = vmatprep.mubr.f32.mxu0 0.0
    %221 = vmatmul.mubr.f32.gmra.mrb[0].mxu0 %v154
    %v222 = vpop.f32.mrb[0].mxu0
    %v223 = vadd.f32 0.0, %v222
    %v224 = vpop.f32.mrb[0].mxu0
    %225 = vdwg.mxu0
    %vm226 = vcmask 8192
    %227 = vst.msk [vmem:[#allocation2] sm:$0x1] %vm226, %v223
    %228 = vst.msk [vmem:[#allocation3] sm:$0x1] %vm226, %v135
    %s229 = scalar_lea.vmem %s0, 32
    %v230 = vld [vmem:[%s229] sm:$0xf]
    %v231 = vld [vmem:[%s229 + $0x4] sm:$0xf]
    %v232 = vld [vmem:[%s229 + $0x8] sm:$0xf]
    %v233 = vld [vmem:[%s229 + $0xc] sm:$0xf]
    %v234 = vunpack.c.l.bf16 %v230
    %v235 = vunpack.c.l.bf16 %v231
    %v236 = vunpack.c.l.bf16 %v232
    %v237 = vunpack.c.l.bf16 %v233
    %v238 = vmul.f32 %v31, %v234
    %v239 = vmul.f32 %v32, %v235
    %v240 = vmul.f32 %v33, %v236
    %v241 = vmul.f32 %v34, %v237
    %242 = vmatprep.subr.mxu0 0.0
    %243 = vmatpush1.msra.mxu0 %v238
    %244 = vmatprep.subr.mxu0 0.0
    %245 = vmatpush1.msra.mxu0 %v239
    %246 = vmatprep.subr.mxu0 0.0
    %247 = vmatpush1.msra.mxu0 %v240
    %248 = vmatprep.subr.mxu0 0.0
    %249 = vmatpush1.msra.mxu0 %v241
    %250 = vmatprep.subr.mxu0 0.0
    %251 = vmatpush1.msra.mxu0 0.0
    %252 = vmatprep.subr.mxu0 0.0
    %253 = vmatpush1.msra.mxu0 0.0
    %254 = vmatprep.subr.mxu0 0.0
    %255 = vmatpush1.msra.mxu0 0.0
    %256 = vmatprep.subr.mxu0 0.0
    %257 = vmatpush1.msra.mxu0 0.0
    %258 = vmatprep.subr.mxu0 0.0
    %259 = vmatpush1.msra.mxu0 0.0
    %260 = vmatprep.subr.mxu0 0.0
    %261 = vmatpush1.msra.mxu0 0.0
    %262 = vmatprep.subr.mxu0 0.0
    %263 = vmatpush1.msra.mxu0 0.0
    %264 = vmatprep.subr.mxu0 0.0
    %265 = vmatpush1.msra.mxu0 0.0
    %266 = vmatprep.subr.mxu0 0.0
    %267 = vmatpush1.msra.mxu0 0.0
    %268 = vmatprep.subr.mxu0 0.0
    %269 = vmatpush1.msra.mxu0 0.0
    %270 = vmatprep.subr.mxu0 0.0
    %271 = vmatpush1.msra.mxu0 0.0
    %272 = vmatprep.subr.mxu0 0.0
    %273 = vmatpush1.msra.mxu0 0.0
    %274 = vmatprep.subr.mxu0 0.0
    %275 = vmatpush1.msra.mxu0 0.0
    %276 = vmatprep.subr.mxu0 0.0
    %277 = vmatpush1.msra.mxu0 0.0
    %278 = vmatprep.subr.mxu0 0.0
    %279 = vmatpush1.msra.mxu0 0.0
    %280 = vmatprep.subr.mxu0 0.0
    %281 = vmatpush1.msra.mxu0 0.0
    %282 = vmatprep.subr.mxu0 0.0
    %283 = vmatpush1.msra.mxu0 0.0
    %284 = vmatprep.subr.mxu0 0.0
    %285 = vmatpush1.msra.mxu0 0.0
    %286 = vmatprep.subr.mxu0 0.0
    %287 = vmatpush1.msra.mxu0 0.0
    %288 = vmatprep.subr.mxu0 0.0
    %289 = vmatpush1.msra.mxu0 0.0
    %290 = vmatprep.subr.mxu0 0.0
    %291 = vmatpush1.msra.mxu0 0.0
    %292 = vmatprep.subr.mxu0 0.0
    %293 = vmatpush1.msra.mxu0 0.0
    %294 = vmatprep.subr.mxu0 0.0
    %295 = vmatpush1.msra.mxu0 0.0
    %296 = vmatprep.subr.mxu0 0.0
    %297 = vmatpush1.msra.mxu0 0.0
    %298 = vmatprep.subr.mxu0 0.0
    %299 = vmatpush1.msra.mxu0 0.0
    %300 = vmatprep.subr.mxu0 0.0
    %301 = vmatpush1.msra.mxu0 0.0
    %302 = vmatprep.subr.mxu0 0.0
    %303 = vmatpush1.msra.mxu0 0.0
    %304 = vmatprep.subr.mxu0 0.0
    %305 = vmatpush1.msra.mxu0 0.0
    %306 = vmatprep.mubr.f32.mxu0 0.0
    %307 = vmatmul.mubr.f32.gmra.mrb[0].mxu0 %v50
    %v308 = vpop.f32.mrb[0].mxu0
    %v309 = vadd.f32 0.0, %v308
    %v310 = vpop.f32.mrb[0].mxu0
    %311 = vmatprep.mubr.f32.mxu0 0.0
    %312 = vmatmul.mubr.f32.gmra.mrb[0].mxu0 %v53
    %v313 = vpop.f32.mrb[0].mxu0
    %v314 = vadd.f32 0.0, %v313
    %v315 = vpop.f32.mrb[0].mxu0
    %316 = vmatprep.mubr.f32.mxu0 0.0
    %317 = vmatmul.mubr.f32.gmra.mrb[0].mxu0 %v56
    %v318 = vpop.f32.mrb[0].mxu0
    %v319 = vadd.f32 0.0, %v318
    %v320 = vpop.f32.mrb[0].mxu0
    %321 = vdwg.mxu0
    %v322 = vadd.f32 %v309, %v141
    %v323 = vadd.f32 %v314, %v146
    %v324 = vmax.f32 %v322, 0.0
    %v325 = vmax.f32 %v323, 0.0
    %326 = vmatprep.subr.mxu0 0.0
    %327 = vmatpush1.msra.mxu0 %v324
    %328 = vmatprep.subr.mxu0 0.0
    %329 = vmatpush1.msra.mxu0 %v325
    %330 = vmatprep.subr.mxu0 0.0
    %331 = vmatpush1.msra.mxu0 0.0
    %332 = vmatprep.subr.mxu0 0.0
    %333 = vmatpush1.msra.mxu0 0.0
    %334 = vmatprep.subr.mxu0 0.0
    %335 = vmatpush1.msra.mxu0 0.0
    %336 = vmatprep.subr.mxu0 0.0
    %337 = vmatpush1.msra.mxu0 0.0
    %338 = vmatprep.subr.mxu0 0.0
    %339 = vmatpush1.msra.mxu0 0.0
    %340 = vmatprep.subr.mxu0 0.0
    %341 = vmatpush1.msra.mxu0 0.0
    %342 = vmatprep.subr.mxu0 0.0
    %343 = vmatpush1.msra.mxu0 0.0
    %344 = vmatprep.subr.mxu0 0.0
    %345 = vmatpush1.msra.mxu0 0.0
    %346 = vmatprep.subr.mxu0 0.0
    %347 = vmatpush1.msra.mxu0 0.0
    %348 = vmatprep.subr.mxu0 0.0
    %349 = vmatpush1.msra.mxu0 0.0
    %350 = vmatprep.subr.mxu0 0.0
    %351 = vmatpush1.msra.mxu0 0.0
    %352 = vmatprep.subr.mxu0 0.0
    %353 = vmatpush1.msra.mxu0 0.0
    %354 = vmatprep.subr.mxu0 0.0
    %355 = vmatpush1.msra.mxu0 0.0
    %356 = vmatprep.subr.mxu0 0.0
    %357 = vmatpush1.msra.mxu0 0.0
    %358 = vmatprep.subr.mxu0 0.0
    %359 = vmatpush1.msra.mxu0 0.0
    %360 = vmatprep.subr.mxu0 0.0
    %361 = vmatpush1.msra.mxu0 0.0
    %362 = vmatprep.subr.mxu0 0.0
    %363 = vmatpush1.msra.mxu0 0.0
    %364 = vmatprep.subr.mxu0 0.0
    %365 = vmatpush1.msra.mxu0 0.0
    %366 = vmatprep.subr.mxu0 0.0
    %367 = vmatpush1.msra.mxu0 0.0
    %368 = vmatprep.subr.mxu0 0.0
    %369 = vmatpush1.msra.mxu0 0.0
    %370 = vmatprep.subr.mxu0 0.0
    %371 = vmatpush1.msra.mxu0 0.0
    %372 = vmatprep.subr.mxu0 0.0
    %373 = vmatpush1.msra.mxu0 0.0
    %374 = vmatprep.subr.mxu0 0.0
    %375 = vmatpush1.msra.mxu0 0.0
    %376 = vmatprep.subr.mxu0 0.0
    %377 = vmatpush1.msra.mxu0 0.0
    %378 = vmatprep.subr.mxu0 0.0
    %379 = vmatpush1.msra.mxu0 0.0
    %380 = vmatprep.subr.mxu0 0.0
    %381 = vmatpush1.msra.mxu0 0.0
    %382 = vmatprep.subr.mxu0 0.0
    %383 = vmatpush1.msra.mxu0 0.0
    %384 = vmatprep.subr.mxu0 0.0
    %385 = vmatpush1.msra.mxu0 0.0
    %386 = vmatprep.subr.mxu0 0.0
    %387 = vmatpush1.msra.mxu0 0.0
    %388 = vmatprep.subr.mxu0 0.0
    %389 = vmatpush1.msra.mxu0 0.0
    %390 = vmatprep.mubr.f32.mxu0 0.0
    %391 = vmatmul.mubr.f32.gmra.mrb[0].mxu0 %v154
    %v392 = vpop.f32.mrb[0].mxu0
    %v393 = vadd.f32 0.0, %v392
    %v394 = vpop.f32.mrb[0].mxu0
    %395 = vdwg.mxu0
    %396 = vst.msk [vmem:[#allocation2 + $0x1] sm:$0x1] %vm226, %v393
    %397 = vst.msk [vmem:[#allocation3 + $0x1] sm:$0x1] %vm226, %v319
    %s398 = scalar_lea.vmem %s0, 48
    %v399 = vld [vmem:[%s398] sm:$0xf]
    %v400 = vld [vmem:[%s398 + $0x4] sm:$0xf]
    %v401 = vld [vmem:[%s398 + $0x8] sm:$0xf]
    %v402 = vld [vmem:[%s398 + $0xc] sm:$0xf]
    %v403 = vunpack.c.l.bf16 %v399
    %v404 = vunpack.c.l.bf16 %v400
    %v405 = vunpack.c.l.bf16 %v401
    %v406 = vunpack.c.l.bf16 %v402
    %v407 = vmul.f32 %v31, %v403
    %v408 = vmul.f32 %v32, %v404
    %v409 = vmul.f32 %v33, %v405
    %v410 = vmul.f32 %v34, %v406
    %411 = vmatprep.subr.mxu0 0.0
    %412 = vmatpush1.msra.mxu0 %v407
    %413 = vmatprep.subr.mxu0 0.0
    %414 = vmatpush1.msra.mxu0 %v408
    %415 = vmatprep.subr.mxu0 0.0
    %416 = vmatpush1.msra.mxu0 %v409
    %417 = vmatprep.subr.mxu0 0.0
    %418 = vmatpush1.msra.mxu0 %v410
    %419 = vmatprep.subr.mxu0 0.0
    %420 = vmatpush1.msra.mxu0 0.0
    %421 = vmatprep.subr.mxu0 0.0
    %422 = vmatpush1.msra.mxu0 0.0
    %423 = vmatprep.subr.mxu0 0.0
    %424 = vmatpush1.msra.mxu0 0.0
    %425 = vmatprep.subr.mxu0 0.0
    %426 = vmatpush1.msra.mxu0 0.0
    %427 = vmatprep.subr.mxu0 0.0
    %428 = vmatpush1.msra.mxu0 0.0
    %429 = vmatprep.subr.mxu0 0.0
    %430 = vmatpush1.msra.mxu0 0.0
    %431 = vmatprep.subr.mxu0 0.0
    %432 = vmatpush1.msra.mxu0 0.0
    %433 = vmatprep.subr.mxu0 0.0
    %434 = vmatpush1.msra.mxu0 0.0
    %435 = vmatprep.subr.mxu0 0.0
    %436 = vmatpush1.msra.mxu0 0.0
    %437 = vmatprep.subr.mxu0 0.0
    %438 = vmatpush1.msra.mxu0 0.0
    %439 = vmatprep.subr.mxu0 0.0
    %440 = vmatpush1.msra.mxu0 0.0
    %441 = vmatprep.subr.mxu0 0.0
    %442 = vmatpush1.msra.mxu0 0.0
    %443 = vmatprep.subr.mxu0 0.0
    %444 = vmatpush1.msra.mxu0 0.0
    %445 = vmatprep.subr.mxu0 0.0
    %446 = vmatpush1.msra.mxu0 0.0
    %447 = vmatprep.subr.mxu0 0.0
    %448 = vmatpush1.msra.mxu0 0.0
    %449 = vmatprep.subr.mxu0 0.0
    %450 = vmatpush1.msra.mxu0 0.0
    %451 = vmatprep.subr.mxu0 0.0
    %452 = vmatpush1.msra.mxu0 0.0
    %453 = vmatprep.subr.mxu0 0.0
    %454 = vmatpush1.msra.mxu0 0.0
    %455 = vmatprep.subr.mxu0 0.0
    %456 = vmatpush1.msra.mxu0 0.0
    %457 = vmatprep.subr.mxu0 0.0
    %458 = vmatpush1.msra.mxu0 0.0
    %459 = vmatprep.subr.mxu0 0.0
    %460 = vmatpush1.msra.mxu0 0.0
    %461 = vmatprep.subr.mxu0 0.0
    %462 = vmatpush1.msra.mxu0 0.0
    %463 = vmatprep.subr.mxu0 0.0
    %464 = vmatpush1.msra.mxu0 0.0
    %465 = vmatprep.subr.mxu0 0.0
    %466 = vmatpush1.msra.mxu0 0.0
    %467 = vmatprep.subr.mxu0 0.0
    %468 = vmatpush1.msra.mxu0 0.0
    %469 = vmatprep.subr.mxu0 0.0
    %470 = vmatpush1.msra.mxu0 0.0
    %471 = vmatprep.subr.mxu0 0.0
    %472 = vmatpush1.msra.mxu0 0.0
    %473 = vmatprep.subr.mxu0 0.0
    %474 = vmatpush1.msra.mxu0 0.0
    %475 = vmatprep.mubr.f32.mxu0 0.0
    %476 = vmatmul.mubr.f32.gmra.mrb[0].mxu0 %v50
    %v477 = vpop.f32.mrb[0].mxu0
    %v478 = vadd.f32 0.0, %v477
    %v479 = vpop.f32.mrb[0].mxu0
    %480 = vmatprep.mubr.f32.mxu0 0.0
    %481 = vmatmul.mubr.f32.gmra.mrb[0].mxu0 %v53
    %v482 = vpop.f32.mrb[0].mxu0
    %v483 = vadd.f32 0.0, %v482
    %v484 = vpop.f32.mrb[0].mxu0
    %485 = vmatprep.mubr.f32.mxu0 0.0
    %486 = vmatmul.mubr.f32.gmra.mrb[0].mxu0 %v56
    %v487 = vpop.f32.mrb[0].mxu0
    %v488 = vadd.f32 0.0, %v487
    %v489 = vpop.f32.mrb[0].mxu0
    %490 = vdwg.mxu0
    %v491 = vadd.f32 %v478, %v141
    %v492 = vadd.f32 %v483, %v146
    %v493 = vmax.f32 %v491, 0.0
    %v494 = vmax.f32 %v492, 0.0
    %495 = vmatprep.subr.mxu0 0.0
    %496 = vmatpush1.msra.mxu0 %v493
    %497 = vmatprep.subr.mxu0 0.0
    %498 = vmatpush1.msra.mxu0 %v494
    %499 = vmatprep.subr.mxu0 0.0
    %500 = vmatpush1.msra.mxu0 0.0
    %501 = vmatprep.subr.mxu0 0.0
    %502 = vmatpush1.msra.mxu0 0.0
    %503 = vmatprep.subr.mxu0 0.0
    %504 = vmatpush1.msra.mxu0 0.0
    %505 = vmatprep.subr.mxu0 0.0
    %506 = vmatpush1.msra.mxu0 0.0
    %507 = vmatprep.subr.mxu0 0.0
    %508 = vmatpush1.msra.mxu0 0.0
    %509 = vmatprep.subr.mxu0 0.0
    %510 = vmatpush1.msra.mxu0 0.0
    %511 = vmatprep.subr.mxu0 0.0
    %512 = vmatpush1.msra.mxu0 0.0
    %513 = vmatprep.subr.mxu0 0.0
    %514 = vmatpush1.msra.mxu0 0.0
    %515 = vmatprep.subr.mxu0 0.0
    %516 = vmatpush1.msra.mxu0 0.0
    %517 = vmatprep.subr.mxu0 0.0
    %518 = vmatpush1.msra.mxu0 0.0
    %519 = vmatprep.subr.mxu0 0.0
    %520 = vmatpush1.msra.mxu0 0.0
    %521 = vmatprep.subr.mxu0 0.0
    %522 = vmatpush1.msra.mxu0 0.0
    %523 = vmatprep.subr.mxu0 0.0
    %524 = vmatpush1.msra.mxu0 0.0
    %525 = vmatprep.subr.mxu0 0.0
    %526 = vmatpush1.msra.mxu0 0.0
    %527 = vmatprep.subr.mxu0 0.0
    %528 = vmatpush1.msra.mxu0 0.0
    %529 = vmatprep.subr.mxu0 0.0
    %530 = vmatpush1.msra.mxu0 0.0
    %531 = vmatprep.subr.mxu0 0.0
    %532 = vmatpush1.msra.mxu0 0.0
    %533 = vmatprep.subr.mxu0 0.0
    %534 = vmatpush1.msra.mxu0 0.0
    %535 = vmatprep.subr.mxu0 0.0
    %536 = vmatpush1.msra.mxu0 0.0
    %537 = vmatprep.subr.mxu0 0.0
    %538 = vmatpush1.msra.mxu0 0.0
    %539 = vmatprep.subr.mxu0 0.0
    %540 = vmatpush1.msra.mxu0 0.0
    %541 = vmatprep.subr.mxu0 0.0
    %542 = vmatpush1.msra.mxu0 0.0
    %543 = vmatprep.subr.mxu0 0.0
    %544 = vmatpush1.msra.mxu0 0.0
    %545 = vmatprep.subr.mxu0 0.0
    %546 = vmatpush1.msra.mxu0 0.0
    %547 = vmatprep.subr.mxu0 0.0
    %548 = vmatpush1.msra.mxu0 0.0
    %549 = vmatprep.subr.mxu0 0.0
    %550 = vmatpush1.msra.mxu0 0.0
    %551 = vmatprep.subr.mxu0 0.0
    %552 = vmatpush1.msra.mxu0 0.0
    %553 = vmatprep.subr.mxu0 0.0
    %554 = vmatpush1.msra.mxu0 0.0
    %555 = vmatprep.subr.mxu0 0.0
    %556 = vmatpush1.msra.mxu0 0.0
    %557 = vmatprep.subr.mxu0 0.0
    %558 = vmatpush1.msra.mxu0 0.0
    %559 = vmatprep.mubr.f32.mxu0 0.0
    %560 = vmatmul.mubr.f32.gmra.mrb[0].mxu0 %v154
    %v561 = vpop.f32.mrb[0].mxu0
    %v562 = vadd.f32 0.0, %v561
    %v563 = vpop.f32.mrb[0].mxu0
    %564 = vdwg.mxu0
    %565 = vst.msk [vmem:[#allocation2 + $0x2] sm:$0x1] %vm226, %v562
    %566 = vst.msk [vmem:[#allocation3 + $0x2] sm:$0x1] %vm226, %v488
    %s567 = scalar_lea.vmem %s0, 64
    %v568 = vld [vmem:[%s567] sm:$0xf]
    %v569 = vld [vmem:[%s567 + $0x4] sm:$0xf]
    %v570 = vld [vmem:[%s567 + $0x8] sm:$0xf]
    %v571 = vld [vmem:[%s567 + $0xc] sm:$0xf]
    %v572 = vunpack.c.l.bf16 %v568
    %v573 = vunpack.c.l.bf16 %v569
    %v574 = vunpack.c.l.bf16 %v570
    %v575 = vunpack.c.l.bf16 %v571
    %v576 = vmul.f32 %v31, %v572
    %v577 = vmul.f32 %v32, %v573
    %v578 = vmul.f32 %v33, %v574
    %v579 = vmul.f32 %v34, %v575
    %580 = vmatprep.subr.mxu0 0.0
    %581 = vmatpush1.msra.mxu0 %v576
    %582 = vmatprep.subr.mxu0 0.0
    %583 = vmatpush1.msra.mxu0 %v577
    %584 = vmatprep.subr.mxu0 0.0
    %585 = vmatpush1.msra.mxu0 %v578
    %586 = vmatprep.subr.mxu0 0.0
    %587 = vmatpush1.msra.mxu0 %v579
    %588 = vmatprep.subr.mxu0 0.0
    %589 = vmatpush1.msra.mxu0 0.0
    %590 = vmatprep.subr.mxu0 0.0
    %591 = vmatpush1.msra.mxu0 0.0
    %592 = vmatprep.subr.mxu0 0.0
    %593 = vmatpush1.msra.mxu0 0.0
    %594 = vmatprep.subr.mxu0 0.0
    %595 = vmatpush1.msra.mxu0 0.0
    %596 = vmatprep.subr.mxu0 0.0
    %597 = vmatpush1.msra.mxu0 0.0
    %598 = vmatprep.subr.mxu0 0.0
    %599 = vmatpush1.msra.mxu0 0.0
    %600 = vmatprep.subr.mxu0 0.0
    %601 = vmatpush1.msra.mxu0 0.0
    %602 = vmatprep.subr.mxu0 0.0
    %603 = vmatpush1.msra.mxu0 0.0
    %604 = vmatprep.subr.mxu0 0.0
    %605 = vmatpush1.msra.mxu0 0.0
    %606 = vmatprep.subr.mxu0 0.0
    %607 = vmatpush1.msra.mxu0 0.0
    %608 = vmatprep.subr.mxu0 0.0
    %609 = vmatpush1.msra.mxu0 0.0
    %610 = vmatprep.subr.mxu0 0.0
    %611 = vmatpush1.msra.mxu0 0.0
    %612 = vmatprep.subr.mxu0 0.0
    %613 = vmatpush1.msra.mxu0 0.0
    %614 = vmatprep.subr.mxu0 0.0
    %615 = vmatpush1.msra.mxu0 0.0
    %616 = vmatprep.subr.mxu0 0.0
    %617 = vmatpush1.msra.mxu0 0.0
    %618 = vmatprep.subr.mxu0 0.0
    %619 = vmatpush1.msra.mxu0 0.0
    %620 = vmatprep.subr.mxu0 0.0
    %621 = vmatpush1.msra.mxu0 0.0
    %622 = vmatprep.subr.mxu0 0.0
    %623 = vmatpush1.msra.mxu0 0.0
    %624 = vmatprep.subr.mxu0 0.0
    %625 = vmatpush1.msra.mxu0 0.0
    %626 = vmatprep.subr.mxu0 0.0
    %627 = vmatpush1.msra.mxu0 0.0
    %628 = vmatprep.subr.mxu0 0.0
    %629 = vmatpush1.msra.mxu0 0.0
    %630 = vmatprep.subr.mxu0 0.0
    %631 = vmatpush1.msra.mxu0 0.0
    %632 = vmatprep.subr.mxu0 0.0
    %633 = vmatpush1.msra.mxu0 0.0
    %634 = vmatprep.subr.mxu0 0.0
    %635 = vmatpush1.msra.mxu0 0.0
    %636 = vmatprep.subr.mxu0 0.0
    %637 = vmatpush1.msra.mxu0 0.0
    %638 = vmatprep.subr.mxu0 0.0
    %639 = vmatpush1.msra.mxu0 0.0
    %640 = vmatprep.subr.mxu0 0.0
    %641 = vmatpush1.msra.mxu0 0.0
    %642 = vmatprep.subr.mxu0 0.0
    %643 = vmatpush1.msra.mxu0 0.0
    %644 = vmatprep.mubr.f32.mxu0 0.0
    %645 = vmatmul.mubr.f32.gmra.mrb[0].mxu0 %v50
    %v646 = vpop.f32.mrb[0].mxu0
    %v647 = vadd.f32 0.0, %v646
    %v648 = vpop.f32.mrb[0].mxu0
    %649 = vmatprep.mubr.f32.mxu0 0.0
    %650 = vmatmul.mubr.f32.gmra.mrb[0].mxu0 %v53
    %v651 = vpop.f32.mrb[0].mxu0
    %v652 = vadd.f32 0.0, %v651
    %v653 = vpop.f32.mrb[0].mxu0
    %654 = vmatprep.mubr.f32.mxu0 0.0
    %655 = vmatmul.mubr.f32.gmra.mrb[0].mxu0 %v56
    %v656 = vpop.f32.mrb[0].mxu0
    %v657 = vadd.f32 0.0, %v656
    %v658 = vpop.f32.mrb[0].mxu0
    %659 = vdwg.mxu0
    %v660 = vadd.f32 %v647, %v141
    %v661 = vadd.f32 %v652, %v146
    %v662 = vmax.f32 %v660, 0.0
    %v663 = vmax.f32 %v661, 0.0
    %664 = vmatprep.subr.mxu0 0.0
    %665 = vmatpush1.msra.mxu0 %v662
    %666 = vmatprep.subr.mxu0 0.0
    %667 = vmatpush1.msra.mxu0 %v663
    %668 = vmatprep.subr.mxu0 0.0
    %669 = vmatpush1.msra.mxu0 0.0
    %670 = vmatprep.subr.mxu0 0.0
    %671 = vmatpush1.msra.mxu0 0.0
    %672 = vmatprep.subr.mxu0 0.0
    %673 = vmatpush1.msra.mxu0 0.0
    %674 = vmatprep.subr.mxu0 0.0
    %675 = vmatpush1.msra.mxu0 0.0
    %676 = vmatprep.subr.mxu0 0.0
    %677 = vmatpush1.msra.mxu0 0.0
    %678 = vmatprep.subr.mxu0 0.0
    %679 = vmatpush1.msra.mxu0 0.0
    %680 = vmatprep.subr.mxu0 0.0
    %681 = vmatpush1.msra.mxu0 0.0
    %682 = vmatprep.subr.mxu0 0.0
    %683 = vmatpush1.msra.mxu0 0.0
    %684 = vmatprep.subr.mxu0 0.0
    %685 = vmatpush1.msra.mxu0 0.0
    %686 = vmatprep.subr.mxu0 0.0
    %687 = vmatpush1.msra.mxu0 0.0
    %688 = vmatprep.subr.mxu0 0.0
    %689 = vmatpush1.msra.mxu0 0.0
    %690 = vmatprep.subr.mxu0 0.0
    %691 = vmatpush1.msra.mxu0 0.0
    %692 = vmatprep.subr.mxu0 0.0
    %693 = vmatpush1.msra.mxu0 0.0
    %694 = vmatprep.subr.mxu0 0.0
    %695 = vmatpush1.msra.mxu0 0.0
    %696 = vmatprep.subr.mxu0 0.0
    %697 = vmatpush1.msra.mxu0 0.0
    %698 = vmatprep.subr.mxu0 0.0
    %699 = vmatpush1.msra.mxu0 0.0
    %700 = vmatprep.subr.mxu0 0.0
    %701 = vmatpush1.msra.mxu0 0.0
    %702 = vmatprep.subr.mxu0 0.0
    %703 = vmatpush1.msra.mxu0 0.0
    %704 = vmatprep.subr.mxu0 0.0
    %705 = vmatpush1.msra.mxu0 0.0
    %706 = vmatprep.subr.mxu0 0.0
    %707 = vmatpush1.msra.mxu0 0.0
    %708 = vmatprep.subr.mxu0 0.0
    %709 = vmatpush1.msra.mxu0 0.0
    %710 = vmatprep.subr.mxu0 0.0
    %711 = vmatpush1.msra.mxu0 0.0
    %712 = vmatprep.subr.mxu0 0.0
    %713 = vmatpush1.msra.mxu0 0.0
    %714 = vmatprep.subr.mxu0 0.0
    %715 = vmatpush1.msra.mxu0 0.0
    %716 = vmatprep.subr.mxu0 0.0
    %717 = vmatpush1.msra.mxu0 0.0
    %718 = vmatprep.subr.mxu0 0.0
    %719 = vmatpush1.msra.mxu0 0.0
    %720 = vmatprep.subr.mxu0 0.0
    %721 = vmatpush1.msra.mxu0 0.0
    %722 = vmatprep.subr.mxu0 0.0
    %723 = vmatpush1.msra.mxu0 0.0
    %724 = vmatprep.subr.mxu0 0.0
    %725 = vmatpush1.msra.mxu0 0.0
    %726 = vmatprep.subr.mxu0 0.0
    %727 = vmatpush1.msra.mxu0 0.0
    %728 = vmatprep.mubr.f32.mxu0 0.0
    %729 = vmatmul.mubr.f32.gmra.mrb[0].mxu0 %v154
    %v730 = vpop.f32.mrb[0].mxu0
    %v731 = vadd.f32 0.0, %v730
    %v732 = vpop.f32.mrb[0].mxu0
    %733 = vdwg.mxu0
    %734 = vst.msk [vmem:[#allocation2 + $0x3] sm:$0x1] %vm226, %v731
    %735 = vst.msk [vmem:[#allocation3 + $0x3] sm:$0x1] %vm226, %v657
    %s736 = scalar_lea.vmem %s0, 80
    %v737 = vld [vmem:[%s736] sm:$0xf]
    %v738 = vld [vmem:[%s736 + $0x4] sm:$0xf]
    %v739 = vld [vmem:[%s736 + $0x8] sm:$0xf]
    %v740 = vld [vmem:[%s736 + $0xc] sm:$0xf]
    %v741 = vunpack.c.l.bf16 %v737
    %v742 = vunpack.c.l.bf16 %v738
    %v743 = vunpack.c.l.bf16 %v739
    %v744 = vunpack.c.l.bf16 %v740
    %v745 = vmul.f32 %v31, %v741
    %v746 = vmul.f32 %v32, %v742
    %v747 = vmul.f32 %v33, %v743
    %v748 = vmul.f32 %v34, %v744
    %749 = vmatprep.subr.mxu0 0.0
    %750 = vmatpush1.msra.mxu0 %v745
    %751 = vmatprep.subr.mxu0 0.0
    %752 = vmatpush1.msra.mxu0 %v746
    %753 = vmatprep.subr.mxu0 0.0
    %754 = vmatpush1.msra.mxu0 %v747
    %755 = vmatprep.subr.mxu0 0.0
    %756 = vmatpush1.msra.mxu0 %v748
    %757 = vmatprep.subr.mxu0 0.0
    %758 = vmatpush1.msra.mxu0 0.0
    %759 = vmatprep.subr.mxu0 0.0
    %760 = vmatpush1.msra.mxu0 0.0
    %761 = vmatprep.subr.mxu0 0.0
    %762 = vmatpush1.msra.mxu0 0.0
    %763 = vmatprep.subr.mxu0 0.0
    %764 = vmatpush1.msra.mxu0 0.0
    %765 = vmatprep.subr.mxu0 0.0
    %766 = vmatpush1.msra.mxu0 0.0
    %767 = vmatprep.subr.mxu0 0.0
    %768 = vmatpush1.msra.mxu0 0.0
    %769 = vmatprep.subr.mxu0 0.0
    %770 = vmatpush1.msra.mxu0 0.0
    %771 = vmatprep.subr.mxu0 0.0
    %772 = vmatpush1.msra.mxu0 0.0
    %773 = vmatprep.subr.mxu0 0.0
    %774 = vmatpush1.msra.mxu0 0.0
    %775 = vmatprep.subr.mxu0 0.0
    %776 = vmatpush1.msra.mxu0 0.0
    %777 = vmatprep.subr.mxu0 0.0
    %778 = vmatpush1.msra.mxu0 0.0
    %779 = vmatprep.subr.mxu0 0.0
    %780 = vmatpush1.msra.mxu0 0.0
    %781 = vmatprep.subr.mxu0 0.0
    %782 = vmatpush1.msra.mxu0 0.0
    %783 = vmatprep.subr.mxu0 0.0
    %784 = vmatpush1.msra.mxu0 0.0
    %785 = vmatprep.subr.mxu0 0.0
    %786 = vmatpush1.msra.mxu0 0.0
    %787 = vmatprep.subr.mxu0 0.0
    %788 = vmatpush1.msra.mxu0 0.0
    %789 = vmatprep.subr.mxu0 0.0
    %790 = vmatpush1.msra.mxu0 0.0
    %791 = vmatprep.subr.mxu0 0.0
    %792 = vmatpush1.msra.mxu0 0.0
    %793 = vmatprep.subr.mxu0 0.0
    %794 = vmatpush1.msra.mxu0 0.0
    %795 = vmatprep.subr.mxu0 0.0
    %796 = vmatpush1.msra.mxu0 0.0
    %797 = vmatprep.subr.mxu0 0.0
    %798 = vmatpush1.msra.mxu0 0.0
    %799 = vmatprep.subr.mxu0 0.0
    %800 = vmatpush1.msra.mxu0 0.0
    %801 = vmatprep.subr.mxu0 0.0
    %802 = vmatpush1.msra.mxu0 0.0
    %803 = vmatprep.subr.mxu0 0.0
    %804 = vmatpush1.msra.mxu0 0.0
    %805 = vmatprep.subr.mxu0 0.0
    %806 = vmatpush1.msra.mxu0 0.0
    %807 = vmatprep.subr.mxu0 0.0
    %808 = vmatpush1.msra.mxu0 0.0
    %809 = vmatprep.subr.mxu0 0.0
    %810 = vmatpush1.msra.mxu0 0.0
    %811 = vmatprep.subr.mxu0 0.0
    %812 = vmatpush1.msra.mxu0 0.0
    %813 = vmatprep.mubr.f32.mxu0 0.0
    %814 = vmatmul.mubr.f32.gmra.mrb[0].mxu0 %v50
    %v815 = vpop.f32.mrb[0].mxu0
    %v816 = vadd.f32 0.0, %v815
    %v817 = vpop.f32.mrb[0].mxu0
    %818 = vmatprep.mubr.f32.mxu0 0.0
    %819 = vmatmul.mubr.f32.gmra.mrb[0].mxu0 %v53
    %v820 = vpop.f32.mrb[0].mxu0
    %v821 = vadd.f32 0.0, %v820
    %v822 = vpop.f32.mrb[0].mxu0
    %823 = vmatprep.mubr.f32.mxu0 0.0
    %824 = vmatmul.mubr.f32.gmra.mrb[0].mxu0 %v56
    %v825 = vpop.f32.mrb[0].mxu0
    %v826 = vadd.f32 0.0, %v825
    %v827 = vpop.f32.mrb[0].mxu0
    %828 = vdwg.mxu0
    %v829 = vadd.f32 %v816, %v141
    %v830 = vadd.f32 %v821, %v146
    %v831 = vmax.f32 %v829, 0.0
    %v832 = vmax.f32 %v830, 0.0
    %833 = vmatprep.subr.mxu0 0.0
    %834 = vmatpush1.msra.mxu0 %v831
    %835 = vmatprep.subr.mxu0 0.0
    %836 = vmatpush1.msra.mxu0 %v832
    %837 = vmatprep.subr.mxu0 0.0
    %838 = vmatpush1.msra.mxu0 0.0
    %839 = vmatprep.subr.mxu0 0.0
    %840 = vmatpush1.msra.mxu0 0.0
    %841 = vmatprep.subr.mxu0 0.0
    %842 = vmatpush1.msra.mxu0 0.0
    %843 = vmatprep.subr.mxu0 0.0
    %844 = vmatpush1.msra.mxu0 0.0
    %845 = vmatprep.subr.mxu0 0.0
    %846 = vmatpush1.msra.mxu0 0.0
    %847 = vmatprep.subr.mxu0 0.0
    %848 = vmatpush1.msra.mxu0 0.0
    %849 = vmatprep.subr.mxu0 0.0
    %850 = vmatpush1.msra.mxu0 0.0
    %851 = vmatprep.subr.mxu0 0.0
    %852 = vmatpush1.msra.mxu0 0.0
    %853 = vmatprep.subr.mxu0 0.0
    %854 = vmatpush1.msra.mxu0 0.0
    %855 = vmatprep.subr.mxu0 0.0
    %856 = vmatpush1.msra.mxu0 0.0
    %857 = vmatprep.subr.mxu0 0.0
    %858 = vmatpush1.msra.mxu0 0.0
    %859 = vmatprep.subr.mxu0 0.0
    %860 = vmatpush1.msra.mxu0 0.0
    %861 = vmatprep.subr.mxu0 0.0
    %862 = vmatpush1.msra.mxu0 0.0
    %863 = vmatprep.subr.mxu0 0.0
    %864 = vmatpush1.msra.mxu0 0.0
    %865 = vmatprep.subr.mxu0 0.0
    %866 = vmatpush1.msra.mxu0 0.0
    %867 = vmatprep.subr.mxu0 0.0
    %868 = vmatpush1.msra.mxu0 0.0
    %869 = vmatprep.subr.mxu0 0.0
    %870 = vmatpush1.msra.mxu0 0.0
    %871 = vmatprep.subr.mxu0 0.0
    %872 = vmatpush1.msra.mxu0 0.0
    %873 = vmatprep.subr.mxu0 0.0
    %874 = vmatpush1.msra.mxu0 0.0
    %875 = vmatprep.subr.mxu0 0.0
    %876 = vmatpush1.msra.mxu0 0.0
    %877 = vmatprep.subr.mxu0 0.0
    %878 = vmatpush1.msra.mxu0 0.0
    %879 = vmatprep.subr.mxu0 0.0
    %880 = vmatpush1.msra.mxu0 0.0
    %881 = vmatprep.subr.mxu0 0.0
    %882 = vmatpush1.msra.mxu0 0.0
    %883 = vmatprep.subr.mxu0 0.0
    %884 = vmatpush1.msra.mxu0 0.0
    %885 = vmatprep.subr.mxu0 0.0
    %886 = vmatpush1.msra.mxu0 0.0
    %887 = vmatprep.subr.mxu0 0.0
    %888 = vmatpush1.msra.mxu0 0.0
    %889 = vmatprep.subr.mxu0 0.0
    %890 = vmatpush1.msra.mxu0 0.0
    %891 = vmatprep.subr.mxu0 0.0
    %892 = vmatpush1.msra.mxu0 0.0
    %893 = vmatprep.subr.mxu0 0.0
    %894 = vmatpush1.msra.mxu0 0.0
    %895 = vmatprep.subr.mxu0 0.0
    %896 = vmatpush1.msra.mxu0 0.0
    %897 = vmatprep.mubr.f32.mxu0 0.0
    %898 = vmatmul.mubr.f32.gmra.mrb[0].mxu0 %v154
    %v899 = vpop.f32.mrb[0].mxu0
    %v900 = vadd.f32 0.0, %v899
    %v901 = vpop.f32.mrb[0].mxu0
    %902 = vdwg.mxu0
    %903 = vst.msk [vmem:[#allocation2 + $0x4] sm:$0x1] %vm226, %v900
    %904 = vst.msk [vmem:[#allocation3 + $0x4] sm:$0x1] %vm226, %v826
    %s905 = scalar_lea.vmem %s0, 96
    %v906 = vld [vmem:[%s905] sm:$0xf]
    %v907 = vld [vmem:[%s905 + $0x4] sm:$0xf]
    %v908 = vld [vmem:[%s905 + $0x8] sm:$0xf]
    %v909 = vld [vmem:[%s905 + $0xc] sm:$0xf]
    %v910 = vunpack.c.l.bf16 %v906
    %v911 = vunpack.c.l.bf16 %v907
    %v912 = vunpack.c.l.bf16 %v908
    %v913 = vunpack.c.l.bf16 %v909
    %v914 = vmul.f32 %v31, %v910
    %v915 = vmul.f32 %v32, %v911
    %v916 = vmul.f32 %v33, %v912
    %v917 = vmul.f32 %v34, %v913
    %918 = vmatprep.subr.mxu0 0.0
    %919 = vmatpush1.msra.mxu0 %v914
    %920 = vmatprep.subr.mxu0 0.0
    %921 = vmatpush1.msra.mxu0 %v915
    %922 = vmatprep.subr.mxu0 0.0
    %923 = vmatpush1.msra.mxu0 %v916
    %924 = vmatprep.subr.mxu0 0.0
    %925 = vmatpush1.msra.mxu0 %v917
    %926 = vmatprep.subr.mxu0 0.0
    %927 = vmatpush1.msra.mxu0 0.0
    %928 = vmatprep.subr.mxu0 0.0
    %929 = vmatpush1.msra.mxu0 0.0
    %930 = vmatprep.subr.mxu0 0.0
    %931 = vmatpush1.msra.mxu0 0.0
    %932 = vmatprep.subr.mxu0 0.0
    %933 = vmatpush1.msra.mxu0 0.0
    %934 = vmatprep.subr.mxu0 0.0
    %935 = vmatpush1.msra.mxu0 0.0
    %936 = vmatprep.subr.mxu0 0.0
    %937 = vmatpush1.msra.mxu0 0.0
    %938 = vmatprep.subr.mxu0 0.0
    %939 = vmatpush1.msra.mxu0 0.0
    %940 = vmatprep.subr.mxu0 0.0
    %941 = vmatpush1.msra.mxu0 0.0
    %942 = vmatprep.subr.mxu0 0.0
    %943 = vmatpush1.msra.mxu0 0.0
    %944 = vmatprep.subr.mxu0 0.0
    %945 = vmatpush1.msra.mxu0 0.0
    %946 = vmatprep.subr.mxu0 0.0
    %947 = vmatpush1.msra.mxu0 0.0
    %948 = vmatprep.subr.mxu0 0.0
    %949 = vmatpush1.msra.mxu0 0.0
    %950 = vmatprep.subr.mxu0 0.0
    %951 = vmatpush1.msra.mxu0 0.0
    %952 = vmatprep.subr.mxu0 0.0
    %953 = vmatpush1.msra.mxu0 0.0
    %954 = vmatprep.subr.mxu0 0.0
    %955 = vmatpush1.msra.mxu0 0.0
    %956 = vmatprep.subr.mxu0 0.0
    %957 = vmatpush1.msra.mxu0 0.0
    %958 = vmatprep.subr.mxu0 0.0
    %959 = vmatpush1.msra.mxu0 0.0
    %960 = vmatprep.subr.mxu0 0.0
    %961 = vmatpush1.msra.mxu0 0.0
    %962 = vmatprep.subr.mxu0 0.0
    %963 = vmatpush1.msra.mxu0 0.0
    %964 = vmatprep.subr.mxu0 0.0
    %965 = vmatpush1.msra.mxu0 0.0
    %966 = vmatprep.subr.mxu0 0.0
    %967 = vmatpush1.msra.mxu0 0.0
    %968 = vmatprep.subr.mxu0 0.0
    %969 = vmatpush1.msra.mxu0 0.0
    %970 = vmatprep.subr.mxu0 0.0
    %971 = vmatpush1.msra.mxu0 0.0
    %972 = vmatprep.subr.mxu0 0.0
    %973 = vmatpush1.msra.mxu0 0.0
    %974 = vmatprep.subr.mxu0 0.0
    %975 = vmatpush1.msra.mxu0 0.0
    %976 = vmatprep.subr.mxu0 0.0
    %977 = vmatpush1.msra.mxu0 0.0
    %978 = vmatprep.subr.mxu0 0.0
    %979 = vmatpush1.msra.mxu0 0.0
    %980 = vmatprep.subr.mxu0 0.0
    %981 = vmatpush1.msra.mxu0 0.0
    %982 = vmatprep.mubr.f32.mxu0 0.0
    %983 = vmatmul.mubr.f32.gmra.mrb[0].mxu0 %v50
    %v984 = vpop.f32.mrb[0].mxu0
    %v985 = vadd.f32 0.0, %v984
    %v986 = vpop.f32.mrb[0].mxu0
    %987 = vmatprep.mubr.f32.mxu0 0.0
    %988 = vmatmul.mubr.f32.gmra.mrb[0].mxu0 %v53
    %v989 = vpop.f32.mrb[0].mxu0
    %v990 = vadd.f32 0.0, %v989
    %v991 = vpop.f32.mrb[0].mxu0
    %992 = vmatprep.mubr.f32.mxu0 0.0
    %993 = vmatmul.mubr.f32.gmra.mrb[0].mxu0 %v56
    %v994 = vpop.f32.mrb[0].mxu0
    %v995 = vadd.f32 0.0, %v994
    %v996 = vpop.f32.mrb[0].mxu0
    %997 = vdwg.mxu0
    %v998 = vadd.f32 %v985, %v141
    %v999 = vadd.f32 %v990, %v146
    %v1000 = vmax.f32 %v998, 0.0
    %v1001 = vmax.f32 %v999, 0.0
    %1002 = vmatprep.subr.mxu0 0.0
    %1003 = vmatpush1.msra.mxu0 %v1000
    %1004 = vmatprep.subr.mxu0 0.0
    %1005 = vmatpush1.msra.mxu0 %v1001
    %1006 = vmatprep.subr.mxu0 0.0
    %1007 = vmatpush1.msra.mxu0 0.0
    %1008 = vmatprep.subr.mxu0 0.0
    %1009 = vmatpush1.msra.mxu0 0.0
    %1010 = vmatprep.subr.mxu0 0.0
    %1011 = vmatpush1.msra.mxu0 0.0
    %1012 = vmatprep.subr.mxu0 0.0
    %1013 = vmatpush1.msra.mxu0 0.0
    %1014 = vmatprep.subr.mxu0 0.0
    %1015 = vmatpush1.msra.mxu0 0.0
    %1016 = vmatprep.subr.mxu0 0.0
    %1017 = vmatpush1.msra.mxu0 0.0
    %1018 = vmatprep.subr.mxu0 0.0
    %1019 = vmatpush1.msra.mxu0 0.0
    %1020 = vmatprep.subr.mxu0 0.0
    %1021 = vmatpush1.msra.mxu0 0.0
    %1022 = vmatprep.subr.mxu0 0.0
    %1023 = vmatpush1.msra.mxu0 0.0
    %1024 = vmatprep.subr.mxu0 0.0
    %1025 = vmatpush1.msra.mxu0 0.0
    %1026 = vmatprep.subr.mxu0 0.0
    %1027 = vmatpush1.msra.mxu0 0.0
    %1028 = vmatprep.subr.mxu0 0.0
    %1029 = vmatpush1.msra.mxu0 0.0
    %1030 = vmatprep.subr.mxu0 0.0
    %1031 = vmatpush1.msra.mxu0 0.0
    %1032 = vmatprep.subr.mxu0 0.0
    %1033 = vmatpush1.msra.mxu0 0.0
    %1034 = vmatprep.subr.mxu0 0.0
    %1035 = vmatpush1.msra.mxu0 0.0
    %1036 = vmatprep.subr.mxu0 0.0
    %1037 = vmatpush1.msra.mxu0 0.0
    %1038 = vmatprep.subr.mxu0 0.0
    %1039 = vmatpush1.msra.mxu0 0.0
    %1040 = vmatprep.subr.mxu0 0.0
    %1041 = vmatpush1.msra.mxu0 0.0
    %1042 = vmatprep.subr.mxu0 0.0
    %1043 = vmatpush1.msra.mxu0 0.0
    %1044 = vmatprep.subr.mxu0 0.0
    %1045 = vmatpush1.msra.mxu0 0.0
    %1046 = vmatprep.subr.mxu0 0.0
    %1047 = vmatpush1.msra.mxu0 0.0
    %1048 = vmatprep.subr.mxu0 0.0
    %1049 = vmatpush1.msra.mxu0 0.0
    %1050 = vmatprep.subr.mxu0 0.0
    %1051 = vmatpush1.msra.mxu0 0.0
    %1052 = vmatprep.subr.mxu0 0.0
    %1053 = vmatpush1.msra.mxu0 0.0
    %1054 = vmatprep.subr.mxu0 0.0
    %1055 = vmatpush1.msra.mxu0 0.0
    %1056 = vmatprep.subr.mxu0 0.0
    %1057 = vmatpush1.msra.mxu0 0.0
    %1058 = vmatprep.subr.mxu0 0.0
    %1059 = vmatpush1.msra.mxu0 0.0
    %1060 = vmatprep.subr.mxu0 0.0
    %1061 = vmatpush1.msra.mxu0 0.0
    %1062 = vmatprep.subr.mxu0 0.0
    %1063 = vmatpush1.msra.mxu0 0.0
    %1064 = vmatprep.subr.mxu0 0.0
    %1065 = vmatpush1.msra.mxu0 0.0
    %1066 = vmatprep.mubr.f32.mxu0 0.0
    %1067 = vmatmul.mubr.f32.gmra.mrb[0].mxu0 %v154
    %v1068 = vpop.f32.mrb[0].mxu0
    %v1069 = vadd.f32 0.0, %v1068
    %v1070 = vpop.f32.mrb[0].mxu0
    %1071 = vdwg.mxu0
    %1072 = vst.msk [vmem:[#allocation2 + $0x5] sm:$0x1] %vm226, %v1069
    %1073 = vst.msk [vmem:[#allocation3 + $0x5] sm:$0x1] %vm226, %v995
    %s1074 = scalar_lea.vmem %s0, 112
    %v1075 = vld [vmem:[%s1074] sm:$0xf]
    %v1076 = vld [vmem:[%s1074 + $0x4] sm:$0xf]
    %v1077 = vld [vmem:[%s1074 + $0x8] sm:$0xf]
    %v1078 = vld [vmem:[%s1074 + $0xc] sm:$0xf]
    %v1079 = vunpack.c.l.bf16 %v1075
    %v1080 = vunpack.c.l.bf16 %v1076
    %v1081 = vunpack.c.l.bf16 %v1077
    %v1082 = vunpack.c.l.bf16 %v1078
    %v1083 = vmul.f32 %v31, %v1079
    %v1084 = vmul.f32 %v32, %v1080
    %v1085 = vmul.f32 %v33, %v1081
    %v1086 = vmul.f32 %v34, %v1082
    %1087 = vmatprep.subr.mxu0 0.0
    %1088 = vmatpush1.msra.mxu0 %v1083
    %1089 = vmatprep.subr.mxu0 0.0
    %1090 = vmatpush1.msra.mxu0 %v1084
    %1091 = vmatprep.subr.mxu0 0.0
    %1092 = vmatpush1.msra.mxu0 %v1085
    %1093 = vmatprep.subr.mxu0 0.0
    %1094 = vmatpush1.msra.mxu0 %v1086
    %1095 = vmatprep.subr.mxu0 0.0
    %1096 = vmatpush1.msra.mxu0 0.0
    %1097 = vmatprep.subr.mxu0 0.0
    %1098 = vmatpush1.msra.mxu0 0.0
    %1099 = vmatprep.subr.mxu0 0.0
    %1100 = vmatpush1.msra.mxu0 0.0
    %1101 = vmatprep.subr.mxu0 0.0
    %1102 = vmatpush1.msra.mxu0 0.0
    %1103 = vmatprep.subr.mxu0 0.0
    %1104 = vmatpush1.msra.mxu0 0.0
    %1105 = vmatprep.subr.mxu0 0.0
    %1106 = vmatpush1.msra.mxu0 0.0
    %1107 = vmatprep.subr.mxu0 0.0
    %1108 = vmatpush1.msra.mxu0 0.0
    %1109 = vmatprep.subr.mxu0 0.0
    %1110 = vmatpush1.msra.mxu0 0.0
    %1111 = vmatprep.subr.mxu0 0.0
    %1112 = vmatpush1.msra.mxu0 0.0
    %1113 = vmatprep.subr.mxu0 0.0
    %1114 = vmatpush1.msra.mxu0 0.0
    %1115 = vmatprep.subr.mxu0 0.0
    %1116 = vmatpush1.msra.mxu0 0.0
    %1117 = vmatprep.subr.mxu0 0.0
    %1118 = vmatpush1.msra.mxu0 0.0
    %1119 = vmatprep.subr.mxu0 0.0
    %1120 = vmatpush1.msra.mxu0 0.0
    %1121 = vmatprep.subr.mxu0 0.0
    %1122 = vmatpush1.msra.mxu0 0.0
    %1123 = vmatprep.subr.mxu0 0.0
    %1124 = vmatpush1.msra.mxu0 0.0
    %1125 = vmatprep.subr.mxu0 0.0
    %1126 = vmatpush1.msra.mxu0 0.0
    %1127 = vmatprep.subr.mxu0 0.0
    %1128 = vmatpush1.msra.mxu0 0.0
    %1129 = vmatprep.subr.mxu0 0.0
    %1130 = vmatpush1.msra.mxu0 0.0
    %1131 = vmatprep.subr.mxu0 0.0
    %1132 = vmatpush1.msra.mxu0 0.0
    %1133 = vmatprep.subr.mxu0 0.0
    %1134 = vmatpush1.msra.mxu0 0.0
    %1135 = vmatprep.subr.mxu0 0.0
    %1136 = vmatpush1.msra.mxu0 0.0
    %1137 = vmatprep.subr.mxu0 0.0
    %1138 = vmatpush1.msra.mxu0 0.0
    %1139 = vmatprep.subr.mxu0 0.0
    %1140 = vmatpush1.msra.mxu0 0.0
    %1141 = vmatprep.subr.mxu0 0.0
    %1142 = vmatpush1.msra.mxu0 0.0
    %1143 = vmatprep.subr.mxu0 0.0
    %1144 = vmatpush1.msra.mxu0 0.0
    %1145 = vmatprep.subr.mxu0 0.0
    %1146 = vmatpush1.msra.mxu0 0.0
    %1147 = vmatprep.subr.mxu0 0.0
    %1148 = vmatpush1.msra.mxu0 0.0
    %1149 = vmatprep.subr.mxu0 0.0
    %1150 = vmatpush1.msra.mxu0 0.0
    %1151 = vmatprep.mubr.f32.mxu0 0.0
    %1152 = vmatmul.mubr.f32.gmra.mrb[0].mxu0 %v50
    %v1153 = vpop.f32.mrb[0].mxu0
    %v1154 = vadd.f32 0.0, %v1153
    %v1155 = vpop.f32.mrb[0].mxu0
    %1156 = vmatprep.mubr.f32.mxu0 0.0
    %1157 = vmatmul.mubr.f32.gmra.mrb[0].mxu0 %v53
    %v1158 = vpop.f32.mrb[0].mxu0
    %v1159 = vadd.f32 0.0, %v1158
    %v1160 = vpop.f32.mrb[0].mxu0
    %1161 = vmatprep.mubr.f32.mxu0 0.0
    %1162 = vmatmul.mubr.f32.gmra.mrb[0].mxu0 %v56
    %v1163 = vpop.f32.mrb[0].mxu0
    %v1164 = vadd.f32 0.0, %v1163
    %v1165 = vpop.f32.mrb[0].mxu0
    %1166 = vdwg.mxu0
    %v1167 = vadd.f32 %v1154, %v141
    %v1168 = vadd.f32 %v1159, %v146
    %v1169 = vmax.f32 %v1167, 0.0
    %v1170 = vmax.f32 %v1168, 0.0
    %1171 = vmatprep.subr.mxu0 0.0
    %1172 = vmatpush1.msra.mxu0 %v1169
    %1173 = vmatprep.subr.mxu0 0.0
    %1174 = vmatpush1.msra.mxu0 %v1170
    %1175 = vmatprep.subr.mxu0 0.0
    %1176 = vmatpush1.msra.mxu0 0.0
    %1177 = vmatprep.subr.mxu0 0.0
    %1178 = vmatpush1.msra.mxu0 0.0
    %1179 = vmatprep.subr.mxu0 0.0
    %1180 = vmatpush1.msra.mxu0 0.0
    %1181 = vmatprep.subr.mxu0 0.0
    %1182 = vmatpush1.msra.mxu0 0.0
    %1183 = vmatprep.subr.mxu0 0.0
    %1184 = vmatpush1.msra.mxu0 0.0
    %1185 = vmatprep.subr.mxu0 0.0
    %1186 = vmatpush1.msra.mxu0 0.0
    %1187 = vmatprep.subr.mxu0 0.0
    %1188 = vmatpush1.msra.mxu0 0.0
    %1189 = vmatprep.subr.mxu0 0.0
    %1190 = vmatpush1.msra.mxu0 0.0
    %1191 = vmatprep.subr.mxu0 0.0
    %1192 = vmatpush1.msra.mxu0 0.0
    %1193 = vmatprep.subr.mxu0 0.0
    %1194 = vmatpush1.msra.mxu0 0.0
    %1195 = vmatprep.subr.mxu0 0.0
    %1196 = vmatpush1.msra.mxu0 0.0
    %1197 = vmatprep.subr.mxu0 0.0
    %1198 = vmatpush1.msra.mxu0 0.0
    %1199 = vmatprep.subr.mxu0 0.0
    %1200 = vmatpush1.msra.mxu0 0.0
    %1201 = vmatprep.subr.mxu0 0.0
    %1202 = vmatpush1.msra.mxu0 0.0
    %1203 = vmatprep.subr.mxu0 0.0
    %1204 = vmatpush1.msra.mxu0 0.0
    %1205 = vmatprep.subr.mxu0 0.0
    %1206 = vmatpush1.msra.mxu0 0.0
    %1207 = vmatprep.subr.mxu0 0.0
    %1208 = vmatpush1.msra.mxu0 0.0
    %1209 = vmatprep.subr.mxu0 0.0
    %1210 = vmatpush1.msra.mxu0 0.0
    %1211 = vmatprep.subr.mxu0 0.0
    %1212 = vmatpush1.msra.mxu0 0.0
    %1213 = vmatprep.subr.mxu0 0.0
    %1214 = vmatpush1.msra.mxu0 0.0
    %1215 = vmatprep.subr.mxu0 0.0
    %1216 = vmatpush1.msra.mxu0 0.0
    %1217 = vmatprep.subr.mxu0 0.0
    %1218 = vmatpush1.msra.mxu0 0.0
    %1219 = vmatprep.subr.mxu0 0.0
    %1220 = vmatpush1.msra.mxu0 0.0
    %1221 = vmatprep.subr.mxu0 0.0
    %1222 = vmatpush1.msra.mxu0 0.0
    %1223 = vmatprep.subr.mxu0 0.0
    %1224 = vmatpush1.msra.mxu0 0.0
    %1225 = vmatprep.subr.mxu0 0.0
    %1226 = vmatpush1.msra.mxu0 0.0
    %1227 = vmatprep.subr.mxu0 0.0
    %1228 = vmatpush1.msra.mxu0 0.0
    %1229 = vmatprep.subr.mxu0 0.0
    %1230 = vmatpush1.msra.mxu0 0.0
    %1231 = vmatprep.subr.mxu0 0.0
    %1232 = vmatpush1.msra.mxu0 0.0
    %1233 = vmatprep.subr.mxu0 0.0
    %1234 = vmatpush1.msra.mxu0 0.0
    %1235 = vmatprep.mubr.f32.mxu0 0.0
    %1236 = vmatmul.mubr.f32.gmra.mrb[0].mxu0 %v154
    %v1237 = vpop.f32.mrb[0].mxu0
    %v1238 = vadd.f32 0.0, %v1237
    %v1239 = vpop.f32.mrb[0].mxu0
    %1240 = vdwg.mxu0
    %1241 = vst.msk [vmem:[#allocation2 + $0x6] sm:$0x1] %vm226, %v1238
    %1242 = vst.msk [vmem:[#allocation3 + $0x6] sm:$0x1] %vm226, %v1164
    %v1243 = vld [vmem:[%s35] sm:$0xf]
    %v1244 = vld [vmem:[%s35 + $0x4] sm:$0xf]
    %v1245 = vld [vmem:[%s35 + $0x8] sm:$0xf]
    %v1246 = vld [vmem:[%s35 + $0xc] sm:$0xf]
    %v1247 = vunpack.c.l.bf16 %v1243
    %v1248 = vunpack.c.l.bf16 %v1244
    %v1249 = vunpack.c.l.bf16 %v1245
    %v1250 = vunpack.c.l.bf16 %v1246
    %v1251 = vld [vmem:[%s229] sm:$0xf]
    %v1252 = vld [vmem:[%s229 + $0x4] sm:$0xf]
    %v1253 = vld [vmem:[%s229 + $0x8] sm:$0xf]
    %v1254 = vld [vmem:[%s229 + $0xc] sm:$0xf]
    %v1255 = vunpack.c.l.bf16 %v1251
    %v1256 = vunpack.c.l.bf16 %v1252
    %v1257 = vunpack.c.l.bf16 %v1253
    %v1258 = vunpack.c.l.bf16 %v1254
    %v1259 = vmul.f32 %v1247, %v1255
    %v1260 = vmul.f32 %v1248, %v1256
    %v1261 = vmul.f32 %v1249, %v1257
    %v1262 = vmul.f32 %v1250, %v1258
    %1263 = vmatprep.subr.mxu0 0.0
    %1264 = vmatpush1.msra.mxu0 %v1259
    %1265 = vmatprep.subr.mxu0 0.0
    %1266 = vmatpush1.msra.mxu0 %v1260
    %1267 = vmatprep.subr.mxu0 0.0
    %1268 = vmatpush1.msra.mxu0 %v1261
    %1269 = vmatprep.subr.mxu0 0.0
    %1270 = vmatpush1.msra.mxu0 %v1262
    %1271 = vmatprep.subr.mxu0 0.0
    %1272 = vmatpush1.msra.mxu0 0.0
    %1273 = vmatprep.subr.mxu0 0.0
    %1274 = vmatpush1.msra.mxu0 0.0
    %1275 = vmatprep.subr.mxu0 0.0
    %1276 = vmatpush1.msra.mxu0 0.0
    %1277 = vmatprep.subr.mxu0 0.0
    %1278 = vmatpush1.msra.mxu0 0.0
    %1279 = vmatprep.subr.mxu0 0.0
    %1280 = vmatpush1.msra.mxu0 0.0
    %1281 = vmatprep.subr.mxu0 0.0
    %1282 = vmatpush1.msra.mxu0 0.0
    %1283 = vmatprep.subr.mxu0 0.0
    %1284 = vmatpush1.msra.mxu0 0.0
    %1285 = vmatprep.subr.mxu0 0.0
    %1286 = vmatpush1.msra.mxu0 0.0
    %1287 = vmatprep.subr.mxu0 0.0
    %1288 = vmatpush1.msra.mxu0 0.0
    %1289 = vmatprep.subr.mxu0 0.0
    %1290 = vmatpush1.msra.mxu0 0.0
    %1291 = vmatprep.subr.mxu0 0.0
    %1292 = vmatpush1.msra.mxu0 0.0
    %1293 = vmatprep.subr.mxu0 0.0
    %1294 = vmatpush1.msra.mxu0 0.0
    %1295 = vmatprep.subr.mxu0 0.0
    %1296 = vmatpush1.msra.mxu0 0.0
    %1297 = vmatprep.subr.mxu0 0.0
    %1298 = vmatpush1.msra.mxu0 0.0
    %1299 = vmatprep.subr.mxu0 0.0
    %1300 = vmatpush1.msra.mxu0 0.0
    %1301 = vmatprep.subr.mxu0 0.0
    %1302 = vmatpush1.msra.mxu0 0.0
    %1303 = vmatprep.subr.mxu0 0.0
    %1304 = vmatpush1.msra.mxu0 0.0
    %1305 = vmatprep.subr.mxu0 0.0
    %1306 = vmatpush1.msra.mxu0 0.0
    %1307 = vmatprep.subr.mxu0 0.0
    %1308 = vmatpush1.msra.mxu0 0.0
    %1309 = vmatprep.subr.mxu0 0.0
    %1310 = vmatpush1.msra.mxu0 0.0
    %1311 = vmatprep.subr.mxu0 0.0
    %1312 = vmatpush1.msra.mxu0 0.0
    %1313 = vmatprep.subr.mxu0 0.0
    %1314 = vmatpush1.msra.mxu0 0.0
    %1315 = vmatprep.subr.mxu0 0.0
    %1316 = vmatpush1.msra.mxu0 0.0
    %1317 = vmatprep.subr.mxu0 0.0
    %1318 = vmatpush1.msra.mxu0 0.0
    %1319 = vmatprep.subr.mxu0 0.0
    %1320 = vmatpush1.msra.mxu0 0.0
    %1321 = vmatprep.subr.mxu0 0.0
    %1322 = vmatpush1.msra.mxu0 0.0
    %1323 = vmatprep.subr.mxu0 0.0
    %1324 = vmatpush1.msra.mxu0 0.0
    %1325 = vmatprep.subr.mxu0 0.0
    %1326 = vmatpush1.msra.mxu0 0.0
    %1327 = vmatprep.mubr.f32.mxu0 0.0
    %1328 = vmatmul.mubr.f32.gmra.mrb[0].mxu0 %v50
    %v1329 = vpop.f32.mrb[0].mxu0
    %v1330 = vadd.f32 0.0, %v1329
    %v1331 = vpop.f32.mrb[0].mxu0
    %1332 = vmatprep.mubr.f32.mxu0 0.0
    %1333 = vmatmul.mubr.f32.gmra.mrb[0].mxu0 %v53
    %v1334 = vpop.f32.mrb[0].mxu0
    %v1335 = vadd.f32 0.0, %v1334
    %v1336 = vpop.f32.mrb[0].mxu0
    %1337 = vmatprep.mubr.f32.mxu0 0.0
    %1338 = vmatmul.mubr.f32.gmra.mrb[0].mxu0 %v56
    %v1339 = vpop.f32.mrb[0].mxu0
    %v1340 = vadd.f32 0.0, %v1339
    %v1341 = vpop.f32.mrb[0].mxu0
    %1342 = vdwg.mxu0
    %v1343 = vadd.f32 %v1330, %v141
    %v1344 = vadd.f32 %v1335, %v146
    %v1345 = vmax.f32 %v1343, 0.0
    %v1346 = vmax.f32 %v1344, 0.0
    %1347 = vmatprep.subr.mxu0 0.0
    %1348 = vmatpush1.msra.mxu0 %v1345
    %1349 = vmatprep.subr.mxu0 0.0
    %1350 = vmatpush1.msra.mxu0 %v1346
    %1351 = vmatprep.subr.mxu0 0.0
    %1352 = vmatpush1.msra.mxu0 0.0
    %1353 = vmatprep.subr.mxu0 0.0
    %1354 = vmatpush1.msra.mxu0 0.0
    %1355 = vmatprep.subr.mxu0 0.0
    %1356 = vmatpush1.msra.mxu0 0.0
    %1357 = vmatprep.subr.mxu0 0.0
    %1358 = vmatpush1.msra.mxu0 0.0
    %1359 = vmatprep.subr.mxu0 0.0
    %1360 = vmatpush1.msra.mxu0 0.0
    %1361 = vmatprep.subr.mxu0 0.0
    %1362 = vmatpush1.msra.mxu0 0.0
    %1363 = vmatprep.subr.mxu0 0.0
    %1364 = vmatpush1.msra.mxu0 0.0
    %1365 = vmatprep.subr.mxu0 0.0
    %1366 = vmatpush1.msra.mxu0 0.0
    %1367 = vmatprep.subr.mxu0 0.0
    %1368 = vmatpush1.msra.mxu0 0.0
    %1369 = vmatprep.subr.mxu0 0.0
    %1370 = vmatpush1.msra.mxu0 0.0
    %1371 = vmatprep.subr.mxu0 0.0
    %1372 = vmatpush1.msra.mxu0 0.0
    %1373 = vmatprep.subr.mxu0 0.0
    %1374 = vmatpush1.msra.mxu0 0.0
    %1375 = vmatprep.subr.mxu0 0.0
    %1376 = vmatpush1.msra.mxu0 0.0
    %1377 = vmatprep.subr.mxu0 0.0
    %1378 = vmatpush1.msra.mxu0 0.0
    %1379 = vmatprep.subr.mxu0 0.0
    %1380 = vmatpush1.msra.mxu0 0.0
    %1381 = vmatprep.subr.mxu0 0.0
    %1382 = vmatpush1.msra.mxu0 0.0
    %1383 = vmatprep.subr.mxu0 0.0
    %1384 = vmatpush1.msra.mxu0 0.0
    %1385 = vmatprep.subr.mxu0 0.0
    %1386 = vmatpush1.msra.mxu0 0.0
    %1387 = vmatprep.subr.mxu0 0.0
    %1388 = vmatpush1.msra.mxu0 0.0
    %1389 = vmatprep.subr.mxu0 0.0
    %1390 = vmatpush1.msra.mxu0 0.0
    %1391 = vmatprep.subr.mxu0 0.0
    %1392 = vmatpush1.msra.mxu0 0.0
    %1393 = vmatprep.subr.mxu0 0.0
    %1394 = vmatpush1.msra.mxu0 0.0
    %1395 = vmatprep.subr.mxu0 0.0
    %1396 = vmatpush1.msra.mxu0 0.0
    %1397 = vmatprep.subr.mxu0 0.0
    %1398 = vmatpush1.msra.mxu0 0.0
    %1399 = vmatprep.subr.mxu0 0.0
    %1400 = vmatpush1.msra.mxu0 0.0
    %1401 = vmatprep.subr.mxu0 0.0
    %1402 = vmatpush1.msra.mxu0 0.0
    %1403 = vmatprep.subr.mxu0 0.0
    %1404 = vmatpush1.msra.mxu0 0.0
    %1405 = vmatprep.subr.mxu0 0.0
    %1406 = vmatpush1.msra.mxu0 0.0
    %1407 = vmatprep.subr.mxu0 0.0
    %1408 = vmatpush1.msra.mxu0 0.0
    %1409 = vmatprep.subr.mxu0 0.0
    %1410 = vmatpush1.msra.mxu0 0.0
    %1411 = vmatprep.mubr.f32.mxu0 0.0
    %1412 = vmatmul.mubr.f32.gmra.mrb[0].mxu0 %v154
    %v1413 = vpop.f32.mrb[0].mxu0
    %v1414 = vadd.f32 0.0, %v1413
    %v1415 = vpop.f32.mrb[0].mxu0
    %1416 = vdwg.mxu0
    %1417 = vst.msk [vmem:[#allocation2 + $0x7] sm:$0x1] %vm226, %v1414
    %1418 = vst.msk [vmem:[#allocation3 + $0x7] sm:$0x1] %vm226, %v1340
    %v1419 = vld [vmem:[%s398] sm:$0xf]
    %v1420 = vld [vmem:[%s398 + $0x4] sm:$0xf]
    %v1421 = vld [vmem:[%s398 + $0x8] sm:$0xf]
    %v1422 = vld [vmem:[%s398 + $0xc] sm:$0xf]
    %v1423 = vunpack.c.l.bf16 %v1419
    %v1424 = vunpack.c.l.bf16 %v1420
    %v1425 = vunpack.c.l.bf16 %v1421
    %v1426 = vunpack.c.l.bf16 %v1422
    %v1427 = vmul.f32 %v1247, %v1423
    %v1428 = vmul.f32 %v1248, %v1424
    %v1429 = vmul.f32 %v1249, %v1425
    %v1430 = vmul.f32 %v1250, %v1426
    %1431 = vmatprep.subr.mxu0 0.0
    %1432 = vmatpush1.msra.mxu0 %v1427
    %1433 = vmatprep.subr.mxu0 0.0
    %1434 = vmatpush1.msra.mxu0 %v1428
    %1435 = vmatprep.subr.mxu0 0.0
    %1436 = vmatpush1.msra.mxu0 %v1429
    %1437 = vmatprep.subr.mxu0 0.0
    %1438 = vmatpush1.msra.mxu0 %v1430
    %1439 = vmatprep.subr.mxu0 0.0
    %1440 = vmatpush1.msra.mxu0 0.0
    %1441 = vmatprep.subr.mxu0 0.0
    %1442 = vmatpush1.msra.mxu0 0.0
    %1443 = vmatprep.subr.mxu0 0.0
    %1444 = vmatpush1.msra.mxu0 0.0
    %1445 = vmatprep.subr.mxu0 0.0
    %1446 = vmatpush1.msra.mxu0 0.0
    %1447 = vmatprep.subr.mxu0 0.0
    %1448 = vmatpush1.msra.mxu0 0.0
    %1449 = vmatprep.subr.mxu0 0.0
    %1450 = vmatpush1.msra.mxu0 0.0
    %1451 = vmatprep.subr.mxu0 0.0
    %1452 = vmatpush1.msra.mxu0 0.0
    %1453 = vmatprep.subr.mxu0 0.0
    %1454 = vmatpush1.msra.mxu0 0.0
    %1455 = vmatprep.subr.mxu0 0.0
    %1456 = vmatpush1.msra.mxu0 0.0
    %1457 = vmatprep.subr.mxu0 0.0
    %1458 = vmatpush1.msra.mxu0 0.0
    %1459 = vmatprep.subr.mxu0 0.0
    %1460 = vmatpush1.msra.mxu0 0.0
    %1461 = vmatprep.subr.mxu0 0.0
    %1462 = vmatpush1.msra.mxu0 0.0
    %1463 = vmatprep.subr.mxu0 0.0
    %1464 = vmatpush1.msra.mxu0 0.0
    %1465 = vmatprep.subr.mxu0 0.0
    %1466 = vmatpush1.msra.mxu0 0.0
    %1467 = vmatprep.subr.mxu0 0.0
    %1468 = vmatpush1.msra.mxu0 0.0
    %1469 = vmatprep.subr.mxu0 0.0
    %1470 = vmatpush1.msra.mxu0 0.0
    %1471 = vmatprep.subr.mxu0 0.0
    %1472 = vmatpush1.msra.mxu0 0.0
    %1473 = vmatprep.subr.mxu0 0.0
    %1474 = vmatpush1.msra.mxu0 0.0
    %1475 = vmatprep.subr.mxu0 0.0
    %1476 = vmatpush1.msra.mxu0 0.0
    %1477 = vmatprep.subr.mxu0 0.0
    %1478 = vmatpush1.msra.mxu0 0.0
    %1479 = vmatprep.subr.mxu0 0.0
    %1480 = vmatpush1.msra.mxu0 0.0
    %1481 = vmatprep.subr.mxu0 0.0
    %1482 = vmatpush1.msra.mxu0 0.0
    %1483 = vmatprep.subr.mxu0 0.0
    %1484 = vmatpush1.msra.mxu0 0.0
    %1485 = vmatprep.subr.mxu0 0.0
    %1486 = vmatpush1.msra.mxu0 0.0
    %1487 = vmatprep.subr.mxu0 0.0
    %1488 = vmatpush1.msra.mxu0 0.0
    %1489 = vmatprep.subr.mxu0 0.0
    %1490 = vmatpush1.msra.mxu0 0.0
    %1491 = vmatprep.subr.mxu0 0.0
    %1492 = vmatpush1.msra.mxu0 0.0
    %1493 = vmatprep.subr.mxu0 0.0
    %1494 = vmatpush1.msra.mxu0 0.0
    %1495 = vmatprep.mubr.f32.mxu0 0.0
    %1496 = vmatmul.mubr.f32.gmra.mrb[0].mxu0 %v50
    %v1497 = vpop.f32.mrb[0].mxu0
    %v1498 = vadd.f32 0.0, %v1497
    %v1499 = vpop.f32.mrb[0].mxu0
    %1500 = vmatprep.mubr.f32.mxu0 0.0
    %1501 = vmatmul.mubr.f32.gmra.mrb[0].mxu0 %v53
    %v1502 = vpop.f32.mrb[0].mxu0
    %v1503 = vadd.f32 0.0, %v1502
    %v1504 = vpop.f32.mrb[0].mxu0
    %1505 = vmatprep.mubr.f32.mxu0 0.0
    %1506 = vmatmul.mubr.f32.gmra.mrb[0].mxu0 %v56
    %v1507 = vpop.f32.mrb[0].mxu0
    %v1508 = vadd.f32 0.0, %v1507
    %v1509 = vpop.f32.mrb[0].mxu0
    %1510 = vdwg.mxu0
    %v1511 = vadd.f32 %v1498, %v141
    %v1512 = vadd.f32 %v1503, %v146
    %v1513 = vmax.f32 %v1511, 0.0
    %v1514 = vmax.f32 %v1512, 0.0
    %1515 = vmatprep.subr.mxu0 0.0
    %1516 = vmatpush1.msra.mxu0 %v1513
    %1517 = vmatprep.subr.mxu0 0.0
    %1518 = vmatpush1.msra.mxu0 %v1514
    %1519 = vmatprep.subr.mxu0 0.0
    %1520 = vmatpush1.msra.mxu0 0.0
    %1521 = vmatprep.subr.mxu0 0.0
    %1522 = vmatpush1.msra.mxu0 0.0
    %1523 = vmatprep.subr.mxu0 0.0
    %1524 = vmatpush1.msra.mxu0 0.0
    %1525 = vmatprep.subr.mxu0 0.0
    %1526 = vmatpush1.msra.mxu0 0.0
    %1527 = vmatprep.subr.mxu0 0.0
    %1528 = vmatpush1.msra.mxu0 0.0
    %1529 = vmatprep.subr.mxu0 0.0
    %1530 = vmatpush1.msra.mxu0 0.0
    %1531 = vmatprep.subr.mxu0 0.0
    %1532 = vmatpush1.msra.mxu0 0.0
    %1533 = vmatprep.subr.mxu0 0.0
    %1534 = vmatpush1.msra.mxu0 0.0
    %1535 = vmatprep.subr.mxu0 0.0
    %1536 = vmatpush1.msra.mxu0 0.0
    %1537 = vmatprep.subr.mxu0 0.0
    %1538 = vmatpush1.msra.mxu0 0.0
    %1539 = vmatprep.subr.mxu0 0.0
    %1540 = vmatpush1.msra.mxu0 0.0
    %1541 = vmatprep.subr.mxu0 0.0
    %1542 = vmatpush1.msra.mxu0 0.0
    %1543 = vmatprep.subr.mxu0 0.0
    %1544 = vmatpush1.msra.mxu0 0.0
    %1545 = vmatprep.subr.mxu0 0.0
    %1546 = vmatpush1.msra.mxu0 0.0
    %1547 = vmatprep.subr.mxu0 0.0
    %1548 = vmatpush1.msra.mxu0 0.0
    %1549 = vmatprep.subr.mxu0 0.0
    %1550 = vmatpush1.msra.mxu0 0.0
    %1551 = vmatprep.subr.mxu0 0.0
    %1552 = vmatpush1.msra.mxu0 0.0
    %1553 = vmatprep.subr.mxu0 0.0
    %1554 = vmatpush1.msra.mxu0 0.0
    %1555 = vmatprep.subr.mxu0 0.0
    %1556 = vmatpush1.msra.mxu0 0.0
    %1557 = vmatprep.subr.mxu0 0.0
    %1558 = vmatpush1.msra.mxu0 0.0
    %1559 = vmatprep.subr.mxu0 0.0
    %1560 = vmatpush1.msra.mxu0 0.0
    %1561 = vmatprep.subr.mxu0 0.0
    %1562 = vmatpush1.msra.mxu0 0.0
    %1563 = vmatprep.subr.mxu0 0.0
    %1564 = vmatpush1.msra.mxu0 0.0
    %1565 = vmatprep.subr.mxu0 0.0
    %1566 = vmatpush1.msra.mxu0 0.0
    %1567 = vmatprep.subr.mxu0 0.0
    %1568 = vmatpush1.msra.mxu0 0.0
    %1569 = vmatprep.subr.mxu0 0.0
    %1570 = vmatpush1.msra.mxu0 0.0
    %1571 = vmatprep.subr.mxu0 0.0
    %1572 = vmatpush1.msra.mxu0 0.0
    %1573 = vmatprep.subr.mxu0 0.0
    %1574 = vmatpush1.msra.mxu0 0.0
    %1575 = vmatprep.subr.mxu0 0.0
    %1576 = vmatpush1.msra.mxu0 0.0
    %1577 = vmatprep.subr.mxu0 0.0
    %1578 = vmatpush1.msra.mxu0 0.0
    %1579 = vmatprep.mubr.f32.mxu0 0.0
    %1580 = vmatmul.mubr.f32.gmra.mrb[0].mxu0 %v154
    %v1581 = vpop.f32.mrb[0].mxu0
    %v1582 = vadd.f32 0.0, %v1581
    %v1583 = vpop.f32.mrb[0].mxu0
    %1584 = vdwg.mxu0
    %1585 = vst.msk [vmem:[#allocation2 + $0x8] sm:$0x1] %vm226, %v1582
    %1586 = vst.msk [vmem:[#allocation3 + $0x8] sm:$0x1] %vm226, %v1508
    %v1587 = vld [vmem:[%s567] sm:$0xf]
    %v1588 = vld [vmem:[%s567 + $0x4] sm:$0xf]
    %v1589 = vld [vmem:[%s567 + $0x8] sm:$0xf]
    %v1590 = vld [vmem:[%s567 + $0xc] sm:$0xf]
    %v1591 = vunpack.c.l.bf16 %v1587
    %v1592 = vunpack.c.l.bf16 %v1588
    %v1593 = vunpack.c.l.bf16 %v1589
    %v1594 = vunpack.c.l.bf16 %v1590
    %v1595 = vmul.f32 %v1247, %v1591
    %v1596 = vmul.f32 %v1248, %v1592
    %v1597 = vmul.f32 %v1249, %v1593
    %v1598 = vmul.f32 %v1250, %v1594
    %1599 = vmatprep.subr.mxu0 0.0
    %1600 = vmatpush1.msra.mxu0 %v1595
    %1601 = vmatprep.subr.mxu0 0.0
    %1602 = vmatpush1.msra.mxu0 %v1596
    %1603 = vmatprep.subr.mxu0 0.0
    %1604 = vmatpush1.msra.mxu0 %v1597
    %1605 = vmatprep.subr.mxu0 0.0
    %1606 = vmatpush1.msra.mxu0 %v1598
    %1607 = vmatprep.subr.mxu0 0.0
    %1608 = vmatpush1.msra.mxu0 0.0
    %1609 = vmatprep.subr.mxu0 0.0
    %1610 = vmatpush1.msra.mxu0 0.0
    %1611 = vmatprep.subr.mxu0 0.0
    %1612 = vmatpush1.msra.mxu0 0.0
    %1613 = vmatprep.subr.mxu0 0.0
    %1614 = vmatpush1.msra.mxu0 0.0
    %1615 = vmatprep.subr.mxu0 0.0
    %1616 = vmatpush1.msra.mxu0 0.0
    %1617 = vmatprep.subr.mxu0 0.0
    %1618 = vmatpush1.msra.mxu0 0.0
    %1619 = vmatprep.subr.mxu0 0.0
    %1620 = vmatpush1.msra.mxu0 0.0
    %1621 = vmatprep.subr.mxu0 0.0
    %1622 = vmatpush1.msra.mxu0 0.0
    %1623 = vmatprep.subr.mxu0 0.0
    %1624 = vmatpush1.msra.mxu0 0.0
    %1625 = vmatprep.subr.mxu0 0.0
    %1626 = vmatpush1.msra.mxu0 0.0
    %1627 = vmatprep.subr.mxu0 0.0
    %1628 = vmatpush1.msra.mxu0 0.0
    %1629 = vmatprep.subr.mxu0 0.0
    %1630 = vmatpush1.msra.mxu0 0.0
    %1631 = vmatprep.subr.mxu0 0.0
    %1632 = vmatpush1.msra.mxu0 0.0
    %1633 = vmatprep.subr.mxu0 0.0
    %1634 = vmatpush1.msra.mxu0 0.0
    %1635 = vmatprep.subr.mxu0 0.0
    %1636 = vmatpush1.msra.mxu0 0.0
    %1637 = vmatprep.subr.mxu0 0.0
    %1638 = vmatpush1.msra.mxu0 0.0
    %1639 = vmatprep.subr.mxu0 0.0
    %1640 = vmatpush1.msra.mxu0 0.0
    %1641 = vmatprep.subr.mxu0 0.0
    %1642 = vmatpush1.msra.mxu0 0.0
    %1643 = vmatprep.subr.mxu0 0.0
    %1644 = vmatpush1.msra.mxu0 0.0
    %1645 = vmatprep.subr.mxu0 0.0
    %1646 = vmatpush1.msra.mxu0 0.0
    %1647 = vmatprep.subr.mxu0 0.0
    %1648 = vmatpush1.msra.mxu0 0.0
    %1649 = vmatprep.subr.mxu0 0.0
    %1650 = vmatpush1.msra.mxu0 0.0
    %1651 = vmatprep.subr.mxu0 0.0
    %1652 = vmatpush1.msra.mxu0 0.0
    %1653 = vmatprep.subr.mxu0 0.0
    %1654 = vmatpush1.msra.mxu0 0.0
    %1655 = vmatprep.subr.mxu0 0.0
    %1656 = vmatpush1.msra.mxu0 0.0
    %1657 = vmatprep.subr.mxu0 0.0
    %1658 = vmatpush1.msra.mxu0 0.0
    %1659 = vmatprep.subr.mxu0 0.0
    %1660 = vmatpush1.msra.mxu0 0.0
    %1661 = vmatprep.subr.mxu0 0.0
    %1662 = vmatpush1.msra.mxu0 0.0
    %1663 = vmatprep.mubr.f32.mxu0 0.0
    %1664 = vmatmul.mubr.f32.gmra.mrb[0].mxu0 %v50
    %v1665 = vpop.f32.mrb[0].mxu0
    %v1666 = vadd.f32 0.0, %v1665
    %v1667 = vpop.f32.mrb[0].mxu0
    %1668 = vmatprep.mubr.f32.mxu0 0.0
    %1669 = vmatmul.mubr.f32.gmra.mrb[0].mxu0 %v53
    %v1670 = vpop.f32.mrb[0].mxu0
    %v1671 = vadd.f32 0.0, %v1670
    %v1672 = vpop.f32.mrb[0].mxu0
    %1673 = vmatprep.mubr.f32.mxu0 0.0
    %1674 = vmatmul.mubr.f32.gmra.mrb[0].mxu0 %v56
    %v1675 = vpop.f32.mrb[0].mxu0
    %v1676 = vadd.f32 0.0, %v1675
    %v1677 = vpop.f32.mrb[0].mxu0
    %1678 = vdwg.mxu0
    %v1679 = vadd.f32 %v1666, %v141
    %v1680 = vadd.f32 %v1671, %v146
    %v1681 = vmax.f32 %v1679, 0.0
    %v1682 = vmax.f32 %v1680, 0.0
    %1683 = vmatprep.subr.mxu0 0.0
    %1684 = vmatpush1.msra.mxu0 %v1681
    %1685 = vmatprep.subr.mxu0 0.0
    %1686 = vmatpush1.msra.mxu0 %v1682
    %1687 = vmatprep.subr.mxu0 0.0
    %1688 = vmatpush1.msra.mxu0 0.0
    %1689 = vmatprep.subr.mxu0 0.0
    %1690 = vmatpush1.msra.mxu0 0.0
    %1691 = vmatprep.subr.mxu0 0.0
    %1692 = vmatpush1.msra.mxu0 0.0
    %1693 = vmatprep.subr.mxu0 0.0
    %1694 = vmatpush1.msra.mxu0 0.0
    %1695 = vmatprep.subr.mxu0 0.0
    %1696 = vmatpush1.msra.mxu0 0.0
    %1697 = vmatprep.subr.mxu0 0.0
    %1698 = vmatpush1.msra.mxu0 0.0
    %1699 = vmatprep.subr.mxu0 0.0
    %1700 = vmatpush1.msra.mxu0 0.0
    %1701 = vmatprep.subr.mxu0 0.0
    %1702 = vmatpush1.msra.mxu0 0.0
    %1703 = vmatprep.subr.mxu0 0.0
    %1704 = vmatpush1.msra.mxu0 0.0
    %1705 = vmatprep.subr.mxu0 0.0
    %1706 = vmatpush1.msra.mxu0 0.0
    %1707 = vmatprep.subr.mxu0 0.0
    %1708 = vmatpush1.msra.mxu0 0.0
    %1709 = vmatprep.subr.mxu0 0.0
    %1710 = vmatpush1.msra.mxu0 0.0
    %1711 = vmatprep.subr.mxu0 0.0
    %1712 = vmatpush1.msra.mxu0 0.0
    %1713 = vmatprep.subr.mxu0 0.0
    %1714 = vmatpush1.msra.mxu0 0.0
    %1715 = vmatprep.subr.mxu0 0.0
    %1716 = vmatpush1.msra.mxu0 0.0
    %1717 = vmatprep.subr.mxu0 0.0
    %1718 = vmatpush1.msra.mxu0 0.0
    %1719 = vmatprep.subr.mxu0 0.0
    %1720 = vmatpush1.msra.mxu0 0.0
    %1721 = vmatprep.subr.mxu0 0.0
    %1722 = vmatpush1.msra.mxu0 0.0
    %1723 = vmatprep.subr.mxu0 0.0
    %1724 = vmatpush1.msra.mxu0 0.0
    %1725 = vmatprep.subr.mxu0 0.0
    %1726 = vmatpush1.msra.mxu0 0.0
    %1727 = vmatprep.subr.mxu0 0.0
    %1728 = vmatpush1.msra.mxu0 0.0
    %1729 = vmatprep.subr.mxu0 0.0
    %1730 = vmatpush1.msra.mxu0 0.0
    %1731 = vmatprep.subr.mxu0 0.0
    %1732 = vmatpush1.msra.mxu0 0.0
    %1733 = vmatprep.subr.mxu0 0.0
    %1734 = vmatpush1.msra.mxu0 0.0
    %1735 = vmatprep.subr.mxu0 0.0
    %1736 = vmatpush1.msra.mxu0 0.0
    %1737 = vmatprep.subr.mxu0 0.0
    %1738 = vmatpush1.msra.mxu0 0.0
    %1739 = vmatprep.subr.mxu0 0.0
    %1740 = vmatpush1.msra.mxu0 0.0
    %1741 = vmatprep.subr.mxu0 0.0
    %1742 = vmatpush1.msra.mxu0 0.0
    %1743 = vmatprep.subr.mxu0 0.0
    %1744 = vmatpush1.msra.mxu0 0.0
    %1745 = vmatprep.subr.mxu0 0.0
    %1746 = vmatpush1.msra.mxu0 0.0
    %1747 = vmatprep.mubr.f32.mxu0 0.0
    %1748 = vmatmul.mubr.f32.gmra.mrb[0].mxu0 %v154
    %v1749 = vpop.f32.mrb[0].mxu0
    %v1750 = vadd.f32 0.0, %v1749
    %v1751 = vpop.f32.mrb[0].mxu0
    %1752 = vdwg.mxu0
    %1753 = vst.msk [vmem:[#allocation2 + $0x9] sm:$0x1] %vm226, %v1750
    %1754 = vst.msk [vmem:[#allocation3 + $0x9] sm:$0x1] %vm226, %v1676
    %v1755 = vld [vmem:[%s736] sm:$0xf]
    %v1756 = vld [vmem:[%s736 + $0x4] sm:$0xf]
    %v1757 = vld [vmem:[%s736 + $0x8] sm:$0xf]
    %v1758 = vld [vmem:[%s736 + $0xc] sm:$0xf]
    %v1759 = vunpack.c.l.bf16 %v1755
    %v1760 = vunpack.c.l.bf16 %v1756
    %v1761 = vunpack.c.l.bf16 %v1757
    %v1762 = vunpack.c.l.bf16 %v1758
    %v1763 = vmul.f32 %v1247, %v1759
    %v1764 = vmul.f32 %v1248, %v1760
    %v1765 = vmul.f32 %v1249, %v1761
    %v1766 = vmul.f32 %v1250, %v1762
    %1767 = vmatprep.subr.mxu0 0.0
    %1768 = vmatpush1.msra.mxu0 %v1763
    %1769 = vmatprep.subr.mxu0 0.0
    %1770 = vmatpush1.msra.mxu0 %v1764
    %1771 = vmatprep.subr.mxu0 0.0
    %1772 = vmatpush1.msra.mxu0 %v1765
    %1773 = vmatprep.subr.mxu0 0.0
    %1774 = vmatpush1.msra.mxu0 %v1766
    %1775 = vmatprep.subr.mxu0 0.0
    %1776 = vmatpush1.msra.mxu0 0.0
    %1777 = vmatprep.subr.mxu0 0.0
    %1778 = vmatpush1.msra.mxu0 0.0
    %1779 = vmatprep.subr.mxu0 0.0
    %1780 = vmatpush1.msra.mxu0 0.0
    %1781 = vmatprep.subr.mxu0 0.0
    %1782 = vmatpush1.msra.mxu0 0.0
    %1783 = vmatprep.subr.mxu0 0.0
    %1784 = vmatpush1.msra.mxu0 0.0
    %1785 = vmatprep.subr.mxu0 0.0
    %1786 = vmatpush1.msra.mxu0 0.0
    %1787 = vmatprep.subr.mxu0 0.0
    %1788 = vmatpush1.msra.mxu0 0.0
    %1789 = vmatprep.subr.mxu0 0.0
    %1790 = vmatpush1.msra.mxu0 0.0
    %1791 = vmatprep.subr.mxu0 0.0
    %1792 = vmatpush1.msra.mxu0 0.0
    %1793 = vmatprep.subr.mxu0 0.0
    %1794 = vmatpush1.msra.mxu0 0.0
    %1795 = vmatprep.subr.mxu0 0.0
    %1796 = vmatpush1.msra.mxu0 0.0
    %1797 = vmatprep.subr.mxu0 0.0
    %1798 = vmatpush1.msra.mxu0 0.0
    %1799 = vmatprep.subr.mxu0 0.0
    %1800 = vmatpush1.msra.mxu0 0.0
    %1801 = vmatprep.subr.mxu0 0.0
    %1802 = vmatpush1.msra.mxu0 0.0
    %1803 = vmatprep.subr.mxu0 0.0
    %1804 = vmatpush1.msra.mxu0 0.0
    %1805 = vmatprep.subr.mxu0 0.0
    %1806 = vmatpush1.msra.mxu0 0.0
    %1807 = vmatprep.subr.mxu0 0.0
    %1808 = vmatpush1.msra.mxu0 0.0
    %1809 = vmatprep.subr.mxu0 0.0
    %1810 = vmatpush1.msra.mxu0 0.0
    %1811 = vmatprep.subr.mxu0 0.0
    %1812 = vmatpush1.msra.mxu0 0.0
    %1813 = vmatprep.subr.mxu0 0.0
    %1814 = vmatpush1.msra.mxu0 0.0
    %1815 = vmatprep.subr.mxu0 0.0
    %1816 = vmatpush1.msra.mxu0 0.0
    %1817 = vmatprep.subr.mxu0 0.0
    %1818 = vmatpush1.msra.mxu0 0.0
    %1819 = vmatprep.subr.mxu0 0.0
    %1820 = vmatpush1.msra.mxu0 0.0
    %1821 = vmatprep.subr.mxu0 0.0
    %1822 = vmatpush1.msra.mxu0 0.0
    %1823 = vmatprep.subr.mxu0 0.0
    %1824 = vmatpush1.msra.mxu0 0.0
    %1825 = vmatprep.subr.mxu0 0.0
    %1826 = vmatpush1.msra.mxu0 0.0
    %1827 = vmatprep.subr.mxu0 0.0
    %1828 = vmatpush1.msra.mxu0 0.0
    %1829 = vmatprep.subr.mxu0 0.0
    %1830 = vmatpush1.msra.mxu0 0.0
    %1831 = vmatprep.mubr.f32.mxu0 0.0
    %1832 = vmatmul.mubr.f32.gmra.mrb[0].mxu0 %v50
    %v1833 = vpop.f32.mrb[0].mxu0
    %v1834 = vadd.f32 0.0, %v1833
    %v1835 = vpop.f32.mrb[0].mxu0
    %1836 = vmatprep.mubr.f32.mxu0 0.0
    %1837 = vmatmul.mubr.f32.gmra.mrb[0].mxu0 %v53
    %v1838 = vpop.f32.mrb[0].mxu0
    %v1839 = vadd.f32 0.0, %v1838
    %v1840 = vpop.f32.mrb[0].mxu0
    %1841 = vmatprep.mubr.f32.mxu0 0.0
    %1842 = vmatmul.mubr.f32.gmra.mrb[0].mxu0 %v56
    %v1843 = vpop.f32.mrb[0].mxu0
    %v1844 = vadd.f32 0.0, %v1843
    %v1845 = vpop.f32.mrb[0].mxu0
    %1846 = vdwg.mxu0
    %v1847 = vadd.f32 %v1834, %v141
    %v1848 = vadd.f32 %v1839, %v146
    %v1849 = vmax.f32 %v1847, 0.0
    %v1850 = vmax.f32 %v1848, 0.0
    %1851 = vmatprep.subr.mxu0 0.0
    %1852 = vmatpush1.msra.mxu0 %v1849
    %1853 = vmatprep.subr.mxu0 0.0
    %1854 = vmatpush1.msra.mxu0 %v1850
    %1855 = vmatprep.subr.mxu0 0.0
    %1856 = vmatpush1.msra.mxu0 0.0
    %1857 = vmatprep.subr.mxu0 0.0
    %1858 = vmatpush1.msra.mxu0 0.0
    %1859 = vmatprep.subr.mxu0 0.0
    %1860 = vmatpush1.msra.mxu0 0.0
    %1861 = vmatprep.subr.mxu0 0.0
    %1862 = vmatpush1.msra.mxu0 0.0
    %1863 = vmatprep.subr.mxu0 0.0
    %1864 = vmatpush1.msra.mxu0 0.0
    %1865 = vmatprep.subr.mxu0 0.0
    %1866 = vmatpush1.msra.mxu0 0.0
    %1867 = vmatprep.subr.mxu0 0.0
    %1868 = vmatpush1.msra.mxu0 0.0
    %1869 = vmatprep.subr.mxu0 0.0
    %1870 = vmatpush1.msra.mxu0 0.0
    %1871 = vmatprep.subr.mxu0 0.0
    %1872 = vmatpush1.msra.mxu0 0.0
    %1873 = vmatprep.subr.mxu0 0.0
    %1874 = vmatpush1.msra.mxu0 0.0
    %1875 = vmatprep.subr.mxu0 0.0
    %1876 = vmatpush1.msra.mxu0 0.0
    %1877 = vmatprep.subr.mxu0 0.0
    %1878 = vmatpush1.msra.mxu0 0.0
    %1879 = vmatprep.subr.mxu0 0.0
    %1880 = vmatpush1.msra.mxu0 0.0
    %1881 = vmatprep.subr.mxu0 0.0
    %1882 = vmatpush1.msra.mxu0 0.0
    %1883 = vmatprep.subr.mxu0 0.0
    %1884 = vmatpush1.msra.mxu0 0.0
    %1885 = vmatprep.subr.mxu0 0.0
    %1886 = vmatpush1.msra.mxu0 0.0
    %1887 = vmatprep.subr.mxu0 0.0
    %1888 = vmatpush1.msra.mxu0 0.0
    %1889 = vmatprep.subr.mxu0 0.0
    %1890 = vmatpush1.msra.mxu0 0.0
    %1891 = vmatprep.subr.mxu0 0.0
    %1892 = vmatpush1.msra.mxu0 0.0
    %1893 = vmatprep.subr.mxu0 0.0
    %1894 = vmatpush1.msra.mxu0 0.0
    %1895 = vmatprep.subr.mxu0 0.0
    %1896 = vmatpush1.msra.mxu0 0.0
    %1897 = vmatprep.subr.mxu0 0.0
    %1898 = vmatpush1.msra.mxu0 0.0
    %1899 = vmatprep.subr.mxu0 0.0
    %1900 = vmatpush1.msra.mxu0 0.0
    %1901 = vmatprep.subr.mxu0 0.0
    %1902 = vmatpush1.msra.mxu0 0.0
    %1903 = vmatprep.subr.mxu0 0.0
    %1904 = vmatpush1.msra.mxu0 0.0
    %1905 = vmatprep.subr.mxu0 0.0
    %1906 = vmatpush1.msra.mxu0 0.0
    %1907 = vmatprep.subr.mxu0 0.0
    %1908 = vmatpush1.msra.mxu0 0.0
    %1909 = vmatprep.subr.mxu0 0.0
    %1910 = vmatpush1.msra.mxu0 0.0
    %1911 = vmatprep.subr.mxu0 0.0
    %1912 = vmatpush1.msra.mxu0 0.0
    %1913 = vmatprep.subr.mxu0 0.0
    %1914 = vmatpush1.msra.mxu0 0.0
    %1915 = vmatprep.mubr.f32.mxu0 0.0
    %1916 = vmatmul.mubr.f32.gmra.mrb[0].mxu0 %v154
    %v1917 = vpop.f32.mrb[0].mxu0
    %v1918 = vadd.f32 0.0, %v1917
    %v1919 = vpop.f32.mrb[0].mxu0
    %1920 = vdwg.mxu0
    %1921 = vst.msk [vmem:[#allocation2 + $0xa] sm:$0x1] %vm226, %v1918
    %1922 = vst.msk [vmem:[#allocation3 + $0xa] sm:$0x1] %vm226, %v1844
    %v1923 = vld [vmem:[%s905] sm:$0xf]
    %v1924 = vld [vmem:[%s905 + $0x4] sm:$0xf]
    %v1925 = vld [vmem:[%s905 + $0x8] sm:$0xf]
    %v1926 = vld [vmem:[%s905 + $0xc] sm:$0xf]
    %v1927 = vunpack.c.l.bf16 %v1923
    %v1928 = vunpack.c.l.bf16 %v1924
    %v1929 = vunpack.c.l.bf16 %v1925
    %v1930 = vunpack.c.l.bf16 %v1926
    %v1931 = vmul.f32 %v1247, %v1927
    %v1932 = vmul.f32 %v1248, %v1928
    %v1933 = vmul.f32 %v1249, %v1929
    %v1934 = vmul.f32 %v1250, %v1930
    %1935 = vmatprep.subr.mxu0 0.0
    %1936 = vmatpush1.msra.mxu0 %v1931
    %1937 = vmatprep.subr.mxu0 0.0
    %1938 = vmatpush1.msra.mxu0 %v1932
    %1939 = vmatprep.subr.mxu0 0.0
    %1940 = vmatpush1.msra.mxu0 %v1933
    %1941 = vmatprep.subr.mxu0 0.0
    %1942 = vmatpush1.msra.mxu0 %v1934
    %1943 = vmatprep.subr.mxu0 0.0
    %1944 = vmatpush1.msra.mxu0 0.0
    %1945 = vmatprep.subr.mxu0 0.0
    %1946 = vmatpush1.msra.mxu0 0.0
    %1947 = vmatprep.subr.mxu0 0.0
    %1948 = vmatpush1.msra.mxu0 0.0
    %1949 = vmatprep.subr.mxu0 0.0
    %1950 = vmatpush1.msra.mxu0 0.0
    %1951 = vmatprep.subr.mxu0 0.0
    %1952 = vmatpush1.msra.mxu0 0.0
    %1953 = vmatprep.subr.mxu0 0.0
    %1954 = vmatpush1.msra.mxu0 0.0
    %1955 = vmatprep.subr.mxu0 0.0
    %1956 = vmatpush1.msra.mxu0 0.0
    %1957 = vmatprep.subr.mxu0 0.0
    %1958 = vmatpush1.msra.mxu0 0.0
    %1959 = vmatprep.subr.mxu0 0.0
    %1960 = vmatpush1.msra.mxu0 0.0
    %1961 = vmatprep.subr.mxu0 0.0
    %1962 = vmatpush1.msra.mxu0 0.0
    %1963 = vmatprep.subr.mxu0 0.0
    %1964 = vmatpush1.msra.mxu0 0.0
    %1965 = vmatprep.subr.mxu0 0.0
    %1966 = vmatpush1.msra.mxu0 0.0
    %1967 = vmatprep.subr.mxu0 0.0
    %1968 = vmatpush1.msra.mxu0 0.0
    %1969 = vmatprep.subr.mxu0 0.0
    %1970 = vmatpush1.msra.mxu0 0.0
    %1971 = vmatprep.subr.mxu0 0.0
    %1972 = vmatpush1.msra.mxu0 0.0
    %1973 = vmatprep.subr.mxu0 0.0
    %1974 = vmatpush1.msra.mxu0 0.0
    %1975 = vmatprep.subr.mxu0 0.0
    %1976 = vmatpush1.msra.mxu0 0.0
    %1977 = vmatprep.subr.mxu0 0.0
    %1978 = vmatpush1.msra.mxu0 0.0
    %1979 = vmatprep.subr.mxu0 0.0
    %1980 = vmatpush1.msra.mxu0 0.0
    %1981 = vmatprep.subr.mxu0 0.0
    %1982 = vmatpush1.msra.mxu0 0.0
    %1983 = vmatprep.subr.mxu0 0.0
    %1984 = vmatpush1.msra.mxu0 0.0
    %1985 = vmatprep.subr.mxu0 0.0
    %1986 = vmatpush1.msra.mxu0 0.0
    %1987 = vmatprep.subr.mxu0 0.0
    %1988 = vmatpush1.msra.mxu0 0.0
    %1989 = vmatprep.subr.mxu0 0.0
    %1990 = vmatpush1.msra.mxu0 0.0
    %1991 = vmatprep.subr.mxu0 0.0
    %1992 = vmatpush1.msra.mxu0 0.0
    %1993 = vmatprep.subr.mxu0 0.0
    %1994 = vmatpush1.msra.mxu0 0.0
    %1995 = vmatprep.subr.mxu0 0.0
    %1996 = vmatpush1.msra.mxu0 0.0
    %1997 = vmatprep.subr.mxu0 0.0
    %1998 = vmatpush1.msra.mxu0 0.0
    %1999 = vmatprep.mubr.f32.mxu0 0.0
    %2000 = vmatmul.mubr.f32.gmra.mrb[0].mxu0 %v50
    %v2001 = vpop.f32.mrb[0].mxu0
    %v2002 = vadd.f32 0.0, %v2001
    %v2003 = vpop.f32.mrb[0].mxu0
    %2004 = vmatprep.mubr.f32.mxu0 0.0
    %2005 = vmatmul.mubr.f32.gmra.mrb[0].mxu0 %v53
    %v2006 = vpop.f32.mrb[0].mxu0
    %v2007 = vadd.f32 0.0, %v2006
    %v2008 = vpop.f32.mrb[0].mxu0
    %2009 = vmatprep.mubr.f32.mxu0 0.0
    %2010 = vmatmul.mubr.f32.gmra.mrb[0].mxu0 %v56
    %v2011 = vpop.f32.mrb[0].mxu0
    %v2012 = vadd.f32 0.0, %v2011
    %v2013 = vpop.f32.mrb[0].mxu0
    %2014 = vdwg.mxu0
    %v2015 = vadd.f32 %v2002, %v141
    %v2016 = vadd.f32 %v2007, %v146
    %v2017 = vmax.f32 %v2015, 0.0
    %v2018 = vmax.f32 %v2016, 0.0
    %2019 = vmatprep.subr.mxu0 0.0
    %2020 = vmatpush1.msra.mxu0 %v2017
    %2021 = vmatprep.subr.mxu0 0.0
    %2022 = vmatpush1.msra.mxu0 %v2018
    %2023 = vmatprep.subr.mxu0 0.0
    %2024 = vmatpush1.msra.mxu0 0.0
    %2025 = vmatprep.subr.mxu0 0.0
    %2026 = vmatpush1.msra.mxu0 0.0
    %2027 = vmatprep.subr.mxu0 0.0
    %2028 = vmatpush1.msra.mxu0 0.0
    %2029 = vmatprep.subr.mxu0 0.0
    %2030 = vmatpush1.msra.mxu0 0.0
    %2031 = vmatprep.subr.mxu0 0.0
    %2032 = vmatpush1.msra.mxu0 0.0
    %2033 = vmatprep.subr.mxu0 0.0
    %2034 = vmatpush1.msra.mxu0 0.0
    %2035 = vmatprep.subr.mxu0 0.0
    %2036 = vmatpush1.msra.mxu0 0.0
    %2037 = vmatprep.subr.mxu0 0.0
    %2038 = vmatpush1.msra.mxu0 0.0
    %2039 = vmatprep.subr.mxu0 0.0
    %2040 = vmatpush1.msra.mxu0 0.0
    %2041 = vmatprep.subr.mxu0 0.0
    %2042 = vmatpush1.msra.mxu0 0.0
    %2043 = vmatprep.subr.mxu0 0.0
    %2044 = vmatpush1.msra.mxu0 0.0
    %2045 = vmatprep.subr.mxu0 0.0
    %2046 = vmatpush1.msra.mxu0 0.0
    %2047 = vmatprep.subr.mxu0 0.0
    %2048 = vmatpush1.msra.mxu0 0.0
    %2049 = vmatprep.subr.mxu0 0.0
    %2050 = vmatpush1.msra.mxu0 0.0
    %2051 = vmatprep.subr.mxu0 0.0
    %2052 = vmatpush1.msra.mxu0 0.0
    %2053 = vmatprep.subr.mxu0 0.0
    %2054 = vmatpush1.msra.mxu0 0.0
    %2055 = vmatprep.subr.mxu0 0.0
    %2056 = vmatpush1.msra.mxu0 0.0
    %2057 = vmatprep.subr.mxu0 0.0
    %2058 = vmatpush1.msra.mxu0 0.0
    %2059 = vmatprep.subr.mxu0 0.0
    %2060 = vmatpush1.msra.mxu0 0.0
    %2061 = vmatprep.subr.mxu0 0.0
    %2062 = vmatpush1.msra.mxu0 0.0
    %2063 = vmatprep.subr.mxu0 0.0
    %2064 = vmatpush1.msra.mxu0 0.0
    %2065 = vmatprep.subr.mxu0 0.0
    %2066 = vmatpush1.msra.mxu0 0.0
    %2067 = vmatprep.subr.mxu0 0.0
    %2068 = vmatpush1.msra.mxu0 0.0
    %2069 = vmatprep.subr.mxu0 0.0
    %2070 = vmatpush1.msra.mxu0 0.0
    %2071 = vmatprep.subr.mxu0 0.0
    %2072 = vmatpush1.msra.mxu0 0.0
    %2073 = vmatprep.subr.mxu0 0.0
    %2074 = vmatpush1.msra.mxu0 0.0
    %2075 = vmatprep.subr.mxu0 0.0
    %2076 = vmatpush1.msra.mxu0 0.0
    %2077 = vmatprep.subr.mxu0 0.0
    %2078 = vmatpush1.msra.mxu0 0.0
    %2079 = vmatprep.subr.mxu0 0.0
    %2080 = vmatpush1.msra.mxu0 0.0
    %2081 = vmatprep.subr.mxu0 0.0
    %2082 = vmatpush1.msra.mxu0 0.0
    %2083 = vmatprep.mubr.f32.mxu0 0.0
    %2084 = vmatmul.mubr.f32.gmra.mrb[0].mxu0 %v154
    %v2085 = vpop.f32.mrb[0].mxu0
    %v2086 = vadd.f32 0.0, %v2085
    %v2087 = vpop.f32.mrb[0].mxu0
    %2088 = vdwg.mxu0
    %2089 = vst.msk [vmem:[#allocation2 + $0xb] sm:$0x1] %vm226, %v2086
    %2090 = vst.msk [vmem:[#allocation3 + $0xb] sm:$0x1] %vm226, %v2012
    %v2091 = vld [vmem:[%s1074] sm:$0xf]
    %v2092 = vld [vmem:[%s1074 + $0x4] sm:$0xf]
    %v2093 = vld [vmem:[%s1074 + $0x8] sm:$0xf]
    %v2094 = vld [vmem:[%s1074 + $0xc] sm:$0xf]
    %v2095 = vunpack.c.l.bf16 %v2091
    %v2096 = vunpack.c.l.bf16 %v2092
    %v2097 = vunpack.c.l.bf16 %v2093
    %v2098 = vunpack.c.l.bf16 %v2094
    %v2099 = vmul.f32 %v1247, %v2095
    %v2100 = vmul.f32 %v1248, %v2096
    %v2101 = vmul.f32 %v1249, %v2097
    %v2102 = vmul.f32 %v1250, %v2098
    %2103 = vmatprep.subr.mxu0 0.0
    %2104 = vmatpush1.msra.mxu0 %v2099
    %2105 = vmatprep.subr.mxu0 0.0
    %2106 = vmatpush1.msra.mxu0 %v2100
    %2107 = vmatprep.subr.mxu0 0.0
    %2108 = vmatpush1.msra.mxu0 %v2101
    %2109 = vmatprep.subr.mxu0 0.0
    %2110 = vmatpush1.msra.mxu0 %v2102
    %2111 = vmatprep.subr.mxu0 0.0
    %2112 = vmatpush1.msra.mxu0 0.0
    %2113 = vmatprep.subr.mxu0 0.0
    %2114 = vmatpush1.msra.mxu0 0.0
    %2115 = vmatprep.subr.mxu0 0.0
    %2116 = vmatpush1.msra.mxu0 0.0
    %2117 = vmatprep.subr.mxu0 0.0
    %2118 = vmatpush1.msra.mxu0 0.0
    %2119 = vmatprep.subr.mxu0 0.0
    %2120 = vmatpush1.msra.mxu0 0.0
    %2121 = vmatprep.subr.mxu0 0.0
    %2122 = vmatpush1.msra.mxu0 0.0
    %2123 = vmatprep.subr.mxu0 0.0
    %2124 = vmatpush1.msra.mxu0 0.0
    %2125 = vmatprep.subr.mxu0 0.0
    %2126 = vmatpush1.msra.mxu0 0.0
    %2127 = vmatprep.subr.mxu0 0.0
    %2128 = vmatpush1.msra.mxu0 0.0
    %2129 = vmatprep.subr.mxu0 0.0
    %2130 = vmatpush1.msra.mxu0 0.0
    %2131 = vmatprep.subr.mxu0 0.0
    %2132 = vmatpush1.msra.mxu0 0.0
    %2133 = vmatprep.subr.mxu0 0.0
    %2134 = vmatpush1.msra.mxu0 0.0
    %2135 = vmatprep.subr.mxu0 0.0
    %2136 = vmatpush1.msra.mxu0 0.0
    %2137 = vmatprep.subr.mxu0 0.0
    %2138 = vmatpush1.msra.mxu0 0.0
    %2139 = vmatprep.subr.mxu0 0.0
    %2140 = vmatpush1.msra.mxu0 0.0
    %2141 = vmatprep.subr.mxu0 0.0
    %2142 = vmatpush1.msra.mxu0 0.0
    %2143 = vmatprep.subr.mxu0 0.0
    %2144 = vmatpush1.msra.mxu0 0.0
    %2145 = vmatprep.subr.mxu0 0.0
    %2146 = vmatpush1.msra.mxu0 0.0
    %2147 = vmatprep.subr.mxu0 0.0
    %2148 = vmatpush1.msra.mxu0 0.0
    %2149 = vmatprep.subr.mxu0 0.0
    %2150 = vmatpush1.msra.mxu0 0.0
    %2151 = vmatprep.subr.mxu0 0.0
    %2152 = vmatpush1.msra.mxu0 0.0
    %2153 = vmatprep.subr.mxu0 0.0
    %2154 = vmatpush1.msra.mxu0 0.0
    %2155 = vmatprep.subr.mxu0 0.0
    %2156 = vmatpush1.msra.mxu0 0.0
    %2157 = vmatprep.subr.mxu0 0.0
    %2158 = vmatpush1.msra.mxu0 0.0
    %2159 = vmatprep.subr.mxu0 0.0
    %2160 = vmatpush1.msra.mxu0 0.0
    %2161 = vmatprep.subr.mxu0 0.0
    %2162 = vmatpush1.msra.mxu0 0.0
    %2163 = vmatprep.subr.mxu0 0.0
    %2164 = vmatpush1.msra.mxu0 0.0
    %2165 = vmatprep.subr.mxu0 0.0
    %2166 = vmatpush1.msra.mxu0 0.0
    %2167 = vmatprep.mubr.f32.mxu0 0.0
    %2168 = vmatmul.mubr.f32.gmra.mrb[0].mxu0 %v50
    %v2169 = vpop.f32.mrb[0].mxu0
    %v2170 = vadd.f32 0.0, %v2169
    %v2171 = vpop.f32.mrb[0].mxu0
    %2172 = vmatprep.mubr.f32.mxu0 0.0
    %2173 = vmatmul.mubr.f32.gmra.mrb[0].mxu0 %v53
    %v2174 = vpop.f32.mrb[0].mxu0
    %v2175 = vadd.f32 0.0, %v2174
    %v2176 = vpop.f32.mrb[0].mxu0
    %2177 = vmatprep.mubr.f32.mxu0 0.0
    %2178 = vmatmul.mubr.f32.gmra.mrb[0].mxu0 %v56
    %v2179 = vpop.f32.mrb[0].mxu0
    %v2180 = vadd.f32 0.0, %v2179
    %v2181 = vpop.f32.mrb[0].mxu0
    %2182 = vdwg.mxu0
    %v2183 = vadd.f32 %v2170, %v141
    %v2184 = vadd.f32 %v2175, %v146
    %v2185 = vmax.f32 %v2183, 0.0
    %v2186 = vmax.f32 %v2184, 0.0
    %2187 = vmatprep.subr.mxu0 0.0
    %2188 = vmatpush1.msra.mxu0 %v2185
    %2189 = vmatprep.subr.mxu0 0.0
    %2190 = vmatpush1.msra.mxu0 %v2186
    %2191 = vmatprep.subr.mxu0 0.0
    %2192 = vmatpush1.msra.mxu0 0.0
    %2193 = vmatprep.subr.mxu0 0.0
    %2194 = vmatpush1.msra.mxu0 0.0
    %2195 = vmatprep.subr.mxu0 0.0
    %2196 = vmatpush1.msra.mxu0 0.0
    %2197 = vmatprep.subr.mxu0 0.0
    %2198 = vmatpush1.msra.mxu0 0.0
    %2199 = vmatprep.subr.mxu0 0.0
    %2200 = vmatpush1.msra.mxu0 0.0
    %2201 = vmatprep.subr.mxu0 0.0
    %2202 = vmatpush1.msra.mxu0 0.0
    %2203 = vmatprep.subr.mxu0 0.0
    %2204 = vmatpush1.msra.mxu0 0.0
    %2205 = vmatprep.subr.mxu0 0.0
    %2206 = vmatpush1.msra.mxu0 0.0
    %2207 = vmatprep.subr.mxu0 0.0
    %2208 = vmatpush1.msra.mxu0 0.0
    %2209 = vmatprep.subr.mxu0 0.0
    %2210 = vmatpush1.msra.mxu0 0.0
    %2211 = vmatprep.subr.mxu0 0.0
    %2212 = vmatpush1.msra.mxu0 0.0
    %2213 = vmatprep.subr.mxu0 0.0
    %2214 = vmatpush1.msra.mxu0 0.0
    %2215 = vmatprep.subr.mxu0 0.0
    %2216 = vmatpush1.msra.mxu0 0.0
    %2217 = vmatprep.subr.mxu0 0.0
    %2218 = vmatpush1.msra.mxu0 0.0
    %2219 = vmatprep.subr.mxu0 0.0
    %2220 = vmatpush1.msra.mxu0 0.0
    %2221 = vmatprep.subr.mxu0 0.0
    %2222 = vmatpush1.msra.mxu0 0.0
    %2223 = vmatprep.subr.mxu0 0.0
    %2224 = vmatpush1.msra.mxu0 0.0
    %2225 = vmatprep.subr.mxu0 0.0
    %2226 = vmatpush1.msra.mxu0 0.0
    %2227 = vmatprep.subr.mxu0 0.0
    %2228 = vmatpush1.msra.mxu0 0.0
    %2229 = vmatprep.subr.mxu0 0.0
    %2230 = vmatpush1.msra.mxu0 0.0
    %2231 = vmatprep.subr.mxu0 0.0
    %2232 = vmatpush1.msra.mxu0 0.0
    %2233 = vmatprep.subr.mxu0 0.0
    %2234 = vmatpush1.msra.mxu0 0.0
    %2235 = vmatprep.subr.mxu0 0.0
    %2236 = vmatpush1.msra.mxu0 0.0
    %2237 = vmatprep.subr.mxu0 0.0
    %2238 = vmatpush1.msra.mxu0 0.0
    %2239 = vmatprep.subr.mxu0 0.0
    %2240 = vmatpush1.msra.mxu0 0.0
    %2241 = vmatprep.subr.mxu0 0.0
    %2242 = vmatpush1.msra.mxu0 0.0
    %2243 = vmatprep.subr.mxu0 0.0
    %2244 = vmatpush1.msra.mxu0 0.0
    %2245 = vmatprep.subr.mxu0 0.0
    %2246 = vmatpush1.msra.mxu0 0.0
    %2247 = vmatprep.subr.mxu0 0.0
    %2248 = vmatpush1.msra.mxu0 0.0
    %2249 = vmatprep.subr.mxu0 0.0
    %2250 = vmatpush1.msra.mxu0 0.0
    %2251 = vmatprep.mubr.f32.mxu0 0.0
    %2252 = vmatmul.mubr.f32.gmra.mrb[0].mxu0 %v154
    %v2253 = vpop.f32.mrb[0].mxu0
    %v2254 = vadd.f32 0.0, %v2253
    %v2255 = vpop.f32.mrb[0].mxu0
    %2256 = vdwg.mxu0
    %2257 = vst.msk [vmem:[#allocation2 + $0xc] sm:$0x1] %vm226, %v2254
    %2258 = vst.msk [vmem:[#allocation3 + $0xc] sm:$0x1] %vm226, %v2180
    %v2259 = vld [vmem:[%s229] sm:$0xf]
    %v2260 = vld [vmem:[%s229 + $0x4] sm:$0xf]
    %v2261 = vld [vmem:[%s229 + $0x8] sm:$0xf]
    %v2262 = vld [vmem:[%s229 + $0xc] sm:$0xf]
    %v2263 = vunpack.c.l.bf16 %v2259
    %v2264 = vunpack.c.l.bf16 %v2260
    %v2265 = vunpack.c.l.bf16 %v2261
    %v2266 = vunpack.c.l.bf16 %v2262
    %v2267 = vld [vmem:[%s398] sm:$0xf]
    %v2268 = vld [vmem:[%s398 + $0x4] sm:$0xf]
    %v2269 = vld [vmem:[%s398 + $0x8] sm:$0xf]
    %v2270 = vld [vmem:[%s398 + $0xc] sm:$0xf]
    %v2271 = vunpack.c.l.bf16 %v2267
    %v2272 = vunpack.c.l.bf16 %v2268
    %v2273 = vunpack.c.l.bf16 %v2269
    %v2274 = vunpack.c.l.bf16 %v2270
    %v2275 = vmul.f32 %v2263, %v2271
    %v2276 = vmul.f32 %v2264, %v2272
    %v2277 = vmul.f32 %v2265, %v2273
    %v2278 = vmul.f32 %v2266, %v2274
    %2279 = vmatprep.subr.mxu0 0.0
    %2280 = vmatpush1.msra.mxu0 %v2275
    %2281 = vmatprep.subr.mxu0 0.0
    %2282 = vmatpush1.msra.mxu0 %v2276
    %2283 = vmatprep.subr.mxu0 0.0
    %2284 = vmatpush1.msra.mxu0 %v2277
    %2285 = vmatprep.subr.mxu0 0.0
    %2286 = vmatpush1.msra.mxu0 %v2278
    %2287 = vmatprep.subr.mxu0 0.0
    %2288 = vmatpush1.msra.mxu0 0.0
    %2289 = vmatprep.subr.mxu0 0.0
    %2290 = vmatpush1.msra.mxu0 0.0
    %2291 = vmatprep.subr.mxu0 0.0
    %2292 = vmatpush1.msra.mxu0 0.0
    %2293 = vmatprep.subr.mxu0 0.0
    %2294 = vmatpush1.msra.mxu0 0.0
    %2295 = vmatprep.subr.mxu0 0.0
    %2296 = vmatpush1.msra.mxu0 0.0
    %2297 = vmatprep.subr.mxu0 0.0
    %2298 = vmatpush1.msra.mxu0 0.0
    %2299 = vmatprep.subr.mxu0 0.0
    %2300 = vmatpush1.msra.mxu0 0.0
    %2301 = vmatprep.subr.mxu0 0.0
    %2302 = vmatpush1.msra.mxu0 0.0
    %2303 = vmatprep.subr.mxu0 0.0
    %2304 = vmatpush1.msra.mxu0 0.0
    %2305 = vmatprep.subr.mxu0 0.0
    %2306 = vmatpush1.msra.mxu0 0.0
    %2307 = vmatprep.subr.mxu0 0.0
    %2308 = vmatpush1.msra.mxu0 0.0
    %2309 = vmatprep.subr.mxu0 0.0
    %2310 = vmatpush1.msra.mxu0 0.0
    %2311 = vmatprep.subr.mxu0 0.0
    %2312 = vmatpush1.msra.mxu0 0.0
    %2313 = vmatprep.subr.mxu0 0.0
    %2314 = vmatpush1.msra.mxu0 0.0
    %2315 = vmatprep.subr.mxu0 0.0
    %2316 = vmatpush1.msra.mxu0 0.0
    %2317 = vmatprep.subr.mxu0 0.0
    %2318 = vmatpush1.msra.mxu0 0.0
    %2319 = vmatprep.subr.mxu0 0.0
    %2320 = vmatpush1.msra.mxu0 0.0
    %2321 = vmatprep.subr.mxu0 0.0
    %2322 = vmatpush1.msra.mxu0 0.0
    %2323 = vmatprep.subr.mxu0 0.0
    %2324 = vmatpush1.msra.mxu0 0.0
    %2325 = vmatprep.subr.mxu0 0.0
    %2326 = vmatpush1.msra.mxu0 0.0
    %2327 = vmatprep.subr.mxu0 0.0
    %2328 = vmatpush1.msra.mxu0 0.0
    %2329 = vmatprep.subr.mxu0 0.0
    %2330 = vmatpush1.msra.mxu0 0.0
    %2331 = vmatprep.subr.mxu0 0.0
    %2332 = vmatpush1.msra.mxu0 0.0
    %2333 = vmatprep.subr.mxu0 0.0
    %2334 = vmatpush1.msra.mxu0 0.0
    %2335 = vmatprep.subr.mxu0 0.0
    %2336 = vmatpush1.msra.mxu0 0.0
    %2337 = vmatprep.subr.mxu0 0.0
    %2338 = vmatpush1.msra.mxu0 0.0
    %2339 = vmatprep.subr.mxu0 0.0
    %2340 = vmatpush1.msra.mxu0 0.0
    %2341 = vmatprep.subr.mxu0 0.0
    %2342 = vmatpush1.msra.mxu0 0.0
    %2343 = vmatprep.mubr.f32.mxu0 0.0
    %2344 = vmatmul.mubr.f32.gmra.mrb[0].mxu0 %v50
    %v2345 = vpop.f32.mrb[0].mxu0
    %v2346 = vadd.f32 0.0, %v2345
    %v2347 = vpop.f32.mrb[0].mxu0
    %2348 = vmatprep.mubr.f32.mxu0 0.0
    %2349 = vmatmul.mubr.f32.gmra.mrb[0].mxu0 %v53
    %v2350 = vpop.f32.mrb[0].mxu0
    %v2351 = vadd.f32 0.0, %v2350
    %v2352 = vpop.f32.mrb[0].mxu0
    %2353 = vmatprep.mubr.f32.mxu0 0.0
    %2354 = vmatmul.mubr.f32.gmra.mrb[0].mxu0 %v56
    %v2355 = vpop.f32.mrb[0].mxu0
    %v2356 = vadd.f32 0.0, %v2355
    %v2357 = vpop.f32.mrb[0].mxu0
    %2358 = vdwg.mxu0
    %v2359 = vadd.f32 %v2346, %v141
    %v2360 = vadd.f32 %v2351, %v146
    %v2361 = vmax.f32 %v2359, 0.0
    %v2362 = vmax.f32 %v2360, 0.0
    %2363 = vmatprep.subr.mxu0 0.0
    %2364 = vmatpush1.msra.mxu0 %v2361
    %2365 = vmatprep.subr.mxu0 0.0
    %2366 = vmatpush1.msra.mxu0 %v2362
    %2367 = vmatprep.subr.mxu0 0.0
    %2368 = vmatpush1.msra.mxu0 0.0
    %2369 = vmatprep.subr.mxu0 0.0
    %2370 = vmatpush1.msra.mxu0 0.0
    %2371 = vmatprep.subr.mxu0 0.0
    %2372 = vmatpush1.msra.mxu0 0.0
    %2373 = vmatprep.subr.mxu0 0.0
    %2374 = vmatpush1.msra.mxu0 0.0
    %2375 = vmatprep.subr.mxu0 0.0
    %2376 = vmatpush1.msra.mxu0 0.0
    %2377 = vmatprep.subr.mxu0 0.0
    %2378 = vmatpush1.msra.mxu0 0.0
    %2379 = vmatprep.subr.mxu0 0.0
    %2380 = vmatpush1.msra.mxu0 0.0
    %2381 = vmatprep.subr.mxu0 0.0
    %2382 = vmatpush1.msra.mxu0 0.0
    %2383 = vmatprep.subr.mxu0 0.0
    %2384 = vmatpush1.msra.mxu0 0.0
    %2385 = vmatprep.subr.mxu0 0.0
    %2386 = vmatpush1.msra.mxu0 0.0
    %2387 = vmatprep.subr.mxu0 0.0
    %2388 = vmatpush1.msra.mxu0 0.0
    %2389 = vmatprep.subr.mxu0 0.0
    %2390 = vmatpush1.msra.mxu0 0.0
    %2391 = vmatprep.subr.mxu0 0.0
    %2392 = vmatpush1.msra.mxu0 0.0
    %2393 = vmatprep.subr.mxu0 0.0
    %2394 = vmatpush1.msra.mxu0 0.0
    %2395 = vmatprep.subr.mxu0 0.0
    %2396 = vmatpush1.msra.mxu0 0.0
    %2397 = vmatprep.subr.mxu0 0.0
    %2398 = vmatpush1.msra.mxu0 0.0
    %2399 = vmatprep.subr.mxu0 0.0
    %2400 = vmatpush1.msra.mxu0 0.0
    %2401 = vmatprep.subr.mxu0 0.0
    %2402 = vmatpush1.msra.mxu0 0.0
    %2403 = vmatprep.subr.mxu0 0.0
    %2404 = vmatpush1.msra.mxu0 0.0
    %2405 = vmatprep.subr.mxu0 0.0
    %2406 = vmatpush1.msra.mxu0 0.0
    %2407 = vmatprep.subr.mxu0 0.0
    %2408 = vmatpush1.msra.mxu0 0.0
    %2409 = vmatprep.subr.mxu0 0.0
    %2410 = vmatpush1.msra.mxu0 0.0
    %2411 = vmatprep.subr.mxu0 0.0
    %2412 = vmatpush1.msra.mxu0 0.0
    %2413 = vmatprep.subr.mxu0 0.0
    %2414 = vmatpush1.msra.mxu0 0.0
    %2415 = vmatprep.subr.mxu0 0.0
    %2416 = vmatpush1.msra.mxu0 0.0
    %2417 = vmatprep.subr.mxu0 0.0
    %2418 = vmatpush1.msra.mxu0 0.0
    %2419 = vmatprep.subr.mxu0 0.0
    %2420 = vmatpush1.msra.mxu0 0.0
    %2421 = vmatprep.subr.mxu0 0.0
    %2422 = vmatpush1.msra.mxu0 0.0
    %2423 = vmatprep.subr.mxu0 0.0
    %2424 = vmatpush1.msra.mxu0 0.0
    %2425 = vmatprep.subr.mxu0 0.0
    %2426 = vmatpush1.msra.mxu0 0.0
    %2427 = vmatprep.mubr.f32.mxu0 0.0
    %2428 = vmatmul.mubr.f32.gmra.mrb[0].mxu0 %v154
    %v2429 = vpop.f32.mrb[0].mxu0
    %v2430 = vadd.f32 0.0, %v2429
    %v2431 = vpop.f32.mrb[0].mxu0
    %2432 = vdwg.mxu0
    %2433 = vst.msk [vmem:[#allocation2 + $0xd] sm:$0x1] %vm226, %v2430
    %2434 = vst.msk [vmem:[#allocation3 + $0xd] sm:$0x1] %vm226, %v2356
    %v2435 = vld [vmem:[%s567] sm:$0xf]
    %v2436 = vld [vmem:[%s567 + $0x4] sm:$0xf]
    %v2437 = vld [vmem:[%s567 + $0x8] sm:$0xf]
    %v2438 = vld [vmem:[%s567 + $0xc] sm:$0xf]
    %v2439 = vunpack.c.l.bf16 %v2435
    %v2440 = vunpack.c.l.bf16 %v2436
    %v2441 = vunpack.c.l.bf16 %v2437
    %v2442 = vunpack.c.l.bf16 %v2438
    %v2443 = vmul.f32 %v2263, %v2439
    %v2444 = vmul.f32 %v2264, %v2440
    %v2445 = vmul.f32 %v2265, %v2441
    %v2446 = vmul.f32 %v2266, %v2442
    %2447 = vmatprep.subr.mxu0 0.0
    %2448 = vmatpush1.msra.mxu0 %v2443
    %2449 = vmatprep.subr.mxu0 0.0
    %2450 = vmatpush1.msra.mxu0 %v2444
    %2451 = vmatprep.subr.mxu0 0.0
    %2452 = vmatpush1.msra.mxu0 %v2445
    %2453 = vmatprep.subr.mxu0 0.0
    %2454 = vmatpush1.msra.mxu0 %v2446
    %2455 = vmatprep.subr.mxu0 0.0
    %2456 = vmatpush1.msra.mxu0 0.0
    %2457 = vmatprep.subr.mxu0 0.0
    %2458 = vmatpush1.msra.mxu0 0.0
    %2459 = vmatprep.subr.mxu0 0.0
    %2460 = vmatpush1.msra.mxu0 0.0
    %2461 = vmatprep.subr.mxu0 0.0
    %2462 = vmatpush1.msra.mxu0 0.0
    %2463 = vmatprep.subr.mxu0 0.0
    %2464 = vmatpush1.msra.mxu0 0.0
    %2465 = vmatprep.subr.mxu0 0.0
    %2466 = vmatpush1.msra.mxu0 0.0
    %2467 = vmatprep.subr.mxu0 0.0
    %2468 = vmatpush1.msra.mxu0 0.0
    %2469 = vmatprep.subr.mxu0 0.0
    %2470 = vmatpush1.msra.mxu0 0.0
    %2471 = vmatprep.subr.mxu0 0.0
    %2472 = vmatpush1.msra.mxu0 0.0
    %2473 = vmatprep.subr.mxu0 0.0
    %2474 = vmatpush1.msra.mxu0 0.0
    %2475 = vmatprep.subr.mxu0 0.0
    %2476 = vmatpush1.msra.mxu0 0.0
    %2477 = vmatprep.subr.mxu0 0.0
    %2478 = vmatpush1.msra.mxu0 0.0
    %2479 = vmatprep.subr.mxu0 0.0
    %2480 = vmatpush1.msra.mxu0 0.0
    %2481 = vmatprep.subr.mxu0 0.0
    %2482 = vmatpush1.msra.mxu0 0.0
    %2483 = vmatprep.subr.mxu0 0.0
    %2484 = vmatpush1.msra.mxu0 0.0
    %2485 = vmatprep.subr.mxu0 0.0
    %2486 = vmatpush1.msra.mxu0 0.0
    %2487 = vmatprep.subr.mxu0 0.0
    %2488 = vmatpush1.msra.mxu0 0.0
    %2489 = vmatprep.subr.mxu0 0.0
    %2490 = vmatpush1.msra.mxu0 0.0
    %2491 = vmatprep.subr.mxu0 0.0
    %2492 = vmatpush1.msra.mxu0 0.0
    %2493 = vmatprep.subr.mxu0 0.0
    %2494 = vmatpush1.msra.mxu0 0.0
    %2495 = vmatprep.subr.mxu0 0.0
    %2496 = vmatpush1.msra.mxu0 0.0
    %2497 = vmatprep.subr.mxu0 0.0
    %2498 = vmatpush1.msra.mxu0 0.0
    %2499 = vmatprep.subr.mxu0 0.0
    %2500 = vmatpush1.msra.mxu0 0.0
    %2501 = vmatprep.subr.mxu0 0.0
    %2502 = vmatpush1.msra.mxu0 0.0
    %2503 = vmatprep.subr.mxu0 0.0
    %2504 = vmatpush1.msra.mxu0 0.0
    %2505 = vmatprep.subr.mxu0 0.0
    %2506 = vmatpush1.msra.mxu0 0.0
    %2507 = vmatprep.subr.mxu0 0.0
    %2508 = vmatpush1.msra.mxu0 0.0
    %2509 = vmatprep.subr.mxu0 0.0
    %2510 = vmatpush1.msra.mxu0 0.0
    %2511 = vmatprep.mubr.f32.mxu0 0.0
    %2512 = vmatmul.mubr.f32.gmra.mrb[0].mxu0 %v50
    %v2513 = vpop.f32.mrb[0].mxu0
    %v2514 = vadd.f32 0.0, %v2513
    %v2515 = vpop.f32.mrb[0].mxu0
    %2516 = vmatprep.mubr.f32.mxu0 0.0
    %2517 = vmatmul.mubr.f32.gmra.mrb[0].mxu0 %v53
    %v2518 = vpop.f32.mrb[0].mxu0
    %v2519 = vadd.f32 0.0, %v2518
    %v2520 = vpop.f32.mrb[0].mxu0
    %2521 = vmatprep.mubr.f32.mxu0 0.0
    %2522 = vmatmul.mubr.f32.gmra.mrb[0].mxu0 %v56
    %v2523 = vpop.f32.mrb[0].mxu0
    %v2524 = vadd.f32 0.0, %v2523
    %v2525 = vpop.f32.mrb[0].mxu0
    %2526 = vdwg.mxu0
    %v2527 = vadd.f32 %v2514, %v141
    %v2528 = vadd.f32 %v2519, %v146
    %v2529 = vmax.f32 %v2527, 0.0
    %v2530 = vmax.f32 %v2528, 0.0
    %2531 = vmatprep.subr.mxu0 0.0
    %2532 = vmatpush1.msra.mxu0 %v2529
    %2533 = vmatprep.subr.mxu0 0.0
    %2534 = vmatpush1.msra.mxu0 %v2530
    %2535 = vmatprep.subr.mxu0 0.0
    %2536 = vmatpush1.msra.mxu0 0.0
    %2537 = vmatprep.subr.mxu0 0.0
    %2538 = vmatpush1.msra.mxu0 0.0
    %2539 = vmatprep.subr.mxu0 0.0
    %2540 = vmatpush1.msra.mxu0 0.0
    %2541 = vmatprep.subr.mxu0 0.0
    %2542 = vmatpush1.msra.mxu0 0.0
    %2543 = vmatprep.subr.mxu0 0.0
    %2544 = vmatpush1.msra.mxu0 0.0
    %2545 = vmatprep.subr.mxu0 0.0
    %2546 = vmatpush1.msra.mxu0 0.0
    %2547 = vmatprep.subr.mxu0 0.0
    %2548 = vmatpush1.msra.mxu0 0.0
    %2549 = vmatprep.subr.mxu0 0.0
    %2550 = vmatpush1.msra.mxu0 0.0
    %2551 = vmatprep.subr.mxu0 0.0
    %2552 = vmatpush1.msra.mxu0 0.0
    %2553 = vmatprep.subr.mxu0 0.0
    %2554 = vmatpush1.msra.mxu0 0.0
    %2555 = vmatprep.subr.mxu0 0.0
    %2556 = vmatpush1.msra.mxu0 0.0
    %2557 = vmatprep.subr.mxu0 0.0
    %2558 = vmatpush1.msra.mxu0 0.0
    %2559 = vmatprep.subr.mxu0 0.0
    %2560 = vmatpush1.msra.mxu0 0.0
    %2561 = vmatprep.subr.mxu0 0.0
    %2562 = vmatpush1.msra.mxu0 0.0
    %2563 = vmatprep.subr.mxu0 0.0
    %2564 = vmatpush1.msra.mxu0 0.0
    %2565 = vmatprep.subr.mxu0 0.0
    %2566 = vmatpush1.msra.mxu0 0.0
    %2567 = vmatprep.subr.mxu0 0.0
    %2568 = vmatpush1.msra.mxu0 0.0
    %2569 = vmatprep.subr.mxu0 0.0
    %2570 = vmatpush1.msra.mxu0 0.0
    %2571 = vmatprep.subr.mxu0 0.0
    %2572 = vmatpush1.msra.mxu0 0.0
    %2573 = vmatprep.subr.mxu0 0.0
    %2574 = vmatpush1.msra.mxu0 0.0
    %2575 = vmatprep.subr.mxu0 0.0
    %2576 = vmatpush1.msra.mxu0 0.0
    %2577 = vmatprep.subr.mxu0 0.0
    %2578 = vmatpush1.msra.mxu0 0.0
    %2579 = vmatprep.subr.mxu0 0.0
    %2580 = vmatpush1.msra.mxu0 0.0
    %2581 = vmatprep.subr.mxu0 0.0
    %2582 = vmatpush1.msra.mxu0 0.0
    %2583 = vmatprep.subr.mxu0 0.0
    %2584 = vmatpush1.msra.mxu0 0.0
    %2585 = vmatprep.subr.mxu0 0.0
    %2586 = vmatpush1.msra.mxu0 0.0
    %2587 = vmatprep.subr.mxu0 0.0
    %2588 = vmatpush1.msra.mxu0 0.0
    %2589 = vmatprep.subr.mxu0 0.0
    %2590 = vmatpush1.msra.mxu0 0.0
    %2591 = vmatprep.subr.mxu0 0.0
    %2592 = vmatpush1.msra.mxu0 0.0
    %2593 = vmatprep.subr.mxu0 0.0
    %2594 = vmatpush1.msra.mxu0 0.0
    %2595 = vmatprep.mubr.f32.mxu0 0.0
    %2596 = vmatmul.mubr.f32.gmra.mrb[0].mxu0 %v154
    %v2597 = vpop.f32.mrb[0].mxu0
    %v2598 = vadd.f32 0.0, %v2597
    %v2599 = vpop.f32.mrb[0].mxu0
    %2600 = vdwg.mxu0
    %2601 = vst.msk [vmem:[#allocation2 + $0xe] sm:$0x1] %vm226, %v2598
    %2602 = vst.msk [vmem:[#allocation3 + $0xe] sm:$0x1] %vm226, %v2524
    %v2603 = vld [vmem:[%s736] sm:$0xf]
    %v2604 = vld [vmem:[%s736 + $0x4] sm:$0xf]
    %v2605 = vld [vmem:[%s736 + $0x8] sm:$0xf]
    %v2606 = vld [vmem:[%s736 + $0xc] sm:$0xf]
    %v2607 = vunpack.c.l.bf16 %v2603
    %v2608 = vunpack.c.l.bf16 %v2604
    %v2609 = vunpack.c.l.bf16 %v2605
    %v2610 = vunpack.c.l.bf16 %v2606
    %v2611 = vmul.f32 %v2263, %v2607
    %v2612 = vmul.f32 %v2264, %v2608
    %v2613 = vmul.f32 %v2265, %v2609
    %v2614 = vmul.f32 %v2266, %v2610
    %2615 = vmatprep.subr.mxu0 0.0
    %2616 = vmatpush1.msra.mxu0 %v2611
    %2617 = vmatprep.subr.mxu0 0.0
    %2618 = vmatpush1.msra.mxu0 %v2612
    %2619 = vmatprep.subr.mxu0 0.0
    %2620 = vmatpush1.msra.mxu0 %v2613
    %2621 = vmatprep.subr.mxu0 0.0
    %2622 = vmatpush1.msra.mxu0 %v2614
    %2623 = vmatprep.subr.mxu0 0.0
    %2624 = vmatpush1.msra.mxu0 0.0
    %2625 = vmatprep.subr.mxu0 0.0
    %2626 = vmatpush1.msra.mxu0 0.0
    %2627 = vmatprep.subr.mxu0 0.0
    %2628 = vmatpush1.msra.mxu0 0.0
    %2629 = vmatprep.subr.mxu0 0.0
    %2630 = vmatpush1.msra.mxu0 0.0
    %2631 = vmatprep.subr.mxu0 0.0
    %2632 = vmatpush1.msra.mxu0 0.0
    %2633 = vmatprep.subr.mxu0 0.0
    %2634 = vmatpush1.msra.mxu0 0.0
    %2635 = vmatprep.subr.mxu0 0.0
    %2636 = vmatpush1.msra.mxu0 0.0
    %2637 = vmatprep.subr.mxu0 0.0
    %2638 = vmatpush1.msra.mxu0 0.0
    %2639 = vmatprep.subr.mxu0 0.0
    %2640 = vmatpush1.msra.mxu0 0.0
    %2641 = vmatprep.subr.mxu0 0.0
    %2642 = vmatpush1.msra.mxu0 0.0
    %2643 = vmatprep.subr.mxu0 0.0
    %2644 = vmatpush1.msra.mxu0 0.0
    %2645 = vmatprep.subr.mxu0 0.0
    %2646 = vmatpush1.msra.mxu0 0.0
    %2647 = vmatprep.subr.mxu0 0.0
    %2648 = vmatpush1.msra.mxu0 0.0
    %2649 = vmatprep.subr.mxu0 0.0
    %2650 = vmatpush1.msra.mxu0 0.0
    %2651 = vmatprep.subr.mxu0 0.0
    %2652 = vmatpush1.msra.mxu0 0.0
    %2653 = vmatprep.subr.mxu0 0.0
    %2654 = vmatpush1.msra.mxu0 0.0
    %2655 = vmatprep.subr.mxu0 0.0
    %2656 = vmatpush1.msra.mxu0 0.0
    %2657 = vmatprep.subr.mxu0 0.0
    %2658 = vmatpush1.msra.mxu0 0.0
    %2659 = vmatprep.subr.mxu0 0.0
    %2660 = vmatpush1.msra.mxu0 0.0
    %2661 = vmatprep.subr.mxu0 0.0
    %2662 = vmatpush1.msra.mxu0 0.0
    %2663 = vmatprep.subr.mxu0 0.0
    %2664 = vmatpush1.msra.mxu0 0.0
    %2665 = vmatprep.subr.mxu0 0.0
    %2666 = vmatpush1.msra.mxu0 0.0
    %2667 = vmatprep.subr.mxu0 0.0
    %2668 = vmatpush1.msra.mxu0 0.0
    %2669 = vmatprep.subr.mxu0 0.0
    %2670 = vmatpush1.msra.mxu0 0.0
    %2671 = vmatprep.subr.mxu0 0.0
    %2672 = vmatpush1.msra.mxu0 0.0
    %2673 = vmatprep.subr.mxu0 0.0
    %2674 = vmatpush1.msra.mxu0 0.0
    %2675 = vmatprep.subr.mxu0 0.0
    %2676 = vmatpush1.msra.mxu0 0.0
    %2677 = vmatprep.subr.mxu0 0.0
    %2678 = vmatpush1.msra.mxu0 0.0
    %2679 = vmatprep.mubr.f32.mxu0 0.0
    %2680 = vmatmul.mubr.f32.gmra.mrb[0].mxu0 %v50
    %v2681 = vpop.f32.mrb[0].mxu0
    %v2682 = vadd.f32 0.0, %v2681
    %v2683 = vpop.f32.mrb[0].mxu0
    %2684 = vmatprep.mubr.f32.mxu0 0.0
    %2685 = vmatmul.mubr.f32.gmra.mrb[0].mxu0 %v53
    %v2686 = vpop.f32.mrb[0].mxu0
    %v2687 = vadd.f32 0.0, %v2686
    %v2688 = vpop.f32.mrb[0].mxu0
    %2689 = vmatprep.mubr.f32.mxu0 0.0
    %2690 = vmatmul.mubr.f32.gmra.mrb[0].mxu0 %v56
    %v2691 = vpop.f32.mrb[0].mxu0
    %v2692 = vadd.f32 0.0, %v2691
    %v2693 = vpop.f32.mrb[0].mxu0
    %2694 = vdwg.mxu0
    %v2695 = vadd.f32 %v2682, %v141
    %v2696 = vadd.f32 %v2687, %v146
    %v2697 = vmax.f32 %v2695, 0.0
    %v2698 = vmax.f32 %v2696, 0.0
    %2699 = vmatprep.subr.mxu0 0.0
    %2700 = vmatpush1.msra.mxu0 %v2697
    %2701 = vmatprep.subr.mxu0 0.0
    %2702 = vmatpush1.msra.mxu0 %v2698
    %2703 = vmatprep.subr.mxu0 0.0
    %2704 = vmatpush1.msra.mxu0 0.0
    %2705 = vmatprep.subr.mxu0 0.0
    %2706 = vmatpush1.msra.mxu0 0.0
    %2707 = vmatprep.subr.mxu0 0.0
    %2708 = vmatpush1.msra.mxu0 0.0
    %2709 = vmatprep.subr.mxu0 0.0
    %2710 = vmatpush1.msra.mxu0 0.0
    %2711 = vmatprep.subr.mxu0 0.0
    %2712 = vmatpush1.msra.mxu0 0.0
    %2713 = vmatprep.subr.mxu0 0.0
    %2714 = vmatpush1.msra.mxu0 0.0
    %2715 = vmatprep.subr.mxu0 0.0
    %2716 = vmatpush1.msra.mxu0 0.0
    %2717 = vmatprep.subr.mxu0 0.0
    %2718 = vmatpush1.msra.mxu0 0.0
    %2719 = vmatprep.subr.mxu0 0.0
    %2720 = vmatpush1.msra.mxu0 0.0
    %2721 = vmatprep.subr.mxu0 0.0
    %2722 = vmatpush1.msra.mxu0 0.0
    %2723 = vmatprep.subr.mxu0 0.0
    %2724 = vmatpush1.msra.mxu0 0.0
    %2725 = vmatprep.subr.mxu0 0.0
    %2726 = vmatpush1.msra.mxu0 0.0
    %2727 = vmatprep.subr.mxu0 0.0
    %2728 = vmatpush1.msra.mxu0 0.0
    %2729 = vmatprep.subr.mxu0 0.0
    %2730 = vmatpush1.msra.mxu0 0.0
    %2731 = vmatprep.subr.mxu0 0.0
    %2732 = vmatpush1.msra.mxu0 0.0
    %2733 = vmatprep.subr.mxu0 0.0
    %2734 = vmatpush1.msra.mxu0 0.0
    %2735 = vmatprep.subr.mxu0 0.0
    %2736 = vmatpush1.msra.mxu0 0.0
    %2737 = vmatprep.subr.mxu0 0.0
    %2738 = vmatpush1.msra.mxu0 0.0
    %2739 = vmatprep.subr.mxu0 0.0
    %2740 = vmatpush1.msra.mxu0 0.0
    %2741 = vmatprep.subr.mxu0 0.0
    %2742 = vmatpush1.msra.mxu0 0.0
    %2743 = vmatprep.subr.mxu0 0.0
    %2744 = vmatpush1.msra.mxu0 0.0
    %2745 = vmatprep.subr.mxu0 0.0
    %2746 = vmatpush1.msra.mxu0 0.0
    %2747 = vmatprep.subr.mxu0 0.0
    %2748 = vmatpush1.msra.mxu0 0.0
    %2749 = vmatprep.subr.mxu0 0.0
    %2750 = vmatpush1.msra.mxu0 0.0
    %2751 = vmatprep.subr.mxu0 0.0
    %2752 = vmatpush1.msra.mxu0 0.0
    %2753 = vmatprep.subr.mxu0 0.0
    %2754 = vmatpush1.msra.mxu0 0.0
    %2755 = vmatprep.subr.mxu0 0.0
    %2756 = vmatpush1.msra.mxu0 0.0
    %2757 = vmatprep.subr.mxu0 0.0
    %2758 = vmatpush1.msra.mxu0 0.0
    %2759 = vmatprep.subr.mxu0 0.0
    %2760 = vmatpush1.msra.mxu0 0.0
    %2761 = vmatprep.subr.mxu0 0.0
    %2762 = vmatpush1.msra.mxu0 0.0
    %2763 = vmatprep.mubr.f32.mxu0 0.0
    %2764 = vmatmul.mubr.f32.gmra.mrb[0].mxu0 %v154
    %v2765 = vpop.f32.mrb[0].mxu0
    %v2766 = vadd.f32 0.0, %v2765
    %v2767 = vpop.f32.mrb[0].mxu0
    %2768 = vdwg.mxu0
    %2769 = vst.msk [vmem:[#allocation2 + $0xf] sm:$0x1] %vm226, %v2766
    %2770 = vst.msk [vmem:[#allocation3 + $0xf] sm:$0x1] %vm226, %v2692
    %v2771 = vld [vmem:[%s905] sm:$0xf]
    %v2772 = vld [vmem:[%s905 + $0x4] sm:$0xf]
    %v2773 = vld [vmem:[%s905 + $0x8] sm:$0xf]
    %v2774 = vld [vmem:[%s905 + $0xc] sm:$0xf]
    %v2775 = vunpack.c.l.bf16 %v2771
    %v2776 = vunpack.c.l.bf16 %v2772
    %v2777 = vunpack.c.l.bf16 %v2773
    %v2778 = vunpack.c.l.bf16 %v2774
    %v2779 = vmul.f32 %v2263, %v2775
    %v2780 = vmul.f32 %v2264, %v2776
    %v2781 = vmul.f32 %v2265, %v2777
    %v2782 = vmul.f32 %v2266, %v2778
    %2783 = vmatprep.subr.mxu0 0.0
    %2784 = vmatpush1.msra.mxu0 %v2779
    %2785 = vmatprep.subr.mxu0 0.0
    %2786 = vmatpush1.msra.mxu0 %v2780
    %2787 = vmatprep.subr.mxu0 0.0
    %2788 = vmatpush1.msra.mxu0 %v2781
    %2789 = vmatprep.subr.mxu0 0.0
    %2790 = vmatpush1.msra.mxu0 %v2782
    %2791 = vmatprep.subr.mxu0 0.0
    %2792 = vmatpush1.msra.mxu0 0.0
    %2793 = vmatprep.subr.mxu0 0.0
    %2794 = vmatpush1.msra.mxu0 0.0
    %2795 = vmatprep.subr.mxu0 0.0
    %2796 = vmatpush1.msra.mxu0 0.0
    %2797 = vmatprep.subr.mxu0 0.0
    %2798 = vmatpush1.msra.mxu0 0.0
    %2799 = vmatprep.subr.mxu0 0.0
    %2800 = vmatpush1.msra.mxu0 0.0
    %2801 = vmatprep.subr.mxu0 0.0
    %2802 = vmatpush1.msra.mxu0 0.0
    %2803 = vmatprep.subr.mxu0 0.0
    %2804 = vmatpush1.msra.mxu0 0.0
    %2805 = vmatprep.subr.mxu0 0.0
    %2806 = vmatpush1.msra.mxu0 0.0
    %2807 = vmatprep.subr.mxu0 0.0
    %2808 = vmatpush1.msra.mxu0 0.0
    %2809 = vmatprep.subr.mxu0 0.0
    %2810 = vmatpush1.msra.mxu0 0.0
    %2811 = vmatprep.subr.mxu0 0.0
    %2812 = vmatpush1.msra.mxu0 0.0
    %2813 = vmatprep.subr.mxu0 0.0
    %2814 = vmatpush1.msra.mxu0 0.0
    %2815 = vmatprep.subr.mxu0 0.0
    %2816 = vmatpush1.msra.mxu0 0.0
    %2817 = vmatprep.subr.mxu0 0.0
    %2818 = vmatpush1.msra.mxu0 0.0
    %2819 = vmatprep.subr.mxu0 0.0
    %2820 = vmatpush1.msra.mxu0 0.0
    %2821 = vmatprep.subr.mxu0 0.0
    %2822 = vmatpush1.msra.mxu0 0.0
    %2823 = vmatprep.subr.mxu0 0.0
    %2824 = vmatpush1.msra.mxu0 0.0
    %2825 = vmatprep.subr.mxu0 0.0
    %2826 = vmatpush1.msra.mxu0 0.0
    %2827 = vmatprep.subr.mxu0 0.0
    %2828 = vmatpush1.msra.mxu0 0.0
    %2829 = vmatprep.subr.mxu0 0.0
    %2830 = vmatpush1.msra.mxu0 0.0
    %2831 = vmatprep.subr.mxu0 0.0
    %2832 = vmatpush1.msra.mxu0 0.0
    %2833 = vmatprep.subr.mxu0 0.0
    %2834 = vmatpush1.msra.mxu0 0.0
    %2835 = vmatprep.subr.mxu0 0.0
    %2836 = vmatpush1.msra.mxu0 0.0
    %2837 = vmatprep.subr.mxu0 0.0
    %2838 = vmatpush1.msra.mxu0 0.0
    %2839 = vmatprep.subr.mxu0 0.0
    %2840 = vmatpush1.msra.mxu0 0.0
    %2841 = vmatprep.subr.mxu0 0.0
    %2842 = vmatpush1.msra.mxu0 0.0
    %2843 = vmatprep.subr.mxu0 0.0
    %2844 = vmatpush1.msra.mxu0 0.0
    %2845 = vmatprep.subr.mxu0 0.0
    %2846 = vmatpush1.msra.mxu0 0.0
    %2847 = vmatprep.mubr.f32.mxu0 0.0
    %2848 = vmatmul.mubr.f32.gmra.mrb[0].mxu0 %v50
    %v2849 = vpop.f32.mrb[0].mxu0
    %v2850 = vadd.f32 0.0, %v2849
    %v2851 = vpop.f32.mrb[0].mxu0
    %2852 = vmatprep.mubr.f32.mxu0 0.0
    %2853 = vmatmul.mubr.f32.gmra.mrb[0].mxu0 %v53
    %v2854 = vpop.f32.mrb[0].mxu0
    %v2855 = vadd.f32 0.0, %v2854
    %v2856 = vpop.f32.mrb[0].mxu0
    %2857 = vmatprep.mubr.f32.mxu0 0.0
    %2858 = vmatmul.mubr.f32.gmra.mrb[0].mxu0 %v56
    %v2859 = vpop.f32.mrb[0].mxu0
    %v2860 = vadd.f32 0.0, %v2859
    %v2861 = vpop.f32.mrb[0].mxu0
    %2862 = vdwg.mxu0
    %v2863 = vadd.f32 %v2850, %v141
    %v2864 = vadd.f32 %v2855, %v146
    %v2865 = vmax.f32 %v2863, 0.0
    %v2866 = vmax.f32 %v2864, 0.0
    %2867 = vmatprep.subr.mxu0 0.0
    %2868 = vmatpush1.msra.mxu0 %v2865
    %2869 = vmatprep.subr.mxu0 0.0
    %2870 = vmatpush1.msra.mxu0 %v2866
    %2871 = vmatprep.subr.mxu0 0.0
    %2872 = vmatpush1.msra.mxu0 0.0
    %2873 = vmatprep.subr.mxu0 0.0
    %2874 = vmatpush1.msra.mxu0 0.0
    %2875 = vmatprep.subr.mxu0 0.0
    %2876 = vmatpush1.msra.mxu0 0.0
    %2877 = vmatprep.subr.mxu0 0.0
    %2878 = vmatpush1.msra.mxu0 0.0
    %2879 = vmatprep.subr.mxu0 0.0
    %2880 = vmatpush1.msra.mxu0 0.0
    %2881 = vmatprep.subr.mxu0 0.0
    %2882 = vmatpush1.msra.mxu0 0.0
    %2883 = vmatprep.subr.mxu0 0.0
    %2884 = vmatpush1.msra.mxu0 0.0
    %2885 = vmatprep.subr.mxu0 0.0
    %2886 = vmatpush1.msra.mxu0 0.0
    %2887 = vmatprep.subr.mxu0 0.0
    %2888 = vmatpush1.msra.mxu0 0.0
    %2889 = vmatprep.subr.mxu0 0.0
    %2890 = vmatpush1.msra.mxu0 0.0
    %2891 = vmatprep.subr.mxu0 0.0
    %2892 = vmatpush1.msra.mxu0 0.0
    %2893 = vmatprep.subr.mxu0 0.0
    %2894 = vmatpush1.msra.mxu0 0.0
    %2895 = vmatprep.subr.mxu0 0.0
    %2896 = vmatpush1.msra.mxu0 0.0
    %2897 = vmatprep.subr.mxu0 0.0
    %2898 = vmatpush1.msra.mxu0 0.0
    %2899 = vmatprep.subr.mxu0 0.0
    %2900 = vmatpush1.msra.mxu0 0.0
    %2901 = vmatprep.subr.mxu0 0.0
    %2902 = vmatpush1.msra.mxu0 0.0
    %2903 = vmatprep.subr.mxu0 0.0
    %2904 = vmatpush1.msra.mxu0 0.0
    %2905 = vmatprep.subr.mxu0 0.0
    %2906 = vmatpush1.msra.mxu0 0.0
    %2907 = vmatprep.subr.mxu0 0.0
    %2908 = vmatpush1.msra.mxu0 0.0
    %2909 = vmatprep.subr.mxu0 0.0
    %2910 = vmatpush1.msra.mxu0 0.0
    %2911 = vmatprep.subr.mxu0 0.0
    %2912 = vmatpush1.msra.mxu0 0.0
    %2913 = vmatprep.subr.mxu0 0.0
    %2914 = vmatpush1.msra.mxu0 0.0
    %2915 = vmatprep.subr.mxu0 0.0
    %2916 = vmatpush1.msra.mxu0 0.0
    %2917 = vmatprep.subr.mxu0 0.0
    %2918 = vmatpush1.msra.mxu0 0.0
    %2919 = vmatprep.subr.mxu0 0.0
    %2920 = vmatpush1.msra.mxu0 0.0
    %2921 = vmatprep.subr.mxu0 0.0
    %2922 = vmatpush1.msra.mxu0 0.0
    %2923 = vmatprep.subr.mxu0 0.0
    %2924 = vmatpush1.msra.mxu0 0.0
    %2925 = vmatprep.subr.mxu0 0.0
    %2926 = vmatpush1.msra.mxu0 0.0
    %2927 = vmatprep.subr.mxu0 0.0
    %2928 = vmatpush1.msra.mxu0 0.0
    %2929 = vmatprep.subr.mxu0 0.0
    %2930 = vmatpush1.msra.mxu0 0.0
    %2931 = vmatprep.mubr.f32.mxu0 0.0
    %2932 = vmatmul.mubr.f32.gmra.mrb[0].mxu0 %v154
    %v2933 = vpop.f32.mrb[0].mxu0
    %v2934 = vadd.f32 0.0, %v2933
    %v2935 = vpop.f32.mrb[0].mxu0
    %2936 = vdwg.mxu0
    %2937 = vst.msk [vmem:[#allocation2 + $0x10] sm:$0x1] %vm226, %v2934
    %2938 = vst.msk [vmem:[#allocation3 + $0x10] sm:$0x1] %vm226, %v2860
    %v2939 = vld [vmem:[%s1074] sm:$0xf]
    %v2940 = vld [vmem:[%s1074 + $0x4] sm:$0xf]
    %v2941 = vld [vmem:[%s1074 + $0x8] sm:$0xf]
    %v2942 = vld [vmem:[%s1074 + $0xc] sm:$0xf]
    %v2943 = vunpack.c.l.bf16 %v2939
    %v2944 = vunpack.c.l.bf16 %v2940
    %v2945 = vunpack.c.l.bf16 %v2941
    %v2946 = vunpack.c.l.bf16 %v2942
    %v2947 = vmul.f32 %v2263, %v2943
    %v2948 = vmul.f32 %v2264, %v2944
    %v2949 = vmul.f32 %v2265, %v2945
    %v2950 = vmul.f32 %v2266, %v2946
    %2951 = vmatprep.subr.mxu0 0.0
    %2952 = vmatpush1.msra.mxu0 %v2947
    %2953 = vmatprep.subr.mxu0 0.0
    %2954 = vmatpush1.msra.mxu0 %v2948
    %2955 = vmatprep.subr.mxu0 0.0
    %2956 = vmatpush1.msra.mxu0 %v2949
    %2957 = vmatprep.subr.mxu0 0.0
    %2958 = vmatpush1.msra.mxu0 %v2950
    %2959 = vmatprep.subr.mxu0 0.0
    %2960 = vmatpush1.msra.mxu0 0.0
    %2961 = vmatprep.subr.mxu0 0.0
    %2962 = vmatpush1.msra.mxu0 0.0
    %2963 = vmatprep.subr.mxu0 0.0
    %2964 = vmatpush1.msra.mxu0 0.0
    %2965 = vmatprep.subr.mxu0 0.0
    %2966 = vmatpush1.msra.mxu0 0.0
    %2967 = vmatprep.subr.mxu0 0.0
    %2968 = vmatpush1.msra.mxu0 0.0
    %2969 = vmatprep.subr.mxu0 0.0
    %2970 = vmatpush1.msra.mxu0 0.0
    %2971 = vmatprep.subr.mxu0 0.0
    %2972 = vmatpush1.msra.mxu0 0.0
    %2973 = vmatprep.subr.mxu0 0.0
    %2974 = vmatpush1.msra.mxu0 0.0
    %2975 = vmatprep.subr.mxu0 0.0
    %2976 = vmatpush1.msra.mxu0 0.0
    %2977 = vmatprep.subr.mxu0 0.0
    %2978 = vmatpush1.msra.mxu0 0.0
    %2979 = vmatprep.subr.mxu0 0.0
    %2980 = vmatpush1.msra.mxu0 0.0
    %2981 = vmatprep.subr.mxu0 0.0
    %2982 = vmatpush1.msra.mxu0 0.0
    %2983 = vmatprep.subr.mxu0 0.0
    %2984 = vmatpush1.msra.mxu0 0.0
    %2985 = vmatprep.subr.mxu0 0.0
    %2986 = vmatpush1.msra.mxu0 0.0
    %2987 = vmatprep.subr.mxu0 0.0
    %2988 = vmatpush1.msra.mxu0 0.0
    %2989 = vmatprep.subr.mxu0 0.0
    %2990 = vmatpush1.msra.mxu0 0.0
    %2991 = vmatprep.subr.mxu0 0.0
    %2992 = vmatpush1.msra.mxu0 0.0
    %2993 = vmatprep.subr.mxu0 0.0
    %2994 = vmatpush1.msra.mxu0 0.0
    %2995 = vmatprep.subr.mxu0 0.0
    %2996 = vmatpush1.msra.mxu0 0.0
    %2997 = vmatprep.subr.mxu0 0.0
    %2998 = vmatpush1.msra.mxu0 0.0
    %2999 = vmatprep.subr.mxu0 0.0
    %3000 = vmatpush1.msra.mxu0 0.0
    %3001 = vmatprep.subr.mxu0 0.0
    %3002 = vmatpush1.msra.mxu0 0.0
    %3003 = vmatprep.subr.mxu0 0.0
    %3004 = vmatpush1.msra.mxu0 0.0
    %3005 = vmatprep.subr.mxu0 0.0
    %3006 = vmatpush1.msra.mxu0 0.0
    %3007 = vmatprep.subr.mxu0 0.0
    %3008 = vmatpush1.msra.mxu0 0.0
    %3009 = vmatprep.subr.mxu0 0.0
    %3010 = vmatpush1.msra.mxu0 0.0
    %3011 = vmatprep.subr.mxu0 0.0
    %3012 = vmatpush1.msra.mxu0 0.0
    %3013 = vmatprep.subr.mxu0 0.0
    %3014 = vmatpush1.msra.mxu0 0.0
    %3015 = vmatprep.mubr.f32.mxu0 0.0
    %3016 = vmatmul.mubr.f32.gmra.mrb[0].mxu0 %v50
    %v3017 = vpop.f32.mrb[0].mxu0
    %v3018 = vadd.f32 0.0, %v3017
    %v3019 = vpop.f32.mrb[0].mxu0
    %3020 = vmatprep.mubr.f32.mxu0 0.0
    %3021 = vmatmul.mubr.f32.gmra.mrb[0].mxu0 %v53
    %v3022 = vpop.f32.mrb[0].mxu0
    %v3023 = vadd.f32 0.0, %v3022
    %v3024 = vpop.f32.mrb[0].mxu0
    %3025 = vmatprep.mubr.f32.mxu0 0.0
    %3026 = vmatmul.mubr.f32.gmra.mrb[0].mxu0 %v56
    %v3027 = vpop.f32.mrb[0].mxu0
    %v3028 = vadd.f32 0.0, %v3027
    %v3029 = vpop.f32.mrb[0].mxu0
    %3030 = vdwg.mxu0
    %v3031 = vadd.f32 %v3018, %v141
    %v3032 = vadd.f32 %v3023, %v146
    %v3033 = vmax.f32 %v3031, 0.0
    %v3034 = vmax.f32 %v3032, 0.0
    %3035 = vmatprep.subr.mxu0 0.0
    %3036 = vmatpush1.msra.mxu0 %v3033
    %3037 = vmatprep.subr.mxu0 0.0
    %3038 = vmatpush1.msra.mxu0 %v3034
    %3039 = vmatprep.subr.mxu0 0.0
    %3040 = vmatpush1.msra.mxu0 0.0
    %3041 = vmatprep.subr.mxu0 0.0
    %3042 = vmatpush1.msra.mxu0 0.0
    %3043 = vmatprep.subr.mxu0 0.0
    %3044 = vmatpush1.msra.mxu0 0.0
    %3045 = vmatprep.subr.mxu0 0.0
    %3046 = vmatpush1.msra.mxu0 0.0
    %3047 = vmatprep.subr.mxu0 0.0
    %3048 = vmatpush1.msra.mxu0 0.0
    %3049 = vmatprep.subr.mxu0 0.0
    %3050 = vmatpush1.msra.mxu0 0.0
    %3051 = vmatprep.subr.mxu0 0.0
    %3052 = vmatpush1.msra.mxu0 0.0
    %3053 = vmatprep.subr.mxu0 0.0
    %3054 = vmatpush1.msra.mxu0 0.0
    %3055 = vmatprep.subr.mxu0 0.0
    %3056 = vmatpush1.msra.mxu0 0.0
    %3057 = vmatprep.subr.mxu0 0.0
    %3058 = vmatpush1.msra.mxu0 0.0
    %3059 = vmatprep.subr.mxu0 0.0
    %3060 = vmatpush1.msra.mxu0 0.0
    %3061 = vmatprep.subr.mxu0 0.0
    %3062 = vmatpush1.msra.mxu0 0.0
    %3063 = vmatprep.subr.mxu0 0.0
    %3064 = vmatpush1.msra.mxu0 0.0
    %3065 = vmatprep.subr.mxu0 0.0
    %3066 = vmatpush1.msra.mxu0 0.0
    %3067 = vmatprep.subr.mxu0 0.0
    %3068 = vmatpush1.msra.mxu0 0.0
    %3069 = vmatprep.subr.mxu0 0.0
    %3070 = vmatpush1.msra.mxu0 0.0
    %3071 = vmatprep.subr.mxu0 0.0
    %3072 = vmatpush1.msra.mxu0 0.0
    %3073 = vmatprep.subr.mxu0 0.0
    %3074 = vmatpush1.msra.mxu0 0.0
    %3075 = vmatprep.subr.mxu0 0.0
    %3076 = vmatpush1.msra.mxu0 0.0
    %3077 = vmatprep.subr.mxu0 0.0
    %3078 = vmatpush1.msra.mxu0 0.0
    %3079 = vmatprep.subr.mxu0 0.0
    %3080 = vmatpush1.msra.mxu0 0.0
    %3081 = vmatprep.subr.mxu0 0.0
    %3082 = vmatpush1.msra.mxu0 0.0
    %3083 = vmatprep.subr.mxu0 0.0
    %3084 = vmatpush1.msra.mxu0 0.0
    %3085 = vmatprep.subr.mxu0 0.0
    %3086 = vmatpush1.msra.mxu0 0.0
    %3087 = vmatprep.subr.mxu0 0.0
    %3088 = vmatpush1.msra.mxu0 0.0
    %3089 = vmatprep.subr.mxu0 0.0
    %3090 = vmatpush1.msra.mxu0 0.0
    %3091 = vmatprep.subr.mxu0 0.0
    %3092 = vmatpush1.msra.mxu0 0.0
    %3093 = vmatprep.subr.mxu0 0.0
    %3094 = vmatpush1.msra.mxu0 0.0
    %3095 = vmatprep.subr.mxu0 0.0
    %3096 = vmatpush1.msra.mxu0 0.0
    %3097 = vmatprep.subr.mxu0 0.0
    %3098 = vmatpush1.msra.mxu0 0.0
    %3099 = vmatprep.mubr.f32.mxu0 0.0
    %3100 = vmatmul.mubr.f32.gmra.mrb[0].mxu0 %v154
    %v3101 = vpop.f32.mrb[0].mxu0
    %v3102 = vadd.f32 0.0, %v3101
    %v3103 = vpop.f32.mrb[0].mxu0
    %3104 = vdwg.mxu0
    %3105 = vst.msk [vmem:[#allocation2 + $0x11] sm:$0x1] %vm226, %v3102
    %3106 = vst.msk [vmem:[#allocation3 + $0x11] sm:$0x1] %vm226, %v3028
    %v3107 = vld [vmem:[%s398] sm:$0xf]
    %v3108 = vld [vmem:[%s398 + $0x4] sm:$0xf]
    %v3109 = vld [vmem:[%s398 + $0x8] sm:$0xf]
    %v3110 = vld [vmem:[%s398 + $0xc] sm:$0xf]
    %v3111 = vunpack.c.l.bf16 %v3107
    %v3112 = vunpack.c.l.bf16 %v3108
    %v3113 = vunpack.c.l.bf16 %v3109
    %v3114 = vunpack.c.l.bf16 %v3110
    %v3115 = vld [vmem:[%s567] sm:$0xf]
    %v3116 = vld [vmem:[%s567 + $0x4] sm:$0xf]
    %v3117 = vld [vmem:[%s567 + $0x8] sm:$0xf]
    %v3118 = vld [vmem:[%s567 + $0xc] sm:$0xf]
    %v3119 = vunpack.c.l.bf16 %v3115
    %v3120 = vunpack.c.l.bf16 %v3116
    %v3121 = vunpack.c.l.bf16 %v3117
    %v3122 = vunpack.c.l.bf16 %v3118
    %v3123 = vmul.f32 %v3111, %v3119
    %v3124 = vmul.f32 %v3112, %v3120
    %v3125 = vmul.f32 %v3113, %v3121
    %v3126 = vmul.f32 %v3114, %v3122
    %3127 = vmatprep.subr.mxu0 0.0
    %3128 = vmatpush1.msra.mxu0 %v3123
    %3129 = vmatprep.subr.mxu0 0.0
    %3130 = vmatpush1.msra.mxu0 %v3124
    %3131 = vmatprep.subr.mxu0 0.0
    %3132 = vmatpush1.msra.mxu0 %v3125
    %3133 = vmatprep.subr.mxu0 0.0
    %3134 = vmatpush1.msra.mxu0 %v3126
    %3135 = vmatprep.subr.mxu0 0.0
    %3136 = vmatpush1.msra.mxu0 0.0
    %3137 = vmatprep.subr.mxu0 0.0
    %3138 = vmatpush1.msra.mxu0 0.0
    %3139 = vmatprep.subr.mxu0 0.0
    %3140 = vmatpush1.msra.mxu0 0.0
    %3141 = vmatprep.subr.mxu0 0.0
    %3142 = vmatpush1.msra.mxu0 0.0
    %3143 = vmatprep.subr.mxu0 0.0
    %3144 = vmatpush1.msra.mxu0 0.0
    %3145 = vmatprep.subr.mxu0 0.0
    %3146 = vmatpush1.msra.mxu0 0.0
    %3147 = vmatprep.subr.mxu0 0.0
    %3148 = vmatpush1.msra.mxu0 0.0
    %3149 = vmatprep.subr.mxu0 0.0
    %3150 = vmatpush1.msra.mxu0 0.0
    %3151 = vmatprep.subr.mxu0 0.0
    %3152 = vmatpush1.msra.mxu0 0.0
    %3153 = vmatprep.subr.mxu0 0.0
    %3154 = vmatpush1.msra.mxu0 0.0
    %3155 = vmatprep.subr.mxu0 0.0
    %3156 = vmatpush1.msra.mxu0 0.0
    %3157 = vmatprep.subr.mxu0 0.0
    %3158 = vmatpush1.msra.mxu0 0.0
    %3159 = vmatprep.subr.mxu0 0.0
    %3160 = vmatpush1.msra.mxu0 0.0
    %3161 = vmatprep.subr.mxu0 0.0
    %3162 = vmatpush1.msra.mxu0 0.0
    %3163 = vmatprep.subr.mxu0 0.0
    %3164 = vmatpush1.msra.mxu0 0.0
    %3165 = vmatprep.subr.mxu0 0.0
    %3166 = vmatpush1.msra.mxu0 0.0
    %3167 = vmatprep.subr.mxu0 0.0
    %3168 = vmatpush1.msra.mxu0 0.0
    %3169 = vmatprep.subr.mxu0 0.0
    %3170 = vmatpush1.msra.mxu0 0.0
    %3171 = vmatprep.subr.mxu0 0.0
    %3172 = vmatpush1.msra.mxu0 0.0
    %3173 = vmatprep.subr.mxu0 0.0
    %3174 = vmatpush1.msra.mxu0 0.0
    %3175 = vmatprep.subr.mxu0 0.0
    %3176 = vmatpush1.msra.mxu0 0.0
    %3177 = vmatprep.subr.mxu0 0.0
    %3178 = vmatpush1.msra.mxu0 0.0
    %3179 = vmatprep.subr.mxu0 0.0
    %3180 = vmatpush1.msra.mxu0 0.0
    %3181 = vmatprep.subr.mxu0 0.0
    %3182 = vmatpush1.msra.mxu0 0.0
    %3183 = vmatprep.subr.mxu0 0.0
    %3184 = vmatpush1.msra.mxu0 0.0
    %3185 = vmatprep.subr.mxu0 0.0
    %3186 = vmatpush1.msra.mxu0 0.0
    %3187 = vmatprep.subr.mxu0 0.0
    %3188 = vmatpush1.msra.mxu0 0.0
    %3189 = vmatprep.subr.mxu0 0.0
    %3190 = vmatpush1.msra.mxu0 0.0
    %3191 = vmatprep.mubr.f32.mxu0 0.0
    %3192 = vmatmul.mubr.f32.gmra.mrb[0].mxu0 %v50
    %v3193 = vpop.f32.mrb[0].mxu0
    %v3194 = vadd.f32 0.0, %v3193
    %v3195 = vpop.f32.mrb[0].mxu0
    %3196 = vmatprep.mubr.f32.mxu0 0.0
    %3197 = vmatmul.mubr.f32.gmra.mrb[0].mxu0 %v53
    %v3198 = vpop.f32.mrb[0].mxu0
    %v3199 = vadd.f32 0.0, %v3198
    %v3200 = vpop.f32.mrb[0].mxu0
    %3201 = vmatprep.mubr.f32.mxu0 0.0
    %3202 = vmatmul.mubr.f32.gmra.mrb[0].mxu0 %v56
    %v3203 = vpop.f32.mrb[0].mxu0
    %v3204 = vadd.f32 0.0, %v3203
    %v3205 = vpop.f32.mrb[0].mxu0
    %3206 = vdwg.mxu0
    %v3207 = vadd.f32 %v3194, %v141
    %v3208 = vadd.f32 %v3199, %v146
    %v3209 = vmax.f32 %v3207, 0.0
    %v3210 = vmax.f32 %v3208, 0.0
    %3211 = vmatprep.subr.mxu0 0.0
    %3212 = vmatpush1.msra.mxu0 %v3209
    %3213 = vmatprep.subr.mxu0 0.0
    %3214 = vmatpush1.msra.mxu0 %v3210
    %3215 = vmatprep.subr.mxu0 0.0
    %3216 = vmatpush1.msra.mxu0 0.0
    %3217 = vmatprep.subr.mxu0 0.0
    %3218 = vmatpush1.msra.mxu0 0.0
    %3219 = vmatprep.subr.mxu0 0.0
    %3220 = vmatpush1.msra.mxu0 0.0
    %3221 = vmatprep.subr.mxu0 0.0
    %3222 = vmatpush1.msra.mxu0 0.0
    %3223 = vmatprep.subr.mxu0 0.0
    %3224 = vmatpush1.msra.mxu0 0.0
    %3225 = vmatprep.subr.mxu0 0.0
    %3226 = vmatpush1.msra.mxu0 0.0
    %3227 = vmatprep.subr.mxu0 0.0
    %3228 = vmatpush1.msra.mxu0 0.0
    %3229 = vmatprep.subr.mxu0 0.0
    %3230 = vmatpush1.msra.mxu0 0.0
    %3231 = vmatprep.subr.mxu0 0.0
    %3232 = vmatpush1.msra.mxu0 0.0
    %3233 = vmatprep.subr.mxu0 0.0
    %3234 = vmatpush1.msra.mxu0 0.0
    %3235 = vmatprep.subr.mxu0 0.0
    %3236 = vmatpush1.msra.mxu0 0.0
    %3237 = vmatprep.subr.mxu0 0.0
    %3238 = vmatpush1.msra.mxu0 0.0
    %3239 = vmatprep.subr.mxu0 0.0
    %3240 = vmatpush1.msra.mxu0 0.0
    %3241 = vmatprep.subr.mxu0 0.0
    %3242 = vmatpush1.msra.mxu0 0.0
    %3243 = vmatprep.subr.mxu0 0.0
    %3244 = vmatpush1.msra.mxu0 0.0
    %3245 = vmatprep.subr.mxu0 0.0
    %3246 = vmatpush1.msra.mxu0 0.0
    %3247 = vmatprep.subr.mxu0 0.0
    %3248 = vmatpush1.msra.mxu0 0.0
    %3249 = vmatprep.subr.mxu0 0.0
    %3250 = vmatpush1.msra.mxu0 0.0
    %3251 = vmatprep.subr.mxu0 0.0
    %3252 = vmatpush1.msra.mxu0 0.0
    %3253 = vmatprep.subr.mxu0 0.0
    %3254 = vmatpush1.msra.mxu0 0.0
    %3255 = vmatprep.subr.mxu0 0.0
    %3256 = vmatpush1.msra.mxu0 0.0
    %3257 = vmatprep.subr.mxu0 0.0
    %3258 = vmatpush1.msra.mxu0 0.0
    %3259 = vmatprep.subr.mxu0 0.0
    %3260 = vmatpush1.msra.mxu0 0.0
    %3261 = vmatprep.subr.mxu0 0.0
    %3262 = vmatpush1.msra.mxu0 0.0
    %3263 = vmatprep.subr.mxu0 0.0
    %3264 = vmatpush1.msra.mxu0 0.0
    %3265 = vmatprep.subr.mxu0 0.0
    %3266 = vmatpush1.msra.mxu0 0.0
    %3267 = vmatprep.subr.mxu0 0.0
    %3268 = vmatpush1.msra.mxu0 0.0
    %3269 = vmatprep.subr.mxu0 0.0
    %3270 = vmatpush1.msra.mxu0 0.0
    %3271 = vmatprep.subr.mxu0 0.0
    %3272 = vmatpush1.msra.mxu0 0.0
    %3273 = vmatprep.subr.mxu0 0.0
    %3274 = vmatpush1.msra.mxu0 0.0
    %3275 = vmatprep.mubr.f32.mxu0 0.0
    %3276 = vmatmul.mubr.f32.gmra.mrb[0].mxu0 %v154
    %v3277 = vpop.f32.mrb[0].mxu0
    %v3278 = vadd.f32 0.0, %v3277
    %v3279 = vpop.f32.mrb[0].mxu0
    %3280 = vdwg.mxu0
    %3281 = vst.msk [vmem:[#allocation2 + $0x12] sm:$0x1] %vm226, %v3278
    %3282 = vst.msk [vmem:[#allocation3 + $0x12] sm:$0x1] %vm226, %v3204
    %v3283 = vld [vmem:[%s736] sm:$0xf]
    %v3284 = vld [vmem:[%s736 + $0x4] sm:$0xf]
    %v3285 = vld [vmem:[%s736 + $0x8] sm:$0xf]
    %v3286 = vld [vmem:[%s736 + $0xc] sm:$0xf]
    %v3287 = vunpack.c.l.bf16 %v3283
    %v3288 = vunpack.c.l.bf16 %v3284
    %v3289 = vunpack.c.l.bf16 %v3285
    %v3290 = vunpack.c.l.bf16 %v3286
    %v3291 = vmul.f32 %v3111, %v3287
    %v3292 = vmul.f32 %v3112, %v3288
    %v3293 = vmul.f32 %v3113, %v3289
    %v3294 = vmul.f32 %v3114, %v3290
    %3295 = vmatprep.subr.mxu0 0.0
    %3296 = vmatpush1.msra.mxu0 %v3291
    %3297 = vmatprep.subr.mxu0 0.0
    %3298 = vmatpush1.msra.mxu0 %v3292
    %3299 = vmatprep.subr.mxu0 0.0
    %3300 = vmatpush1.msra.mxu0 %v3293
    %3301 = vmatprep.subr.mxu0 0.0
    %3302 = vmatpush1.msra.mxu0 %v3294
    %3303 = vmatprep.subr.mxu0 0.0
    %3304 = vmatpush1.msra.mxu0 0.0
    %3305 = vmatprep.subr.mxu0 0.0
    %3306 = vmatpush1.msra.mxu0 0.0
    %3307 = vmatprep.subr.mxu0 0.0
    %3308 = vmatpush1.msra.mxu0 0.0
    %3309 = vmatprep.subr.mxu0 0.0
    %3310 = vmatpush1.msra.mxu0 0.0
    %3311 = vmatprep.subr.mxu0 0.0
    %3312 = vmatpush1.msra.mxu0 0.0
    %3313 = vmatprep.subr.mxu0 0.0
    %3314 = vmatpush1.msra.mxu0 0.0
    %3315 = vmatprep.subr.mxu0 0.0
    %3316 = vmatpush1.msra.mxu0 0.0
    %3317 = vmatprep.subr.mxu0 0.0
    %3318 = vmatpush1.msra.mxu0 0.0
    %3319 = vmatprep.subr.mxu0 0.0
    %3320 = vmatpush1.msra.mxu0 0.0
    %3321 = vmatprep.subr.mxu0 0.0
    %3322 = vmatpush1.msra.mxu0 0.0
    %3323 = vmatprep.subr.mxu0 0.0
    %3324 = vmatpush1.msra.mxu0 0.0
    %3325 = vmatprep.subr.mxu0 0.0
    %3326 = vmatpush1.msra.mxu0 0.0
    %3327 = vmatprep.subr.mxu0 0.0
    %3328 = vmatpush1.msra.mxu0 0.0
    %3329 = vmatprep.subr.mxu0 0.0
    %3330 = vmatpush1.msra.mxu0 0.0
    %3331 = vmatprep.subr.mxu0 0.0
    %3332 = vmatpush1.msra.mxu0 0.0
    %3333 = vmatprep.subr.mxu0 0.0
    %3334 = vmatpush1.msra.mxu0 0.0
    %3335 = vmatprep.subr.mxu0 0.0
    %3336 = vmatpush1.msra.mxu0 0.0
    %3337 = vmatprep.subr.mxu0 0.0
    %3338 = vmatpush1.msra.mxu0 0.0
    %3339 = vmatprep.subr.mxu0 0.0
    %3340 = vmatpush1.msra.mxu0 0.0
    %3341 = vmatprep.subr.mxu0 0.0
    %3342 = vmatpush1.msra.mxu0 0.0
    %3343 = vmatprep.subr.mxu0 0.0
    %3344 = vmatpush1.msra.mxu0 0.0
    %3345 = vmatprep.subr.mxu0 0.0
    %3346 = vmatpush1.msra.mxu0 0.0
    %3347 = vmatprep.subr.mxu0 0.0
    %3348 = vmatpush1.msra.mxu0 0.0
    %3349 = vmatprep.subr.mxu0 0.0
    %3350 = vmatpush1.msra.mxu0 0.0
    %3351 = vmatprep.subr.mxu0 0.0
    %3352 = vmatpush1.msra.mxu0 0.0
    %3353 = vmatprep.subr.mxu0 0.0
    %3354 = vmatpush1.msra.mxu0 0.0
    %3355 = vmatprep.subr.mxu0 0.0
    %3356 = vmatpush1.msra.mxu0 0.0
    %3357 = vmatprep.subr.mxu0 0.0
    %3358 = vmatpush1.msra.mxu0 0.0
    %3359 = vmatprep.mubr.f32.mxu0 0.0
    %3360 = vmatmul.mubr.f32.gmra.mrb[0].mxu0 %v50
    %v3361 = vpop.f32.mrb[0].mxu0
    %v3362 = vadd.f32 0.0, %v3361
    %v3363 = vpop.f32.mrb[0].mxu0
    %3364 = vmatprep.mubr.f32.mxu0 0.0
    %3365 = vmatmul.mubr.f32.gmra.mrb[0].mxu0 %v53
    %v3366 = vpop.f32.mrb[0].mxu0
    %v3367 = vadd.f32 0.0, %v3366
    %v3368 = vpop.f32.mrb[0].mxu0
    %3369 = vmatprep.mubr.f32.mxu0 0.0
    %3370 = vmatmul.mubr.f32.gmra.mrb[0].mxu0 %v56
    %v3371 = vpop.f32.mrb[0].mxu0
    %v3372 = vadd.f32 0.0, %v3371
    %v3373 = vpop.f32.mrb[0].mxu0
    %3374 = vdwg.mxu0
    %v3375 = vadd.f32 %v3362, %v141
    %v3376 = vadd.f32 %v3367, %v146
    %v3377 = vmax.f32 %v3375, 0.0
    %v3378 = vmax.f32 %v3376, 0.0
    %3379 = vmatprep.subr.mxu0 0.0
    %3380 = vmatpush1.msra.mxu0 %v3377
    %3381 = vmatprep.subr.mxu0 0.0
    %3382 = vmatpush1.msra.mxu0 %v3378
    %3383 = vmatprep.subr.mxu0 0.0
    %3384 = vmatpush1.msra.mxu0 0.0
    %3385 = vmatprep.subr.mxu0 0.0
    %3386 = vmatpush1.msra.mxu0 0.0
    %3387 = vmatprep.subr.mxu0 0.0
    %3388 = vmatpush1.msra.mxu0 0.0
    %3389 = vmatprep.subr.mxu0 0.0
    %3390 = vmatpush1.msra.mxu0 0.0
    %3391 = vmatprep.subr.mxu0 0.0
    %3392 = vmatpush1.msra.mxu0 0.0
    %3393 = vmatprep.subr.mxu0 0.0
    %3394 = vmatpush1.msra.mxu0 0.0
    %3395 = vmatprep.subr.mxu0 0.0
    %3396 = vmatpush1.msra.mxu0 0.0
    %3397 = vmatprep.subr.mxu0 0.0
    %3398 = vmatpush1.msra.mxu0 0.0
    %3399 = vmatprep.subr.mxu0 0.0
    %3400 = vmatpush1.msra.mxu0 0.0
    %3401 = vmatprep.subr.mxu0 0.0
    %3402 = vmatpush1.msra.mxu0 0.0
    %3403 = vmatprep.subr.mxu0 0.0
    %3404 = vmatpush1.msra.mxu0 0.0
    %3405 = vmatprep.subr.mxu0 0.0
    %3406 = vmatpush1.msra.mxu0 0.0
    %3407 = vmatprep.subr.mxu0 0.0
    %3408 = vmatpush1.msra.mxu0 0.0
    %3409 = vmatprep.subr.mxu0 0.0
    %3410 = vmatpush1.msra.mxu0 0.0
    %3411 = vmatprep.subr.mxu0 0.0
    %3412 = vmatpush1.msra.mxu0 0.0
    %3413 = vmatprep.subr.mxu0 0.0
    %3414 = vmatpush1.msra.mxu0 0.0
    %3415 = vmatprep.subr.mxu0 0.0
    %3416 = vmatpush1.msra.mxu0 0.0
    %3417 = vmatprep.subr.mxu0 0.0
    %3418 = vmatpush1.msra.mxu0 0.0
    %3419 = vmatprep.subr.mxu0 0.0
    %3420 = vmatpush1.msra.mxu0 0.0
    %3421 = vmatprep.subr.mxu0 0.0
    %3422 = vmatpush1.msra.mxu0 0.0
    %3423 = vmatprep.subr.mxu0 0.0
    %3424 = vmatpush1.msra.mxu0 0.0
    %3425 = vmatprep.subr.mxu0 0.0
    %3426 = vmatpush1.msra.mxu0 0.0
    %3427 = vmatprep.subr.mxu0 0.0
    %3428 = vmatpush1.msra.mxu0 0.0
    %3429 = vmatprep.subr.mxu0 0.0
    %3430 = vmatpush1.msra.mxu0 0.0
    %3431 = vmatprep.subr.mxu0 0.0
    %3432 = vmatpush1.msra.mxu0 0.0
    %3433 = vmatprep.subr.mxu0 0.0
    %3434 = vmatpush1.msra.mxu0 0.0
    %3435 = vmatprep.subr.mxu0 0.0
    %3436 = vmatpush1.msra.mxu0 0.0
    %3437 = vmatprep.subr.mxu0 0.0
    %3438 = vmatpush1.msra.mxu0 0.0
    %3439 = vmatprep.subr.mxu0 0.0
    %3440 = vmatpush1.msra.mxu0 0.0
    %3441 = vmatprep.subr.mxu0 0.0
    %3442 = vmatpush1.msra.mxu0 0.0
    %3443 = vmatprep.mubr.f32.mxu0 0.0
    %3444 = vmatmul.mubr.f32.gmra.mrb[0].mxu0 %v154
    %v3445 = vpop.f32.mrb[0].mxu0
    %v3446 = vadd.f32 0.0, %v3445
    %v3447 = vpop.f32.mrb[0].mxu0
    %3448 = vdwg.mxu0
    %3449 = vst.msk [vmem:[#allocation2 + $0x13] sm:$0x1] %vm226, %v3446
    %3450 = vst.msk [vmem:[#allocation3 + $0x13] sm:$0x1] %vm226, %v3372
    %v3451 = vld [vmem:[%s905] sm:$0xf]
    %v3452 = vld [vmem:[%s905 + $0x4] sm:$0xf]
    %v3453 = vld [vmem:[%s905 + $0x8] sm:$0xf]
    %v3454 = vld [vmem:[%s905 + $0xc] sm:$0xf]
    %v3455 = vunpack.c.l.bf16 %v3451
    %v3456 = vunpack.c.l.bf16 %v3452
    %v3457 = vunpack.c.l.bf16 %v3453
    %v3458 = vunpack.c.l.bf16 %v3454
    %v3459 = vmul.f32 %v3111, %v3455
    %v3460 = vmul.f32 %v3112, %v3456
    %v3461 = vmul.f32 %v3113, %v3457
    %v3462 = vmul.f32 %v3114, %v3458
    %3463 = vmatprep.subr.mxu0 0.0
    %3464 = vmatpush1.msra.mxu0 %v3459
    %3465 = vmatprep.subr.mxu0 0.0
    %3466 = vmatpush1.msra.mxu0 %v3460
    %3467 = vmatprep.subr.mxu0 0.0
    %3468 = vmatpush1.msra.mxu0 %v3461
    %3469 = vmatprep.subr.mxu0 0.0
    %3470 = vmatpush1.msra.mxu0 %v3462
    %3471 = vmatprep.subr.mxu0 0.0
    %3472 = vmatpush1.msra.mxu0 0.0
    %3473 = vmatprep.subr.mxu0 0.0
    %3474 = vmatpush1.msra.mxu0 0.0
    %3475 = vmatprep.subr.mxu0 0.0
    %3476 = vmatpush1.msra.mxu0 0.0
    %3477 = vmatprep.subr.mxu0 0.0
    %3478 = vmatpush1.msra.mxu0 0.0
    %3479 = vmatprep.subr.mxu0 0.0
    %3480 = vmatpush1.msra.mxu0 0.0
    %3481 = vmatprep.subr.mxu0 0.0
    %3482 = vmatpush1.msra.mxu0 0.0
    %3483 = vmatprep.subr.mxu0 0.0
    %3484 = vmatpush1.msra.mxu0 0.0
    %3485 = vmatprep.subr.mxu0 0.0
    %3486 = vmatpush1.msra.mxu0 0.0
    %3487 = vmatprep.subr.mxu0 0.0
    %3488 = vmatpush1.msra.mxu0 0.0
    %3489 = vmatprep.subr.mxu0 0.0
    %3490 = vmatpush1.msra.mxu0 0.0
    %3491 = vmatprep.subr.mxu0 0.0
    %3492 = vmatpush1.msra.mxu0 0.0
    %3493 = vmatprep.subr.mxu0 0.0
    %3494 = vmatpush1.msra.mxu0 0.0
    %3495 = vmatprep.subr.mxu0 0.0
    %3496 = vmatpush1.msra.mxu0 0.0
    %3497 = vmatprep.subr.mxu0 0.0
    %3498 = vmatpush1.msra.mxu0 0.0
    %3499 = vmatprep.subr.mxu0 0.0
    %3500 = vmatpush1.msra.mxu0 0.0
    %3501 = vmatprep.subr.mxu0 0.0
    %3502 = vmatpush1.msra.mxu0 0.0
    %3503 = vmatprep.subr.mxu0 0.0
    %3504 = vmatpush1.msra.mxu0 0.0
    %3505 = vmatprep.subr.mxu0 0.0
    %3506 = vmatpush1.msra.mxu0 0.0
    %3507 = vmatprep.subr.mxu0 0.0
    %3508 = vmatpush1.msra.mxu0 0.0
    %3509 = vmatprep.subr.mxu0 0.0
    %3510 = vmatpush1.msra.mxu0 0.0
    %3511 = vmatprep.subr.mxu0 0.0
    %3512 = vmatpush1.msra.mxu0 0.0
    %3513 = vmatprep.subr.mxu0 0.0
    %3514 = vmatpush1.msra.mxu0 0.0
    %3515 = vmatprep.subr.mxu0 0.0
    %3516 = vmatpush1.msra.mxu0 0.0
    %3517 = vmatprep.subr.mxu0 0.0
    %3518 = vmatpush1.msra.mxu0 0.0
    %3519 = vmatprep.subr.mxu0 0.0
    %3520 = vmatpush1.msra.mxu0 0.0
    %3521 = vmatprep.subr.mxu0 0.0
    %3522 = vmatpush1.msra.mxu0 0.0
    %3523 = vmatprep.subr.mxu0 0.0
    %3524 = vmatpush1.msra.mxu0 0.0
    %3525 = vmatprep.subr.mxu0 0.0
    %3526 = vmatpush1.msra.mxu0 0.0
    %3527 = vmatprep.mubr.f32.mxu0 0.0
    %3528 = vmatmul.mubr.f32.gmra.mrb[0].mxu0 %v50
    %v3529 = vpop.f32.mrb[0].mxu0
    %v3530 = vadd.f32 0.0, %v3529
    %v3531 = vpop.f32.mrb[0].mxu0
    %3532 = vmatprep.mubr.f32.mxu0 0.0
    %3533 = vmatmul.mubr.f32.gmra.mrb[0].mxu0 %v53
    %v3534 = vpop.f32.mrb[0].mxu0
    %v3535 = vadd.f32 0.0, %v3534
    %v3536 = vpop.f32.mrb[0].mxu0
    %3537 = vmatprep.mubr.f32.mxu0 0.0
    %3538 = vmatmul.mubr.f32.gmra.mrb[0].mxu0 %v56
    %v3539 = vpop.f32.mrb[0].mxu0
    %v3540 = vadd.f32 0.0, %v3539
    %v3541 = vpop.f32.mrb[0].mxu0
    %3542 = vdwg.mxu0
    %v3543 = vadd.f32 %v3530, %v141
    %v3544 = vadd.f32 %v3535, %v146
    %v3545 = vmax.f32 %v3543, 0.0
    %v3546 = vmax.f32 %v3544, 0.0
    %3547 = vmatprep.subr.mxu0 0.0
    %3548 = vmatpush1.msra.mxu0 %v3545
    %3549 = vmatprep.subr.mxu0 0.0
    %3550 = vmatpush1.msra.mxu0 %v3546
    %3551 = vmatprep.subr.mxu0 0.0
    %3552 = vmatpush1.msra.mxu0 0.0
    %3553 = vmatprep.subr.mxu0 0.0
    %3554 = vmatpush1.msra.mxu0 0.0
    %3555 = vmatprep.subr.mxu0 0.0
    %3556 = vmatpush1.msra.mxu0 0.0
    %3557 = vmatprep.subr.mxu0 0.0
    %3558 = vmatpush1.msra.mxu0 0.0
    %3559 = vmatprep.subr.mxu0 0.0
    %3560 = vmatpush1.msra.mxu0 0.0
    %3561 = vmatprep.subr.mxu0 0.0
    %3562 = vmatpush1.msra.mxu0 0.0
    %3563 = vmatprep.subr.mxu0 0.0
    %3564 = vmatpush1.msra.mxu0 0.0
    %3565 = vmatprep.subr.mxu0 0.0
    %3566 = vmatpush1.msra.mxu0 0.0
    %3567 = vmatprep.subr.mxu0 0.0
    %3568 = vmatpush1.msra.mxu0 0.0
    %3569 = vmatprep.subr.mxu0 0.0
    %3570 = vmatpush1.msra.mxu0 0.0
    %3571 = vmatprep.subr.mxu0 0.0
    %3572 = vmatpush1.msra.mxu0 0.0
    %3573 = vmatprep.subr.mxu0 0.0
    %3574 = vmatpush1.msra.mxu0 0.0
    %3575 = vmatprep.subr.mxu0 0.0
    %3576 = vmatpush1.msra.mxu0 0.0
    %3577 = vmatprep.subr.mxu0 0.0
    %3578 = vmatpush1.msra.mxu0 0.0
    %3579 = vmatprep.subr.mxu0 0.0
    %3580 = vmatpush1.msra.mxu0 0.0
    %3581 = vmatprep.subr.mxu0 0.0
    %3582 = vmatpush1.msra.mxu0 0.0
    %3583 = vmatprep.subr.mxu0 0.0
    %3584 = vmatpush1.msra.mxu0 0.0
    %3585 = vmatprep.subr.mxu0 0.0
    %3586 = vmatpush1.msra.mxu0 0.0
    %3587 = vmatprep.subr.mxu0 0.0
    %3588 = vmatpush1.msra.mxu0 0.0
    %3589 = vmatprep.subr.mxu0 0.0
    %3590 = vmatpush1.msra.mxu0 0.0
    %3591 = vmatprep.subr.mxu0 0.0
    %3592 = vmatpush1.msra.mxu0 0.0
    %3593 = vmatprep.subr.mxu0 0.0
    %3594 = vmatpush1.msra.mxu0 0.0
    %3595 = vmatprep.subr.mxu0 0.0
    %3596 = vmatpush1.msra.mxu0 0.0
    %3597 = vmatprep.subr.mxu0 0.0
    %3598 = vmatpush1.msra.mxu0 0.0
    %3599 = vmatprep.subr.mxu0 0.0
    %3600 = vmatpush1.msra.mxu0 0.0
    %3601 = vmatprep.subr.mxu0 0.0
    %3602 = vmatpush1.msra.mxu0 0.0
    %3603 = vmatprep.subr.mxu0 0.0
    %3604 = vmatpush1.msra.mxu0 0.0
    %3605 = vmatprep.subr.mxu0 0.0
    %3606 = vmatpush1.msra.mxu0 0.0
    %3607 = vmatprep.subr.mxu0 0.0
    %3608 = vmatpush1.msra.mxu0 0.0
    %3609 = vmatprep.subr.mxu0 0.0
    %3610 = vmatpush1.msra.mxu0 0.0
    %3611 = vmatprep.mubr.f32.mxu0 0.0
    %3612 = vmatmul.mubr.f32.gmra.mrb[0].mxu0 %v154
    %v3613 = vpop.f32.mrb[0].mxu0
    %v3614 = vadd.f32 0.0, %v3613
    %v3615 = vpop.f32.mrb[0].mxu0
    %3616 = vdwg.mxu0
    %3617 = vst.msk [vmem:[#allocation2 + $0x14] sm:$0x1] %vm226, %v3614
    %3618 = vst.msk [vmem:[#allocation3 + $0x14] sm:$0x1] %vm226, %v3540
    %v3619 = vld [vmem:[%s1074] sm:$0xf]
    %v3620 = vld [vmem:[%s1074 + $0x4] sm:$0xf]
    %v3621 = vld [vmem:[%s1074 + $0x8] sm:$0xf]
    %v3622 = vld [vmem:[%s1074 + $0xc] sm:$0xf]
    %v3623 = vunpack.c.l.bf16 %v3619
    %v3624 = vunpack.c.l.bf16 %v3620
    %v3625 = vunpack.c.l.bf16 %v3621
    %v3626 = vunpack.c.l.bf16 %v3622
    %v3627 = vmul.f32 %v3111, %v3623
    %v3628 = vmul.f32 %v3112, %v3624
    %v3629 = vmul.f32 %v3113, %v3625
    %v3630 = vmul.f32 %v3114, %v3626
    %3631 = vmatprep.subr.mxu0 0.0
    %3632 = vmatpush1.msra.mxu0 %v3627
    %3633 = vmatprep.subr.mxu0 0.0
    %3634 = vmatpush1.msra.mxu0 %v3628
    %3635 = vmatprep.subr.mxu0 0.0
    %3636 = vmatpush1.msra.mxu0 %v3629
    %3637 = vmatprep.subr.mxu0 0.0
    %3638 = vmatpush1.msra.mxu0 %v3630
    %3639 = vmatprep.subr.mxu0 0.0
    %3640 = vmatpush1.msra.mxu0 0.0
    %3641 = vmatprep.subr.mxu0 0.0
    %3642 = vmatpush1.msra.mxu0 0.0
    %3643 = vmatprep.subr.mxu0 0.0
    %3644 = vmatpush1.msra.mxu0 0.0
    %3645 = vmatprep.subr.mxu0 0.0
    %3646 = vmatpush1.msra.mxu0 0.0
    %3647 = vmatprep.subr.mxu0 0.0
    %3648 = vmatpush1.msra.mxu0 0.0
    %3649 = vmatprep.subr.mxu0 0.0
    %3650 = vmatpush1.msra.mxu0 0.0
    %3651 = vmatprep.subr.mxu0 0.0
    %3652 = vmatpush1.msra.mxu0 0.0
    %3653 = vmatprep.subr.mxu0 0.0
    %3654 = vmatpush1.msra.mxu0 0.0
    %3655 = vmatprep.subr.mxu0 0.0
    %3656 = vmatpush1.msra.mxu0 0.0
    %3657 = vmatprep.subr.mxu0 0.0
    %3658 = vmatpush1.msra.mxu0 0.0
    %3659 = vmatprep.subr.mxu0 0.0
    %3660 = vmatpush1.msra.mxu0 0.0
    %3661 = vmatprep.subr.mxu0 0.0
    %3662 = vmatpush1.msra.mxu0 0.0
    %3663 = vmatprep.subr.mxu0 0.0
    %3664 = vmatpush1.msra.mxu0 0.0
    %3665 = vmatprep.subr.mxu0 0.0
    %3666 = vmatpush1.msra.mxu0 0.0
    %3667 = vmatprep.subr.mxu0 0.0
    %3668 = vmatpush1.msra.mxu0 0.0
    %3669 = vmatprep.subr.mxu0 0.0
    %3670 = vmatpush1.msra.mxu0 0.0
    %3671 = vmatprep.subr.mxu0 0.0
    %3672 = vmatpush1.msra.mxu0 0.0
    %3673 = vmatprep.subr.mxu0 0.0
    %3674 = vmatpush1.msra.mxu0 0.0
    %3675 = vmatprep.subr.mxu0 0.0
    %3676 = vmatpush1.msra.mxu0 0.0
    %3677 = vmatprep.subr.mxu0 0.0
    %3678 = vmatpush1.msra.mxu0 0.0
    %3679 = vmatprep.subr.mxu0 0.0
    %3680 = vmatpush1.msra.mxu0 0.0
    %3681 = vmatprep.subr.mxu0 0.0
    %3682 = vmatpush1.msra.mxu0 0.0
    %3683 = vmatprep.subr.mxu0 0.0
    %3684 = vmatpush1.msra.mxu0 0.0
    %3685 = vmatprep.subr.mxu0 0.0
    %3686 = vmatpush1.msra.mxu0 0.0
    %3687 = vmatprep.subr.mxu0 0.0
    %3688 = vmatpush1.msra.mxu0 0.0
    %3689 = vmatprep.subr.mxu0 0.0
    %3690 = vmatpush1.msra.mxu0 0.0
    %3691 = vmatprep.subr.mxu0 0.0
    %3692 = vmatpush1.msra.mxu0 0.0
    %3693 = vmatprep.subr.mxu0 0.0
    %3694 = vmatpush1.msra.mxu0 0.0
    %3695 = vmatprep.mubr.f32.mxu0 0.0
    %3696 = vmatmul.mubr.f32.gmra.mrb[0].mxu0 %v50
    %v3697 = vpop.f32.mrb[0].mxu0
    %v3698 = vadd.f32 0.0, %v3697
    %v3699 = vpop.f32.mrb[0].mxu0
    %3700 = vmatprep.mubr.f32.mxu0 0.0
    %3701 = vmatmul.mubr.f32.gmra.mrb[0].mxu0 %v53
    %v3702 = vpop.f32.mrb[0].mxu0
    %v3703 = vadd.f32 0.0, %v3702
    %v3704 = vpop.f32.mrb[0].mxu0
    %3705 = vmatprep.mubr.f32.mxu0 0.0
    %3706 = vmatmul.mubr.f32.gmra.mrb[0].mxu0 %v56
    %v3707 = vpop.f32.mrb[0].mxu0
    %v3708 = vadd.f32 0.0, %v3707
    %v3709 = vpop.f32.mrb[0].mxu0
    %3710 = vdwg.mxu0
    %v3711 = vadd.f32 %v3698, %v141
    %v3712 = vadd.f32 %v3703, %v146
    %v3713 = vmax.f32 %v3711, 0.0
    %v3714 = vmax.f32 %v3712, 0.0
    %3715 = vmatprep.subr.mxu0 0.0
    %3716 = vmatpush1.msra.mxu0 %v3713
    %3717 = vmatprep.subr.mxu0 0.0
    %3718 = vmatpush1.msra.mxu0 %v3714
    %3719 = vmatprep.subr.mxu0 0.0
    %3720 = vmatpush1.msra.mxu0 0.0
    %3721 = vmatprep.subr.mxu0 0.0
    %3722 = vmatpush1.msra.mxu0 0.0
    %3723 = vmatprep.subr.mxu0 0.0
    %3724 = vmatpush1.msra.mxu0 0.0
    %3725 = vmatprep.subr.mxu0 0.0
    %3726 = vmatpush1.msra.mxu0 0.0
    %3727 = vmatprep.subr.mxu0 0.0
    %3728 = vmatpush1.msra.mxu0 0.0
    %3729 = vmatprep.subr.mxu0 0.0
    %3730 = vmatpush1.msra.mxu0 0.0
    %3731 = vmatprep.subr.mxu0 0.0
    %3732 = vmatpush1.msra.mxu0 0.0
    %3733 = vmatprep.subr.mxu0 0.0
    %3734 = vmatpush1.msra.mxu0 0.0
    %3735 = vmatprep.subr.mxu0 0.0
    %3736 = vmatpush1.msra.mxu0 0.0
    %3737 = vmatprep.subr.mxu0 0.0
    %3738 = vmatpush1.msra.mxu0 0.0
    %3739 = vmatprep.subr.mxu0 0.0
    %3740 = vmatpush1.msra.mxu0 0.0
    %3741 = vmatprep.subr.mxu0 0.0
    %3742 = vmatpush1.msra.mxu0 0.0
    %3743 = vmatprep.subr.mxu0 0.0
    %3744 = vmatpush1.msra.mxu0 0.0
    %3745 = vmatprep.subr.mxu0 0.0
    %3746 = vmatpush1.msra.mxu0 0.0
    %3747 = vmatprep.subr.mxu0 0.0
    %3748 = vmatpush1.msra.mxu0 0.0
    %3749 = vmatprep.subr.mxu0 0.0
    %3750 = vmatpush1.msra.mxu0 0.0
    %3751 = vmatprep.subr.mxu0 0.0
    %3752 = vmatpush1.msra.mxu0 0.0
    %3753 = vmatprep.subr.mxu0 0.0
    %3754 = vmatpush1.msra.mxu0 0.0
    %3755 = vmatprep.subr.mxu0 0.0
    %3756 = vmatpush1.msra.mxu0 0.0
    %3757 = vmatprep.subr.mxu0 0.0
    %3758 = vmatpush1.msra.mxu0 0.0
    %3759 = vmatprep.subr.mxu0 0.0
    %3760 = vmatpush1.msra.mxu0 0.0
    %3761 = vmatprep.subr.mxu0 0.0
    %3762 = vmatpush1.msra.mxu0 0.0
    %3763 = vmatprep.subr.mxu0 0.0
    %3764 = vmatpush1.msra.mxu0 0.0
    %3765 = vmatprep.subr.mxu0 0.0
    %3766 = vmatpush1.msra.mxu0 0.0
    %3767 = vmatprep.subr.mxu0 0.0
    %3768 = vmatpush1.msra.mxu0 0.0
    %3769 = vmatprep.subr.mxu0 0.0
    %3770 = vmatpush1.msra.mxu0 0.0
    %3771 = vmatprep.subr.mxu0 0.0
    %3772 = vmatpush1.msra.mxu0 0.0
    %3773 = vmatprep.subr.mxu0 0.0
    %3774 = vmatpush1.msra.mxu0 0.0
    %3775 = vmatprep.subr.mxu0 0.0
    %3776 = vmatpush1.msra.mxu0 0.0
    %3777 = vmatprep.subr.mxu0 0.0
    %3778 = vmatpush1.msra.mxu0 0.0
    %3779 = vmatprep.mubr.f32.mxu0 0.0
    %3780 = vmatmul.mubr.f32.gmra.mrb[0].mxu0 %v154
    %v3781 = vpop.f32.mrb[0].mxu0
    %v3782 = vadd.f32 0.0, %v3781
    %v3783 = vpop.f32.mrb[0].mxu0
    %3784 = vdwg.mxu0
    %3785 = vst.msk [vmem:[#allocation2 + $0x15] sm:$0x1] %vm226, %v3782
    %3786 = vst.msk [vmem:[#allocation3 + $0x15] sm:$0x1] %vm226, %v3708
    %v3787 = vld [vmem:[%s567] sm:$0xf]
    %v3788 = vld [vmem:[%s567 + $0x4] sm:$0xf]
    %v3789 = vld [vmem:[%s567 + $0x8] sm:$0xf]
    %v3790 = vld [vmem:[%s567 + $0xc] sm:$0xf]
    %v3791 = vunpack.c.l.bf16 %v3787
    %v3792 = vunpack.c.l.bf16 %v3788
    %v3793 = vunpack.c.l.bf16 %v3789
    %v3794 = vunpack.c.l.bf16 %v3790
    %v3795 = vld [vmem:[%s736] sm:$0xf]
    %v3796 = vld [vmem:[%s736 + $0x4] sm:$0xf]
    %v3797 = vld [vmem:[%s736 + $0x8] sm:$0xf]
    %v3798 = vld [vmem:[%s736 + $0xc] sm:$0xf]
    %v3799 = vunpack.c.l.bf16 %v3795
    %v3800 = vunpack.c.l.bf16 %v3796
    %v3801 = vunpack.c.l.bf16 %v3797
    %v3802 = vunpack.c.l.bf16 %v3798
    %v3803 = vmul.f32 %v3791, %v3799
    %v3804 = vmul.f32 %v3792, %v3800
    %v3805 = vmul.f32 %v3793, %v3801
    %v3806 = vmul.f32 %v3794, %v3802
    %3807 = vmatprep.subr.mxu0 0.0
    %3808 = vmatpush1.msra.mxu0 %v3803
    %3809 = vmatprep.subr.mxu0 0.0
    %3810 = vmatpush1.msra.mxu0 %v3804
    %3811 = vmatprep.subr.mxu0 0.0
    %3812 = vmatpush1.msra.mxu0 %v3805
    %3813 = vmatprep.subr.mxu0 0.0
    %3814 = vmatpush1.msra.mxu0 %v3806
    %3815 = vmatprep.subr.mxu0 0.0
    %3816 = vmatpush1.msra.mxu0 0.0
    %3817 = vmatprep.subr.mxu0 0.0
    %3818 = vmatpush1.msra.mxu0 0.0
    %3819 = vmatprep.subr.mxu0 0.0
    %3820 = vmatpush1.msra.mxu0 0.0
    %3821 = vmatprep.subr.mxu0 0.0
    %3822 = vmatpush1.msra.mxu0 0.0
    %3823 = vmatprep.subr.mxu0 0.0
    %3824 = vmatpush1.msra.mxu0 0.0
    %3825 = vmatprep.subr.mxu0 0.0
    %3826 = vmatpush1.msra.mxu0 0.0
    %3827 = vmatprep.subr.mxu0 0.0
    %3828 = vmatpush1.msra.mxu0 0.0
    %3829 = vmatprep.subr.mxu0 0.0
    %3830 = vmatpush1.msra.mxu0 0.0
    %3831 = vmatprep.subr.mxu0 0.0
    %3832 = vmatpush1.msra.mxu0 0.0
    %3833 = vmatprep.subr.mxu0 0.0
    %3834 = vmatpush1.msra.mxu0 0.0
    %3835 = vmatprep.subr.mxu0 0.0
    %3836 = vmatpush1.msra.mxu0 0.0
    %3837 = vmatprep.subr.mxu0 0.0
    %3838 = vmatpush1.msra.mxu0 0.0
    %3839 = vmatprep.subr.mxu0 0.0
    %3840 = vmatpush1.msra.mxu0 0.0
    %3841 = vmatprep.subr.mxu0 0.0
    %3842 = vmatpush1.msra.mxu0 0.0
    %3843 = vmatprep.subr.mxu0 0.0
    %3844 = vmatpush1.msra.mxu0 0.0
    %3845 = vmatprep.subr.mxu0 0.0
    %3846 = vmatpush1.msra.mxu0 0.0
    %3847 = vmatprep.subr.mxu0 0.0
    %3848 = vmatpush1.msra.mxu0 0.0
    %3849 = vmatprep.subr.mxu0 0.0
    %3850 = vmatpush1.msra.mxu0 0.0
    %3851 = vmatprep.subr.mxu0 0.0
    %3852 = vmatpush1.msra.mxu0 0.0
    %3853 = vmatprep.subr.mxu0 0.0
    %3854 = vmatpush1.msra.mxu0 0.0
    %3855 = vmatprep.subr.mxu0 0.0
    %3856 = vmatpush1.msra.mxu0 0.0
    %3857 = vmatprep.subr.mxu0 0.0
    %3858 = vmatpush1.msra.mxu0 0.0
    %3859 = vmatprep.subr.mxu0 0.0
    %3860 = vmatpush1.msra.mxu0 0.0
    %3861 = vmatprep.subr.mxu0 0.0
    %3862 = vmatpush1.msra.mxu0 0.0
    %3863 = vmatprep.subr.mxu0 0.0
    %3864 = vmatpush1.msra.mxu0 0.0
    %3865 = vmatprep.subr.mxu0 0.0
    %3866 = vmatpush1.msra.mxu0 0.0
    %3867 = vmatprep.subr.mxu0 0.0
    %3868 = vmatpush1.msra.mxu0 0.0
    %3869 = vmatprep.subr.mxu0 0.0
    %3870 = vmatpush1.msra.mxu0 0.0
    %3871 = vmatprep.mubr.f32.mxu0 0.0
    %3872 = vmatmul.mubr.f32.gmra.mrb[0].mxu0 %v50
    %v3873 = vpop.f32.mrb[0].mxu0
    %v3874 = vadd.f32 0.0, %v3873
    %v3875 = vpop.f32.mrb[0].mxu0
    %3876 = vmatprep.mubr.f32.mxu0 0.0
    %3877 = vmatmul.mubr.f32.gmra.mrb[0].mxu0 %v53
    %v3878 = vpop.f32.mrb[0].mxu0
    %v3879 = vadd.f32 0.0, %v3878
    %v3880 = vpop.f32.mrb[0].mxu0
    %3881 = vmatprep.mubr.f32.mxu0 0.0
    %3882 = vmatmul.mubr.f32.gmra.mrb[0].mxu0 %v56
    %v3883 = vpop.f32.mrb[0].mxu0
    %v3884 = vadd.f32 0.0, %v3883
    %v3885 = vpop.f32.mrb[0].mxu0
    %3886 = vdwg.mxu0
    %v3887 = vadd.f32 %v3874, %v141
    %v3888 = vadd.f32 %v3879, %v146
    %v3889 = vmax.f32 %v3887, 0.0
    %v3890 = vmax.f32 %v3888, 0.0
    %3891 = vmatprep.subr.mxu0 0.0
    %3892 = vmatpush1.msra.mxu0 %v3889
    %3893 = vmatprep.subr.mxu0 0.0
    %3894 = vmatpush1.msra.mxu0 %v3890
    %3895 = vmatprep.subr.mxu0 0.0
    %3896 = vmatpush1.msra.mxu0 0.0
    %3897 = vmatprep.subr.mxu0 0.0
    %3898 = vmatpush1.msra.mxu0 0.0
    %3899 = vmatprep.subr.mxu0 0.0
    %3900 = vmatpush1.msra.mxu0 0.0
    %3901 = vmatprep.subr.mxu0 0.0
    %3902 = vmatpush1.msra.mxu0 0.0
    %3903 = vmatprep.subr.mxu0 0.0
    %3904 = vmatpush1.msra.mxu0 0.0
    %3905 = vmatprep.subr.mxu0 0.0
    %3906 = vmatpush1.msra.mxu0 0.0
    %3907 = vmatprep.subr.mxu0 0.0
    %3908 = vmatpush1.msra.mxu0 0.0
    %3909 = vmatprep.subr.mxu0 0.0
    %3910 = vmatpush1.msra.mxu0 0.0
    %3911 = vmatprep.subr.mxu0 0.0
    %3912 = vmatpush1.msra.mxu0 0.0
    %3913 = vmatprep.subr.mxu0 0.0
    %3914 = vmatpush1.msra.mxu0 0.0
    %3915 = vmatprep.subr.mxu0 0.0
    %3916 = vmatpush1.msra.mxu0 0.0
    %3917 = vmatprep.subr.mxu0 0.0
    %3918 = vmatpush1.msra.mxu0 0.0
    %3919 = vmatprep.subr.mxu0 0.0
    %3920 = vmatpush1.msra.mxu0 0.0
    %3921 = vmatprep.subr.mxu0 0.0
    %3922 = vmatpush1.msra.mxu0 0.0
    %3923 = vmatprep.subr.mxu0 0.0
    %3924 = vmatpush1.msra.mxu0 0.0
    %3925 = vmatprep.subr.mxu0 0.0
    %3926 = vmatpush1.msra.mxu0 0.0
    %3927 = vmatprep.subr.mxu0 0.0
    %3928 = vmatpush1.msra.mxu0 0.0
    %3929 = vmatprep.subr.mxu0 0.0
    %3930 = vmatpush1.msra.mxu0 0.0
    %3931 = vmatprep.subr.mxu0 0.0
    %3932 = vmatpush1.msra.mxu0 0.0
    %3933 = vmatprep.subr.mxu0 0.0
    %3934 = vmatpush1.msra.mxu0 0.0
    %3935 = vmatprep.subr.mxu0 0.0
    %3936 = vmatpush1.msra.mxu0 0.0
    %3937 = vmatprep.subr.mxu0 0.0
    %3938 = vmatpush1.msra.mxu0 0.0
    %3939 = vmatprep.subr.mxu0 0.0
    %3940 = vmatpush1.msra.mxu0 0.0
    %3941 = vmatprep.subr.mxu0 0.0
    %3942 = vmatpush1.msra.mxu0 0.0
    %3943 = vmatprep.subr.mxu0 0.0
    %3944 = vmatpush1.msra.mxu0 0.0
    %3945 = vmatprep.subr.mxu0 0.0
    %3946 = vmatpush1.msra.mxu0 0.0
    %3947 = vmatprep.subr.mxu0 0.0
    %3948 = vmatpush1.msra.mxu0 0.0
    %3949 = vmatprep.subr.mxu0 0.0
    %3950 = vmatpush1.msra.mxu0 0.0
    %3951 = vmatprep.subr.mxu0 0.0
    %3952 = vmatpush1.msra.mxu0 0.0
    %3953 = vmatprep.subr.mxu0 0.0
    %3954 = vmatpush1.msra.mxu0 0.0
    %3955 = vmatprep.mubr.f32.mxu0 0.0
    %3956 = vmatmul.mubr.f32.gmra.mrb[0].mxu0 %v154
    %v3957 = vpop.f32.mrb[0].mxu0
    %v3958 = vadd.f32 0.0, %v3957
    %v3959 = vpop.f32.mrb[0].mxu0
    %3960 = vdwg.mxu0
    %3961 = vst.msk [vmem:[#allocation2 + $0x16] sm:$0x1] %vm226, %v3958
    %3962 = vst.msk [vmem:[#allocation3 + $0x16] sm:$0x1] %vm226, %v3884
    %v3963 = vld [vmem:[%s905] sm:$0xf]
    %v3964 = vld [vmem:[%s905 + $0x4] sm:$0xf]
    %v3965 = vld [vmem:[%s905 + $0x8] sm:$0xf]
    %v3966 = vld [vmem:[%s905 + $0xc] sm:$0xf]
    %v3967 = vunpack.c.l.bf16 %v3963
    %v3968 = vunpack.c.l.bf16 %v3964
    %v3969 = vunpack.c.l.bf16 %v3965
    %v3970 = vunpack.c.l.bf16 %v3966
    %v3971 = vmul.f32 %v3791, %v3967
    %v3972 = vmul.f32 %v3792, %v3968
    %v3973 = vmul.f32 %v3793, %v3969
    %v3974 = vmul.f32 %v3794, %v3970
    %3975 = vmatprep.subr.mxu0 0.0
    %3976 = vmatpush1.msra.mxu0 %v3971
    %3977 = vmatprep.subr.mxu0 0.0
    %3978 = vmatpush1.msra.mxu0 %v3972
    %3979 = vmatprep.subr.mxu0 0.0
    %3980 = vmatpush1.msra.mxu0 %v3973
    %3981 = vmatprep.subr.mxu0 0.0
    %3982 = vmatpush1.msra.mxu0 %v3974
    %3983 = vmatprep.subr.mxu0 0.0
    %3984 = vmatpush1.msra.mxu0 0.0
    %3985 = vmatprep.subr.mxu0 0.0
    %3986 = vmatpush1.msra.mxu0 0.0
    %3987 = vmatprep.subr.mxu0 0.0
    %3988 = vmatpush1.msra.mxu0 0.0
    %3989 = vmatprep.subr.mxu0 0.0
    %3990 = vmatpush1.msra.mxu0 0.0
    %3991 = vmatprep.subr.mxu0 0.0
    %3992 = vmatpush1.msra.mxu0 0.0
    %3993 = vmatprep.subr.mxu0 0.0
    %3994 = vmatpush1.msra.mxu0 0.0
    %3995 = vmatprep.subr.mxu0 0.0
    %3996 = vmatpush1.msra.mxu0 0.0
    %3997 = vmatprep.subr.mxu0 0.0
    %3998 = vmatpush1.msra.mxu0 0.0
    %3999 = vmatprep.subr.mxu0 0.0
    %4000 = vmatpush1.msra.mxu0 0.0
    %4001 = vmatprep.subr.mxu0 0.0
    %4002 = vmatpush1.msra.mxu0 0.0
    %4003 = vmatprep.subr.mxu0 0.0
    %4004 = vmatpush1.msra.mxu0 0.0
    %4005 = vmatprep.subr.mxu0 0.0
    %4006 = vmatpush1.msra.mxu0 0.0
    %4007 = vmatprep.subr.mxu0 0.0
    %4008 = vmatpush1.msra.mxu0 0.0
    %4009 = vmatprep.subr.mxu0 0.0
    %4010 = vmatpush1.msra.mxu0 0.0
    %4011 = vmatprep.subr.mxu0 0.0
    %4012 = vmatpush1.msra.mxu0 0.0
    %4013 = vmatprep.subr.mxu0 0.0
    %4014 = vmatpush1.msra.mxu0 0.0
    %4015 = vmatprep.subr.mxu0 0.0
    %4016 = vmatpush1.msra.mxu0 0.0
    %4017 = vmatprep.subr.mxu0 0.0
    %4018 = vmatpush1.msra.mxu0 0.0
    %4019 = vmatprep.subr.mxu0 0.0
    %4020 = vmatpush1.msra.mxu0 0.0
    %4021 = vmatprep.subr.mxu0 0.0
    %4022 = vmatpush1.msra.mxu0 0.0
    %4023 = vmatprep.subr.mxu0 0.0
    %4024 = vmatpush1.msra.mxu0 0.0
    %4025 = vmatprep.subr.mxu0 0.0
    %4026 = vmatpush1.msra.mxu0 0.0
    %4027 = vmatprep.subr.mxu0 0.0
    %4028 = vmatpush1.msra.mxu0 0.0
    %4029 = vmatprep.subr.mxu0 0.0
    %4030 = vmatpush1.msra.mxu0 0.0
    %4031 = vmatprep.subr.mxu0 0.0
    %4032 = vmatpush1.msra.mxu0 0.0
    %4033 = vmatprep.subr.mxu0 0.0
    %4034 = vmatpush1.msra.mxu0 0.0
    %4035 = vmatprep.subr.mxu0 0.0
    %4036 = vmatpush1.msra.mxu0 0.0
    %4037 = vmatprep.subr.mxu0 0.0
    %4038 = vmatpush1.msra.mxu0 0.0
    %4039 = vmatprep.mubr.f32.mxu0 0.0
    %4040 = vmatmul.mubr.f32.gmra.mrb[0].mxu0 %v50
    %v4041 = vpop.f32.mrb[0].mxu0
    %v4042 = vadd.f32 0.0, %v4041
    %v4043 = vpop.f32.mrb[0].mxu0
    %4044 = vmatprep.mubr.f32.mxu0 0.0
    %4045 = vmatmul.mubr.f32.gmra.mrb[0].mxu0 %v53
    %v4046 = vpop.f32.mrb[0].mxu0
    %v4047 = vadd.f32 0.0, %v4046
    %v4048 = vpop.f32.mrb[0].mxu0
    %4049 = vmatprep.mubr.f32.mxu0 0.0
    %4050 = vmatmul.mubr.f32.gmra.mrb[0].mxu0 %v56
    %v4051 = vpop.f32.mrb[0].mxu0
    %v4052 = vadd.f32 0.0, %v4051
    %v4053 = vpop.f32.mrb[0].mxu0
    %4054 = vdwg.mxu0
    %v4055 = vadd.f32 %v4042, %v141
    %v4056 = vadd.f32 %v4047, %v146
    %v4057 = vmax.f32 %v4055, 0.0
    %v4058 = vmax.f32 %v4056, 0.0
    %4059 = vmatprep.subr.mxu0 0.0
    %4060 = vmatpush1.msra.mxu0 %v4057
    %4061 = vmatprep.subr.mxu0 0.0
    %4062 = vmatpush1.msra.mxu0 %v4058
    %4063 = vmatprep.subr.mxu0 0.0
    %4064 = vmatpush1.msra.mxu0 0.0
    %4065 = vmatprep.subr.mxu0 0.0
    %4066 = vmatpush1.msra.mxu0 0.0
    %4067 = vmatprep.subr.mxu0 0.0
    %4068 = vmatpush1.msra.mxu0 0.0
    %4069 = vmatprep.subr.mxu0 0.0
    %4070 = vmatpush1.msra.mxu0 0.0
    %4071 = vmatprep.subr.mxu0 0.0
    %4072 = vmatpush1.msra.mxu0 0.0
    %4073 = vmatprep.subr.mxu0 0.0
    %4074 = vmatpush1.msra.mxu0 0.0
    %4075 = vmatprep.subr.mxu0 0.0
    %4076 = vmatpush1.msra.mxu0 0.0
    %4077 = vmatprep.subr.mxu0 0.0
    %4078 = vmatpush1.msra.mxu0 0.0
    %4079 = vmatprep.subr.mxu0 0.0
    %4080 = vmatpush1.msra.mxu0 0.0
    %4081 = vmatprep.subr.mxu0 0.0
    %4082 = vmatpush1.msra.mxu0 0.0
    %4083 = vmatprep.subr.mxu0 0.0
    %4084 = vmatpush1.msra.mxu0 0.0
    %4085 = vmatprep.subr.mxu0 0.0
    %4086 = vmatpush1.msra.mxu0 0.0
    %4087 = vmatprep.subr.mxu0 0.0
    %4088 = vmatpush1.msra.mxu0 0.0
    %4089 = vmatprep.subr.mxu0 0.0
    %4090 = vmatpush1.msra.mxu0 0.0
    %4091 = vmatprep.subr.mxu0 0.0
    %4092 = vmatpush1.msra.mxu0 0.0
    %4093 = vmatprep.subr.mxu0 0.0
    %4094 = vmatpush1.msra.mxu0 0.0
    %4095 = vmatprep.subr.mxu0 0.0
    %4096 = vmatpush1.msra.mxu0 0.0
    %4097 = vmatprep.subr.mxu0 0.0
    %4098 = vmatpush1.msra.mxu0 0.0
    %4099 = vmatprep.subr.mxu0 0.0
    %4100 = vmatpush1.msra.mxu0 0.0
    %4101 = vmatprep.subr.mxu0 0.0
    %4102 = vmatpush1.msra.mxu0 0.0
    %4103 = vmatprep.subr.mxu0 0.0
    %4104 = vmatpush1.msra.mxu0 0.0
    %4105 = vmatprep.subr.mxu0 0.0
    %4106 = vmatpush1.msra.mxu0 0.0
    %4107 = vmatprep.subr.mxu0 0.0
    %4108 = vmatpush1.msra.mxu0 0.0
    %4109 = vmatprep.subr.mxu0 0.0
    %4110 = vmatpush1.msra.mxu0 0.0
    %4111 = vmatprep.subr.mxu0 0.0
    %4112 = vmatpush1.msra.mxu0 0.0
    %4113 = vmatprep.subr.mxu0 0.0
    %4114 = vmatpush1.msra.mxu0 0.0
    %4115 = vmatprep.subr.mxu0 0.0
    %4116 = vmatpush1.msra.mxu0 0.0
    %4117 = vmatprep.subr.mxu0 0.0
    %4118 = vmatpush1.msra.mxu0 0.0
    %4119 = vmatprep.subr.mxu0 0.0
    %4120 = vmatpush1.msra.mxu0 0.0
    %4121 = vmatprep.subr.mxu0 0.0
    %4122 = vmatpush1.msra.mxu0 0.0
    %4123 = vmatprep.mubr.f32.mxu0 0.0
    %4124 = vmatmul.mubr.f32.gmra.mrb[0].mxu0 %v154
    %v4125 = vpop.f32.mrb[0].mxu0
    %v4126 = vadd.f32 0.0, %v4125
    %v4127 = vpop.f32.mrb[0].mxu0
    %4128 = vdwg.mxu0
    %4129 = vst.msk [vmem:[#allocation2 + $0x17] sm:$0x1] %vm226, %v4126
    %4130 = vst.msk [vmem:[#allocation3 + $0x17] sm:$0x1] %vm226, %v4052
    %v4131 = vld [vmem:[%s1074] sm:$0xf]
    %v4132 = vld [vmem:[%s1074 + $0x4] sm:$0xf]
    %v4133 = vld [vmem:[%s1074 + $0x8] sm:$0xf]
    %v4134 = vld [vmem:[%s1074 + $0xc] sm:$0xf]
    %v4135 = vunpack.c.l.bf16 %v4131
    %v4136 = vunpack.c.l.bf16 %v4132
    %v4137 = vunpack.c.l.bf16 %v4133
    %v4138 = vunpack.c.l.bf16 %v4134
    %v4139 = vmul.f32 %v3791, %v4135
    %v4140 = vmul.f32 %v3792, %v4136
    %v4141 = vmul.f32 %v3793, %v4137
    %v4142 = vmul.f32 %v3794, %v4138
    %4143 = vmatprep.subr.mxu0 0.0
    %4144 = vmatpush1.msra.mxu0 %v4139
    %4145 = vmatprep.subr.mxu0 0.0
    %4146 = vmatpush1.msra.mxu0 %v4140
    %4147 = vmatprep.subr.mxu0 0.0
    %4148 = vmatpush1.msra.mxu0 %v4141
    %4149 = vmatprep.subr.mxu0 0.0
    %4150 = vmatpush1.msra.mxu0 %v4142
    %4151 = vmatprep.subr.mxu0 0.0
    %4152 = vmatpush1.msra.mxu0 0.0
    %4153 = vmatprep.subr.mxu0 0.0
    %4154 = vmatpush1.msra.mxu0 0.0
    %4155 = vmatprep.subr.mxu0 0.0
    %4156 = vmatpush1.msra.mxu0 0.0
    %4157 = vmatprep.subr.mxu0 0.0
    %4158 = vmatpush1.msra.mxu0 0.0
    %4159 = vmatprep.subr.mxu0 0.0
    %4160 = vmatpush1.msra.mxu0 0.0
    %4161 = vmatprep.subr.mxu0 0.0
    %4162 = vmatpush1.msra.mxu0 0.0
    %4163 = vmatprep.subr.mxu0 0.0
    %4164 = vmatpush1.msra.mxu0 0.0
    %4165 = vmatprep.subr.mxu0 0.0
    %4166 = vmatpush1.msra.mxu0 0.0
    %4167 = vmatprep.subr.mxu0 0.0
    %4168 = vmatpush1.msra.mxu0 0.0
    %4169 = vmatprep.subr.mxu0 0.0
    %4170 = vmatpush1.msra.mxu0 0.0
    %4171 = vmatprep.subr.mxu0 0.0
    %4172 = vmatpush1.msra.mxu0 0.0
    %4173 = vmatprep.subr.mxu0 0.0
    %4174 = vmatpush1.msra.mxu0 0.0
    %4175 = vmatprep.subr.mxu0 0.0
    %4176 = vmatpush1.msra.mxu0 0.0
    %4177 = vmatprep.subr.mxu0 0.0
    %4178 = vmatpush1.msra.mxu0 0.0
    %4179 = vmatprep.subr.mxu0 0.0
    %4180 = vmatpush1.msra.mxu0 0.0
    %4181 = vmatprep.subr.mxu0 0.0
    %4182 = vmatpush1.msra.mxu0 0.0
    %4183 = vmatprep.subr.mxu0 0.0
    %4184 = vmatpush1.msra.mxu0 0.0
    %4185 = vmatprep.subr.mxu0 0.0
    %4186 = vmatpush1.msra.mxu0 0.0
    %4187 = vmatprep.subr.mxu0 0.0
    %4188 = vmatpush1.msra.mxu0 0.0
    %4189 = vmatprep.subr.mxu0 0.0
    %4190 = vmatpush1.msra.mxu0 0.0
    %4191 = vmatprep.subr.mxu0 0.0
    %4192 = vmatpush1.msra.mxu0 0.0
    %4193 = vmatprep.subr.mxu0 0.0
    %4194 = vmatpush1.msra.mxu0 0.0
    %4195 = vmatprep.subr.mxu0 0.0
    %4196 = vmatpush1.msra.mxu0 0.0
    %4197 = vmatprep.subr.mxu0 0.0
    %4198 = vmatpush1.msra.mxu0 0.0
    %4199 = vmatprep.subr.mxu0 0.0
    %4200 = vmatpush1.msra.mxu0 0.0
    %4201 = vmatprep.subr.mxu0 0.0
    %4202 = vmatpush1.msra.mxu0 0.0
    %4203 = vmatprep.subr.mxu0 0.0
    %4204 = vmatpush1.msra.mxu0 0.0
    %4205 = vmatprep.subr.mxu0 0.0
    %4206 = vmatpush1.msra.mxu0 0.0
    %4207 = vmatprep.mubr.f32.mxu0 0.0
    %4208 = vmatmul.mubr.f32.gmra.mrb[0].mxu0 %v50
    %v4209 = vpop.f32.mrb[0].mxu0
    %v4210 = vadd.f32 0.0, %v4209
    %v4211 = vpop.f32.mrb[0].mxu0
    %4212 = vmatprep.mubr.f32.mxu0 0.0
    %4213 = vmatmul.mubr.f32.gmra.mrb[0].mxu0 %v53
    %v4214 = vpop.f32.mrb[0].mxu0
    %v4215 = vadd.f32 0.0, %v4214
    %v4216 = vpop.f32.mrb[0].mxu0
    %4217 = vmatprep.mubr.f32.mxu0 0.0
    %4218 = vmatmul.mubr.f32.gmra.mrb[0].mxu0 %v56
    %v4219 = vpop.f32.mrb[0].mxu0
    %v4220 = vadd.f32 0.0, %v4219
    %v4221 = vpop.f32.mrb[0].mxu0
    %4222 = vdwg.mxu0
    %v4223 = vadd.f32 %v4210, %v141
    %v4224 = vadd.f32 %v4215, %v146
    %v4225 = vmax.f32 %v4223, 0.0
    %v4226 = vmax.f32 %v4224, 0.0
    %4227 = vmatprep.subr.mxu0 0.0
    %4228 = vmatpush1.msra.mxu0 %v4225
    %4229 = vmatprep.subr.mxu0 0.0
    %4230 = vmatpush1.msra.mxu0 %v4226
    %4231 = vmatprep.subr.mxu0 0.0
    %4232 = vmatpush1.msra.mxu0 0.0
    %4233 = vmatprep.subr.mxu0 0.0
    %4234 = vmatpush1.msra.mxu0 0.0
    %4235 = vmatprep.subr.mxu0 0.0
    %4236 = vmatpush1.msra.mxu0 0.0
    %4237 = vmatprep.subr.mxu0 0.0
    %4238 = vmatpush1.msra.mxu0 0.0
    %4239 = vmatprep.subr.mxu0 0.0
    %4240 = vmatpush1.msra.mxu0 0.0
    %4241 = vmatprep.subr.mxu0 0.0
    %4242 = vmatpush1.msra.mxu0 0.0
    %4243 = vmatprep.subr.mxu0 0.0
    %4244 = vmatpush1.msra.mxu0 0.0
    %4245 = vmatprep.subr.mxu0 0.0
    %4246 = vmatpush1.msra.mxu0 0.0
    %4247 = vmatprep.subr.mxu0 0.0
    %4248 = vmatpush1.msra.mxu0 0.0
    %4249 = vmatprep.subr.mxu0 0.0
    %4250 = vmatpush1.msra.mxu0 0.0
    %4251 = vmatprep.subr.mxu0 0.0
    %4252 = vmatpush1.msra.mxu0 0.0
    %4253 = vmatprep.subr.mxu0 0.0
    %4254 = vmatpush1.msra.mxu0 0.0
    %4255 = vmatprep.subr.mxu0 0.0
    %4256 = vmatpush1.msra.mxu0 0.0
    %4257 = vmatprep.subr.mxu0 0.0
    %4258 = vmatpush1.msra.mxu0 0.0
    %4259 = vmatprep.subr.mxu0 0.0
    %4260 = vmatpush1.msra.mxu0 0.0
    %4261 = vmatprep.subr.mxu0 0.0
    %4262 = vmatpush1.msra.mxu0 0.0
    %4263 = vmatprep.subr.mxu0 0.0
    %4264 = vmatpush1.msra.mxu0 0.0
    %4265 = vmatprep.subr.mxu0 0.0
    %4266 = vmatpush1.msra.mxu0 0.0
    %4267 = vmatprep.subr.mxu0 0.0
    %4268 = vmatpush1.msra.mxu0 0.0
    %4269 = vmatprep.subr.mxu0 0.0
    %4270 = vmatpush1.msra.mxu0 0.0
    %4271 = vmatprep.subr.mxu0 0.0
    %4272 = vmatpush1.msra.mxu0 0.0
    %4273 = vmatprep.subr.mxu0 0.0
    %4274 = vmatpush1.msra.mxu0 0.0
    %4275 = vmatprep.subr.mxu0 0.0
    %4276 = vmatpush1.msra.mxu0 0.0
    %4277 = vmatprep.subr.mxu0 0.0
    %4278 = vmatpush1.msra.mxu0 0.0
    %4279 = vmatprep.subr.mxu0 0.0
    %4280 = vmatpush1.msra.mxu0 0.0
    %4281 = vmatprep.subr.mxu0 0.0
    %4282 = vmatpush1.msra.mxu0 0.0
    %4283 = vmatprep.subr.mxu0 0.0
    %4284 = vmatpush1.msra.mxu0 0.0
    %4285 = vmatprep.subr.mxu0 0.0
    %4286 = vmatpush1.msra.mxu0 0.0
    %4287 = vmatprep.subr.mxu0 0.0
    %4288 = vmatpush1.msra.mxu0 0.0
    %4289 = vmatprep.subr.mxu0 0.0
    %4290 = vmatpush1.msra.mxu0 0.0
    %4291 = vmatprep.mubr.f32.mxu0 0.0
    %4292 = vmatmul.mubr.f32.gmra.mrb[0].mxu0 %v154
    %v4293 = vpop.f32.mrb[0].mxu0
    %v4294 = vadd.f32 0.0, %v4293
    %v4295 = vpop.f32.mrb[0].mxu0
    %4296 = vdwg.mxu0
    %4297 = vst.msk [vmem:[#allocation2 + $0x18] sm:$0x1] %vm226, %v4294
    %4298 = vst.msk [vmem:[#allocation3 + $0x18] sm:$0x1] %vm226, %v4220
    %v4299 = vld [vmem:[%s736] sm:$0xf]
    %v4300 = vld [vmem:[%s736 + $0x4] sm:$0xf]
    %v4301 = vld [vmem:[%s736 + $0x8] sm:$0xf]
    %v4302 = vld [vmem:[%s736 + $0xc] sm:$0xf]
    %v4303 = vunpack.c.l.bf16 %v4299
    %v4304 = vunpack.c.l.bf16 %v4300
    %v4305 = vunpack.c.l.bf16 %v4301
    %v4306 = vunpack.c.l.bf16 %v4302
    %v4307 = vld [vmem:[%s905] sm:$0xf]
    %v4308 = vld [vmem:[%s905 + $0x4] sm:$0xf]
    %v4309 = vld [vmem:[%s905 + $0x8] sm:$0xf]
    %v4310 = vld [vmem:[%s905 + $0xc] sm:$0xf]
    %v4311 = vunpack.c.l.bf16 %v4307
    %v4312 = vunpack.c.l.bf16 %v4308
    %v4313 = vunpack.c.l.bf16 %v4309
    %v4314 = vunpack.c.l.bf16 %v4310
    %v4315 = vmul.f32 %v4303, %v4311
    %v4316 = vmul.f32 %v4304, %v4312
    %v4317 = vmul.f32 %v4305, %v4313
    %v4318 = vmul.f32 %v4306, %v4314
    %4319 = vmatprep.subr.mxu0 0.0
    %4320 = vmatpush1.msra.mxu0 %v4315
    %4321 = vmatprep.subr.mxu0 0.0
    %4322 = vmatpush1.msra.mxu0 %v4316
    %4323 = vmatprep.subr.mxu0 0.0
    %4324 = vmatpush1.msra.mxu0 %v4317
    %4325 = vmatprep.subr.mxu0 0.0
    %4326 = vmatpush1.msra.mxu0 %v4318
    %4327 = vmatprep.subr.mxu0 0.0
    %4328 = vmatpush1.msra.mxu0 0.0
    %4329 = vmatprep.subr.mxu0 0.0
    %4330 = vmatpush1.msra.mxu0 0.0
    %4331 = vmatprep.subr.mxu0 0.0
    %4332 = vmatpush1.msra.mxu0 0.0
    %4333 = vmatprep.subr.mxu0 0.0
    %4334 = vmatpush1.msra.mxu0 0.0
    %4335 = vmatprep.subr.mxu0 0.0
    %4336 = vmatpush1.msra.mxu0 0.0
    %4337 = vmatprep.subr.mxu0 0.0
    %4338 = vmatpush1.msra.mxu0 0.0
    %4339 = vmatprep.subr.mxu0 0.0
    %4340 = vmatpush1.msra.mxu0 0.0
    %4341 = vmatprep.subr.mxu0 0.0
    %4342 = vmatpush1.msra.mxu0 0.0
    %4343 = vmatprep.subr.mxu0 0.0
    %4344 = vmatpush1.msra.mxu0 0.0
    %4345 = vmatprep.subr.mxu0 0.0
    %4346 = vmatpush1.msra.mxu0 0.0
    %4347 = vmatprep.subr.mxu0 0.0
    %4348 = vmatpush1.msra.mxu0 0.0
    %4349 = vmatprep.subr.mxu0 0.0
    %4350 = vmatpush1.msra.mxu0 0.0
    %4351 = vmatprep.subr.mxu0 0.0
    %4352 = vmatpush1.msra.mxu0 0.0
    %4353 = vmatprep.subr.mxu0 0.0
    %4354 = vmatpush1.msra.mxu0 0.0
    %4355 = vmatprep.subr.mxu0 0.0
    %4356 = vmatpush1.msra.mxu0 0.0
    %4357 = vmatprep.subr.mxu0 0.0
    %4358 = vmatpush1.msra.mxu0 0.0
    %4359 = vmatprep.subr.mxu0 0.0
    %4360 = vmatpush1.msra.mxu0 0.0
    %4361 = vmatprep.subr.mxu0 0.0
    %4362 = vmatpush1.msra.mxu0 0.0
    %4363 = vmatprep.subr.mxu0 0.0
    %4364 = vmatpush1.msra.mxu0 0.0
    %4365 = vmatprep.subr.mxu0 0.0
    %4366 = vmatpush1.msra.mxu0 0.0
    %4367 = vmatprep.subr.mxu0 0.0
    %4368 = vmatpush1.msra.mxu0 0.0
    %4369 = vmatprep.subr.mxu0 0.0
    %4370 = vmatpush1.msra.mxu0 0.0
    %4371 = vmatprep.subr.mxu0 0.0
    %4372 = vmatpush1.msra.mxu0 0.0
    %4373 = vmatprep.subr.mxu0 0.0
    %4374 = vmatpush1.msra.mxu0 0.0
    %4375 = vmatprep.subr.mxu0 0.0
    %4376 = vmatpush1.msra.mxu0 0.0
    %4377 = vmatprep.subr.mxu0 0.0
    %4378 = vmatpush1.msra.mxu0 0.0
    %4379 = vmatprep.subr.mxu0 0.0
    %4380 = vmatpush1.msra.mxu0 0.0
    %4381 = vmatprep.subr.mxu0 0.0
    %4382 = vmatpush1.msra.mxu0 0.0
    %4383 = vmatprep.mubr.f32.mxu0 0.0
    %4384 = vmatmul.mubr.f32.gmra.mrb[0].mxu0 %v50
    %v4385 = vpop.f32.mrb[0].mxu0
    %v4386 = vadd.f32 0.0, %v4385
    %v4387 = vpop.f32.mrb[0].mxu0
    %4388 = vmatprep.mubr.f32.mxu0 0.0
    %4389 = vmatmul.mubr.f32.gmra.mrb[0].mxu0 %v53
    %v4390 = vpop.f32.mrb[0].mxu0
    %v4391 = vadd.f32 0.0, %v4390
    %v4392 = vpop.f32.mrb[0].mxu0
    %4393 = vmatprep.mubr.f32.mxu0 0.0
    %4394 = vmatmul.mubr.f32.gmra.mrb[0].mxu0 %v56
    %v4395 = vpop.f32.mrb[0].mxu0
    %v4396 = vadd.f32 0.0, %v4395
    %v4397 = vpop.f32.mrb[0].mxu0
    %4398 = vdwg.mxu0
    %v4399 = vadd.f32 %v4386, %v141
    %v4400 = vadd.f32 %v4391, %v146
    %v4401 = vmax.f32 %v4399, 0.0
    %v4402 = vmax.f32 %v4400, 0.0
    %4403 = vmatprep.subr.mxu0 0.0
    %4404 = vmatpush1.msra.mxu0 %v4401
    %4405 = vmatprep.subr.mxu0 0.0
    %4406 = vmatpush1.msra.mxu0 %v4402
    %4407 = vmatprep.subr.mxu0 0.0
    %4408 = vmatpush1.msra.mxu0 0.0
    %4409 = vmatprep.subr.mxu0 0.0
    %4410 = vmatpush1.msra.mxu0 0.0
    %4411 = vmatprep.subr.mxu0 0.0
    %4412 = vmatpush1.msra.mxu0 0.0
    %4413 = vmatprep.subr.mxu0 0.0
    %4414 = vmatpush1.msra.mxu0 0.0
    %4415 = vmatprep.subr.mxu0 0.0
    %4416 = vmatpush1.msra.mxu0 0.0
    %4417 = vmatprep.subr.mxu0 0.0
    %4418 = vmatpush1.msra.mxu0 0.0
    %4419 = vmatprep.subr.mxu0 0.0
    %4420 = vmatpush1.msra.mxu0 0.0
    %4421 = vmatprep.subr.mxu0 0.0
    %4422 = vmatpush1.msra.mxu0 0.0
    %4423 = vmatprep.subr.mxu0 0.0
    %4424 = vmatpush1.msra.mxu0 0.0
    %4425 = vmatprep.subr.mxu0 0.0
    %4426 = vmatpush1.msra.mxu0 0.0
    %4427 = vmatprep.subr.mxu0 0.0
    %4428 = vmatpush1.msra.mxu0 0.0
    %4429 = vmatprep.subr.mxu0 0.0
    %4430 = vmatpush1.msra.mxu0 0.0
    %4431 = vmatprep.subr.mxu0 0.0
    %4432 = vmatpush1.msra.mxu0 0.0
    %4433 = vmatprep.subr.mxu0 0.0
    %4434 = vmatpush1.msra.mxu0 0.0
    %4435 = vmatprep.subr.mxu0 0.0
    %4436 = vmatpush1.msra.mxu0 0.0
    %4437 = vmatprep.subr.mxu0 0.0
    %4438 = vmatpush1.msra.mxu0 0.0
    %4439 = vmatprep.subr.mxu0 0.0
    %4440 = vmatpush1.msra.mxu0 0.0
    %4441 = vmatprep.subr.mxu0 0.0
    %4442 = vmatpush1.msra.mxu0 0.0
    %4443 = vmatprep.subr.mxu0 0.0
    %4444 = vmatpush1.msra.mxu0 0.0
    %4445 = vmatprep.subr.mxu0 0.0
    %4446 = vmatpush1.msra.mxu0 0.0
    %4447 = vmatprep.subr.mxu0 0.0
    %4448 = vmatpush1.msra.mxu0 0.0
    %4449 = vmatprep.subr.mxu0 0.0
    %4450 = vmatpush1.msra.mxu0 0.0
    %4451 = vmatprep.subr.mxu0 0.0
    %4452 = vmatpush1.msra.mxu0 0.0
    %4453 = vmatprep.subr.mxu0 0.0
    %4454 = vmatpush1.msra.mxu0 0.0
    %4455 = vmatprep.subr.mxu0 0.0
    %4456 = vmatpush1.msra.mxu0 0.0
    %4457 = vmatprep.subr.mxu0 0.0
    %4458 = vmatpush1.msra.mxu0 0.0
    %4459 = vmatprep.subr.mxu0 0.0
    %4460 = vmatpush1.msra.mxu0 0.0
    %4461 = vmatprep.subr.mxu0 0.0
    %4462 = vmatpush1.msra.mxu0 0.0
    %4463 = vmatprep.subr.mxu0 0.0
    %4464 = vmatpush1.msra.mxu0 0.0
    %4465 = vmatprep.subr.mxu0 0.0
    %4466 = vmatpush1.msra.mxu0 0.0
    %4467 = vmatprep.mubr.f32.mxu0 0.0
    %4468 = vmatmul.mubr.f32.gmra.mrb[0].mxu0 %v154
    %v4469 = vpop.f32.mrb[0].mxu0
    %v4470 = vadd.f32 0.0, %v4469
    %v4471 = vpop.f32.mrb[0].mxu0
    %4472 = vdwg.mxu0
    %4473 = vst.msk [vmem:[#allocation2 + $0x19] sm:$0x1] %vm226, %v4470
    %4474 = vst.msk [vmem:[#allocation3 + $0x19] sm:$0x1] %vm226, %v4396
    %v4475 = vld [vmem:[%s1074] sm:$0xf]
    %v4476 = vld [vmem:[%s1074 + $0x4] sm:$0xf]
    %v4477 = vld [vmem:[%s1074 + $0x8] sm:$0xf]
    %v4478 = vld [vmem:[%s1074 + $0xc] sm:$0xf]
    %v4479 = vunpack.c.l.bf16 %v4475
    %v4480 = vunpack.c.l.bf16 %v4476
    %v4481 = vunpack.c.l.bf16 %v4477
    %v4482 = vunpack.c.l.bf16 %v4478
    %v4483 = vmul.f32 %v4303, %v4479
    %v4484 = vmul.f32 %v4304, %v4480
    %v4485 = vmul.f32 %v4305, %v4481
    %v4486 = vmul.f32 %v4306, %v4482
    %4487 = vmatprep.subr.mxu0 0.0
    %4488 = vmatpush1.msra.mxu0 %v4483
    %4489 = vmatprep.subr.mxu0 0.0
    %4490 = vmatpush1.msra.mxu0 %v4484
    %4491 = vmatprep.subr.mxu0 0.0
    %4492 = vmatpush1.msra.mxu0 %v4485
    %4493 = vmatprep.subr.mxu0 0.0
    %4494 = vmatpush1.msra.mxu0 %v4486
    %4495 = vmatprep.subr.mxu0 0.0
    %4496 = vmatpush1.msra.mxu0 0.0
    %4497 = vmatprep.subr.mxu0 0.0
    %4498 = vmatpush1.msra.mxu0 0.0
    %4499 = vmatprep.subr.mxu0 0.0
    %4500 = vmatpush1.msra.mxu0 0.0
    %4501 = vmatprep.subr.mxu0 0.0
    %4502 = vmatpush1.msra.mxu0 0.0
    %4503 = vmatprep.subr.mxu0 0.0
    %4504 = vmatpush1.msra.mxu0 0.0
    %4505 = vmatprep.subr.mxu0 0.0
    %4506 = vmatpush1.msra.mxu0 0.0
    %4507 = vmatprep.subr.mxu0 0.0
    %4508 = vmatpush1.msra.mxu0 0.0
    %4509 = vmatprep.subr.mxu0 0.0
    %4510 = vmatpush1.msra.mxu0 0.0
    %4511 = vmatprep.subr.mxu0 0.0
    %4512 = vmatpush1.msra.mxu0 0.0
    %4513 = vmatprep.subr.mxu0 0.0
    %4514 = vmatpush1.msra.mxu0 0.0
    %4515 = vmatprep.subr.mxu0 0.0
    %4516 = vmatpush1.msra.mxu0 0.0
    %4517 = vmatprep.subr.mxu0 0.0
    %4518 = vmatpush1.msra.mxu0 0.0
    %4519 = vmatprep.subr.mxu0 0.0
    %4520 = vmatpush1.msra.mxu0 0.0
    %4521 = vmatprep.subr.mxu0 0.0
    %4522 = vmatpush1.msra.mxu0 0.0
    %4523 = vmatprep.subr.mxu0 0.0
    %4524 = vmatpush1.msra.mxu0 0.0
    %4525 = vmatprep.subr.mxu0 0.0
    %4526 = vmatpush1.msra.mxu0 0.0
    %4527 = vmatprep.subr.mxu0 0.0
    %4528 = vmatpush1.msra.mxu0 0.0
    %4529 = vmatprep.subr.mxu0 0.0
    %4530 = vmatpush1.msra.mxu0 0.0
    %4531 = vmatprep.subr.mxu0 0.0
    %4532 = vmatpush1.msra.mxu0 0.0
    %4533 = vmatprep.subr.mxu0 0.0
    %4534 = vmatpush1.msra.mxu0 0.0
    %4535 = vmatprep.subr.mxu0 0.0
    %4536 = vmatpush1.msra.mxu0 0.0
    %4537 = vmatprep.subr.mxu0 0.0
    %4538 = vmatpush1.msra.mxu0 0.0
    %4539 = vmatprep.subr.mxu0 0.0
    %4540 = vmatpush1.msra.mxu0 0.0
    %4541 = vmatprep.subr.mxu0 0.0
    %4542 = vmatpush1.msra.mxu0 0.0
    %4543 = vmatprep.subr.mxu0 0.0
    %4544 = vmatpush1.msra.mxu0 0.0
    %4545 = vmatprep.subr.mxu0 0.0
    %4546 = vmatpush1.msra.mxu0 0.0
    %4547 = vmatprep.subr.mxu0 0.0
    %4548 = vmatpush1.msra.mxu0 0.0
    %4549 = vmatprep.subr.mxu0 0.0
    %4550 = vmatpush1.msra.mxu0 0.0
    %4551 = vmatprep.mubr.f32.mxu0 0.0
    %4552 = vmatmul.mubr.f32.gmra.mrb[0].mxu0 %v50
    %v4553 = vpop.f32.mrb[0].mxu0
    %v4554 = vadd.f32 0.0, %v4553
    %v4555 = vpop.f32.mrb[0].mxu0
    %4556 = vmatprep.mubr.f32.mxu0 0.0
    %4557 = vmatmul.mubr.f32.gmra.mrb[0].mxu0 %v53
    %v4558 = vpop.f32.mrb[0].mxu0
    %v4559 = vadd.f32 0.0, %v4558
    %v4560 = vpop.f32.mrb[0].mxu0
    %4561 = vmatprep.mubr.f32.mxu0 0.0
    %4562 = vmatmul.mubr.f32.gmra.mrb[0].mxu0 %v56
    %v4563 = vpop.f32.mrb[0].mxu0
    %v4564 = vadd.f32 0.0, %v4563
    %v4565 = vpop.f32.mrb[0].mxu0
    %4566 = vdwg.mxu0
    %v4567 = vadd.f32 %v4554, %v141
    %v4568 = vadd.f32 %v4559, %v146
    %v4569 = vmax.f32 %v4567, 0.0
    %v4570 = vmax.f32 %v4568, 0.0
    %4571 = vmatprep.subr.mxu0 0.0
    %4572 = vmatpush1.msra.mxu0 %v4569
    %4573 = vmatprep.subr.mxu0 0.0
    %4574 = vmatpush1.msra.mxu0 %v4570
    %4575 = vmatprep.subr.mxu0 0.0
    %4576 = vmatpush1.msra.mxu0 0.0
    %4577 = vmatprep.subr.mxu0 0.0
    %4578 = vmatpush1.msra.mxu0 0.0
    %4579 = vmatprep.subr.mxu0 0.0
    %4580 = vmatpush1.msra.mxu0 0.0
    %4581 = vmatprep.subr.mxu0 0.0
    %4582 = vmatpush1.msra.mxu0 0.0
    %4583 = vmatprep.subr.mxu0 0.0
    %4584 = vmatpush1.msra.mxu0 0.0
    %4585 = vmatprep.subr.mxu0 0.0
    %4586 = vmatpush1.msra.mxu0 0.0
    %4587 = vmatprep.subr.mxu0 0.0
    %4588 = vmatpush1.msra.mxu0 0.0
    %4589 = vmatprep.subr.mxu0 0.0
    %4590 = vmatpush1.msra.mxu0 0.0
    %4591 = vmatprep.subr.mxu0 0.0
    %4592 = vmatpush1.msra.mxu0 0.0
    %4593 = vmatprep.subr.mxu0 0.0
    %4594 = vmatpush1.msra.mxu0 0.0
    %4595 = vmatprep.subr.mxu0 0.0
    %4596 = vmatpush1.msra.mxu0 0.0
    %4597 = vmatprep.subr.mxu0 0.0
    %4598 = vmatpush1.msra.mxu0 0.0
    %4599 = vmatprep.subr.mxu0 0.0
    %4600 = vmatpush1.msra.mxu0 0.0
    %4601 = vmatprep.subr.mxu0 0.0
    %4602 = vmatpush1.msra.mxu0 0.0
    %4603 = vmatprep.subr.mxu0 0.0
    %4604 = vmatpush1.msra.mxu0 0.0
    %4605 = vmatprep.subr.mxu0 0.0
    %4606 = vmatpush1.msra.mxu0 0.0
    %4607 = vmatprep.subr.mxu0 0.0
    %4608 = vmatpush1.msra.mxu0 0.0
    %4609 = vmatprep.subr.mxu0 0.0
    %4610 = vmatpush1.msra.mxu0 0.0
    %4611 = vmatprep.subr.mxu0 0.0
    %4612 = vmatpush1.msra.mxu0 0.0
    %4613 = vmatprep.subr.mxu0 0.0
    %4614 = vmatpush1.msra.mxu0 0.0
    %4615 = vmatprep.subr.mxu0 0.0
    %4616 = vmatpush1.msra.mxu0 0.0
    %4617 = vmatprep.subr.mxu0 0.0
    %4618 = vmatpush1.msra.mxu0 0.0
    %4619 = vmatprep.subr.mxu0 0.0
    %4620 = vmatpush1.msra.mxu0 0.0
    %4621 = vmatprep.subr.mxu0 0.0
    %4622 = vmatpush1.msra.mxu0 0.0
    %4623 = vmatprep.subr.mxu0 0.0
    %4624 = vmatpush1.msra.mxu0 0.0
    %4625 = vmatprep.subr.mxu0 0.0
    %4626 = vmatpush1.msra.mxu0 0.0
    %4627 = vmatprep.subr.mxu0 0.0
    %4628 = vmatpush1.msra.mxu0 0.0
    %4629 = vmatprep.subr.mxu0 0.0
    %4630 = vmatpush1.msra.mxu0 0.0
    %4631 = vmatprep.subr.mxu0 0.0
    %4632 = vmatpush1.msra.mxu0 0.0
    %4633 = vmatprep.subr.mxu0 0.0
    %4634 = vmatpush1.msra.mxu0 0.0
    %4635 = vmatprep.mubr.f32.mxu0 0.0
    %4636 = vmatmul.mubr.f32.gmra.mrb[0].mxu0 %v154
    %v4637 = vpop.f32.mrb[0].mxu0
    %v4638 = vadd.f32 0.0, %v4637
    %v4639 = vpop.f32.mrb[0].mxu0
    %4640 = vdwg.mxu0
    %4641 = vst.msk [vmem:[#allocation2 + $0x1a] sm:$0x1] %vm226, %v4638
    %4642 = vst.msk [vmem:[#allocation3 + $0x1a] sm:$0x1] %vm226, %v4564
    %v4643 = vld [vmem:[%s905] sm:$0xf]
    %v4644 = vld [vmem:[%s905 + $0x4] sm:$0xf]
    %v4645 = vld [vmem:[%s905 + $0x8] sm:$0xf]
    %v4646 = vld [vmem:[%s905 + $0xc] sm:$0xf]
    %v4647 = vunpack.c.l.bf16 %v4643
    %v4648 = vunpack.c.l.bf16 %v4644
    %v4649 = vunpack.c.l.bf16 %v4645
    %v4650 = vunpack.c.l.bf16 %v4646
    %v4651 = vld [vmem:[%s1074] sm:$0xf]
    %v4652 = vld [vmem:[%s1074 + $0x4] sm:$0xf]
    %v4653 = vld [vmem:[%s1074 + $0x8] sm:$0xf]
    %v4654 = vld [vmem:[%s1074 + $0xc] sm:$0xf]
    %v4655 = vunpack.c.l.bf16 %v4651
    %v4656 = vunpack.c.l.bf16 %v4652
    %v4657 = vunpack.c.l.bf16 %v4653
    %v4658 = vunpack.c.l.bf16 %v4654
    %v4659 = vmul.f32 %v4647, %v4655
    %v4660 = vmul.f32 %v4648, %v4656
    %v4661 = vmul.f32 %v4649, %v4657
    %v4662 = vmul.f32 %v4650, %v4658
    %4663 = vmatprep.subr.mxu0 0.0
    %4664 = vmatpush1.msra.mxu0 %v4659
    %4665 = vmatprep.subr.mxu0 0.0
    %4666 = vmatpush1.msra.mxu0 %v4660
    %4667 = vmatprep.subr.mxu0 0.0
    %4668 = vmatpush1.msra.mxu0 %v4661
    %4669 = vmatprep.subr.mxu0 0.0
    %4670 = vmatpush1.msra.mxu0 %v4662
    %4671 = vmatprep.subr.mxu0 0.0
    %4672 = vmatpush1.msra.mxu0 0.0
    %4673 = vmatprep.subr.mxu0 0.0
    %4674 = vmatpush1.msra.mxu0 0.0
    %4675 = vmatprep.subr.mxu0 0.0
    %4676 = vmatpush1.msra.mxu0 0.0
    %4677 = vmatprep.subr.mxu0 0.0
    %4678 = vmatpush1.msra.mxu0 0.0
    %4679 = vmatprep.subr.mxu0 0.0
    %4680 = vmatpush1.msra.mxu0 0.0
    %4681 = vmatprep.subr.mxu0 0.0
    %4682 = vmatpush1.msra.mxu0 0.0
    %4683 = vmatprep.subr.mxu0 0.0
    %4684 = vmatpush1.msra.mxu0 0.0
    %4685 = vmatprep.subr.mxu0 0.0
    %4686 = vmatpush1.msra.mxu0 0.0
    %4687 = vmatprep.subr.mxu0 0.0
    %4688 = vmatpush1.msra.mxu0 0.0
    %4689 = vmatprep.subr.mxu0 0.0
    %4690 = vmatpush1.msra.mxu0 0.0
    %4691 = vmatprep.subr.mxu0 0.0
    %4692 = vmatpush1.msra.mxu0 0.0
    %4693 = vmatprep.subr.mxu0 0.0
    %4694 = vmatpush1.msra.mxu0 0.0
    %4695 = vmatprep.subr.mxu0 0.0
    %4696 = vmatpush1.msra.mxu0 0.0
    %4697 = vmatprep.subr.mxu0 0.0
    %4698 = vmatpush1.msra.mxu0 0.0
    %4699 = vmatprep.subr.mxu0 0.0
    %4700 = vmatpush1.msra.mxu0 0.0
    %4701 = vmatprep.subr.mxu0 0.0
    %4702 = vmatpush1.msra.mxu0 0.0
    %4703 = vmatprep.subr.mxu0 0.0
    %4704 = vmatpush1.msra.mxu0 0.0
    %4705 = vmatprep.subr.mxu0 0.0
    %4706 = vmatpush1.msra.mxu0 0.0
    %4707 = vmatprep.subr.mxu0 0.0
    %4708 = vmatpush1.msra.mxu0 0.0
    %4709 = vmatprep.subr.mxu0 0.0
    %4710 = vmatpush1.msra.mxu0 0.0
    %4711 = vmatprep.subr.mxu0 0.0
    %4712 = vmatpush1.msra.mxu0 0.0
    %4713 = vmatprep.subr.mxu0 0.0
    %4714 = vmatpush1.msra.mxu0 0.0
    %4715 = vmatprep.subr.mxu0 0.0
    %4716 = vmatpush1.msra.mxu0 0.0
    %4717 = vmatprep.subr.mxu0 0.0
    %4718 = vmatpush1.msra.mxu0 0.0
    %4719 = vmatprep.subr.mxu0 0.0
    %4720 = vmatpush1.msra.mxu0 0.0
    %4721 = vmatprep.subr.mxu0 0.0
    %4722 = vmatpush1.msra.mxu0 0.0
    %4723 = vmatprep.subr.mxu0 0.0
    %4724 = vmatpush1.msra.mxu0 0.0
    %4725 = vmatprep.subr.mxu0 0.0
    %4726 = vmatpush1.msra.mxu0 0.0
    %4727 = vmatprep.mubr.f32.mxu0 0.0
    %4728 = vmatmul.mubr.f32.gmra.mrb[0].mxu0 %v50
    %v4729 = vpop.f32.mrb[0].mxu0
    %v4730 = vadd.f32 0.0, %v4729
    %v4731 = vpop.f32.mrb[0].mxu0
    %4732 = vmatprep.mubr.f32.mxu0 0.0
    %4733 = vmatmul.mubr.f32.gmra.mrb[0].mxu0 %v53
    %v4734 = vpop.f32.mrb[0].mxu0
    %v4735 = vadd.f32 0.0, %v4734
    %v4736 = vpop.f32.mrb[0].mxu0
    %4737 = vmatprep.mubr.f32.mxu0 0.0
    %4738 = vmatmul.mubr.f32.gmra.mrb[0].mxu0 %v56
    %v4739 = vpop.f32.mrb[0].mxu0
    %v4740 = vadd.f32 0.0, %v4739
    %v4741 = vpop.f32.mrb[0].mxu0
    %4742 = vdwg.mxu0
    %v4743 = vadd.f32 %v4730, %v141
    %v4744 = vadd.f32 %v4735, %v146
    %v4745 = vmax.f32 %v4743, 0.0
    %v4746 = vmax.f32 %v4744, 0.0
    %4747 = vmatprep.subr.mxu0 0.0
    %4748 = vmatpush1.msra.mxu0 %v4745
    %4749 = vmatprep.subr.mxu0 0.0
    %4750 = vmatpush1.msra.mxu0 %v4746
    %4751 = vmatprep.subr.mxu0 0.0
    %4752 = vmatpush1.msra.mxu0 0.0
    %4753 = vmatprep.subr.mxu0 0.0
    %4754 = vmatpush1.msra.mxu0 0.0
    %4755 = vmatprep.subr.mxu0 0.0
    %4756 = vmatpush1.msra.mxu0 0.0
    %4757 = vmatprep.subr.mxu0 0.0
    %4758 = vmatpush1.msra.mxu0 0.0
    %4759 = vmatprep.subr.mxu0 0.0
    %4760 = vmatpush1.msra.mxu0 0.0
    %4761 = vmatprep.subr.mxu0 0.0
    %4762 = vmatpush1.msra.mxu0 0.0
    %4763 = vmatprep.subr.mxu0 0.0
    %4764 = vmatpush1.msra.mxu0 0.0
    %4765 = vmatprep.subr.mxu0 0.0
    %4766 = vmatpush1.msra.mxu0 0.0
    %4767 = vmatprep.subr.mxu0 0.0
    %4768 = vmatpush1.msra.mxu0 0.0
    %4769 = vmatprep.subr.mxu0 0.0
    %4770 = vmatpush1.msra.mxu0 0.0
    %4771 = vmatprep.subr.mxu0 0.0
    %4772 = vmatpush1.msra.mxu0 0.0
    %4773 = vmatprep.subr.mxu0 0.0
    %4774 = vmatpush1.msra.mxu0 0.0
    %4775 = vmatprep.subr.mxu0 0.0
    %4776 = vmatpush1.msra.mxu0 0.0
    %4777 = vmatprep.subr.mxu0 0.0
    %4778 = vmatpush1.msra.mxu0 0.0
    %4779 = vmatprep.subr.mxu0 0.0
    %4780 = vmatpush1.msra.mxu0 0.0
    %4781 = vmatprep.subr.mxu0 0.0
    %4782 = vmatpush1.msra.mxu0 0.0
    %4783 = vmatprep.subr.mxu0 0.0
    %4784 = vmatpush1.msra.mxu0 0.0
    %4785 = vmatprep.subr.mxu0 0.0
    %4786 = vmatpush1.msra.mxu0 0.0
    %4787 = vmatprep.subr.mxu0 0.0
    %4788 = vmatpush1.msra.mxu0 0.0
    %4789 = vmatprep.subr.mxu0 0.0
    %4790 = vmatpush1.msra.mxu0 0.0
    %4791 = vmatprep.subr.mxu0 0.0
    %4792 = vmatpush1.msra.mxu0 0.0
    %4793 = vmatprep.subr.mxu0 0.0
    %4794 = vmatpush1.msra.mxu0 0.0
    %4795 = vmatprep.subr.mxu0 0.0
    %4796 = vmatpush1.msra.mxu0 0.0
    %4797 = vmatprep.subr.mxu0 0.0
    %4798 = vmatpush1.msra.mxu0 0.0
    %4799 = vmatprep.subr.mxu0 0.0
    %4800 = vmatpush1.msra.mxu0 0.0
    %4801 = vmatprep.subr.mxu0 0.0
    %4802 = vmatpush1.msra.mxu0 0.0
    %4803 = vmatprep.subr.mxu0 0.0
    %4804 = vmatpush1.msra.mxu0 0.0
    %4805 = vmatprep.subr.mxu0 0.0
    %4806 = vmatpush1.msra.mxu0 0.0
    %4807 = vmatprep.subr.mxu0 0.0
    %4808 = vmatpush1.msra.mxu0 0.0
    %4809 = vmatprep.subr.mxu0 0.0
    %4810 = vmatpush1.msra.mxu0 0.0
    %4811 = vmatprep.mubr.f32.mxu0 0.0
    %4812 = vmatmul.mubr.f32.gmra.mrb[0].mxu0 %v154
    %v4813 = vpop.f32.mrb[0].mxu0
    %v4814 = vadd.f32 0.0, %v4813
    %v4815 = vpop.f32.mrb[0].mxu0
    %4816 = vdwg.mxu0
    %4817 = vst.msk [vmem:[#allocation2 + $0x1b] sm:$0x1] %vm226, %v4814
    %4818 = vst.msk [vmem:[#allocation3 + $0x1b] sm:$0x1] %vm226, %v4740
    %v4819 = vld [vmem:[#allocation2] sm:$0xff]
    %v4820 = vld [vmem:[#allocation2 + $0x8] sm:$0xff]
    %v4821 = vld [vmem:[#allocation2 + $0x10] sm:$0xff]
    %v4822 = vld [vmem:[#allocation2 + $0x18] sm:$0xff]
    %v4823 = vld [vmem:[#allocation3] sm:$0xff]
    %v4824 = vld [vmem:[#allocation3 + $0x8] sm:$0xff]
    %v4825 = vld [vmem:[#allocation3 + $0x10] sm:$0xff]
    %v4826 = vld [vmem:[#allocation3 + $0x18] sm:$0xff]
    %vm4827 = vcmask 15360
    %v4828 = vsel %vm4827, %v4819, -inf
    %v4829 = vsel %vm4827, %v4820, -inf
    %v4830 = vsel %vm4827, %v4821, -inf
    %v4831 = vsel %vm4827, %v4822, -inf
    %v4832 = vmax.f32 %v4828, %v4829
    %v4833 = vmax.f32 %v4830, %v4831
    %v4834 = vmax.f32 %v4832, %v4833
    %v4835 = vrot.slane %v4834, 4
    %v4836 = vmax.f32 %v4834, %v4835
    %v4837 = vrot.slane %v4836, 2
    %v4838 = vmax.f32 %v4836, %v4837
    %v4839 = vrot.slane %v4838, 1
    %v4840 = vmax.f32 %v4838, %v4839
    %v4841 = vsub.f32 %v4819, %v4840
    %v4842 = vsub.f32 %v4820, %v4840
    %v4843 = vsub.f32 %v4821, %v4840
    %v4844 = vsub.f32 %v4822, %v4840
    %v4845 = vmul.f32 %v4841, 1.442695
    %v4846 = vpow.pop %v4845
    %v4847 = vmul.f32 %v4842, 1.442695
    %v4848 = vpow.pop %v4847
    %v4849 = vmul.f32 %v4843, 1.442695
    %v4850 = vpow.pop %v4849
    %v4851 = vmul.f32 %v4844, 1.442695
    %v4852 = vpow.pop %v4851
    %v4853 = vsel %vm4827, %v4846, 0.0
    %v4854 = vsel %vm4827, %v4848, 0.0
    %v4855 = vadd.f32 %v4853, %v4854
    %v4856 = vsel %vm4827, %v4850, 0.0
    %v4857 = vadd.f32 %v4855, %v4856
    %v4858 = vsel %vm4827, %v4852, 0.0
    %v4859 = vadd.f32 %v4857, %v4858
    %v4860 = vrot.slane %v4859, 4
    %v4861 = vadd.f32 %v4859, %v4860
    %v4862 = vrot.slane %v4861, 2
    %v4863 = vadd.f32 %v4861, %v4862
    %v4864 = vrot.slane %v4863, 1
    %v4865 = vadd.f32 %v4863, %v4864
    %v4866 = vmul.f32 %v4846, %v4823
    %v4867 = vmul.f32 %v4848, %v4824
    %v4868 = vmul.f32 %v4850, %v4825
    %v4869 = vmul.f32 %v4852, %v4826
    %v4870 = vsel %vm4827, %v4866, 0.0
    %v4871 = vsel %vm4827, %v4867, 0.0
    %v4872 = vadd.f32 %v4870, %v4871
    %v4873 = vsel %vm4827, %v4868, 0.0
    %v4874 = vadd.f32 %v4872, %v4873
    %v4875 = vsel %vm4827, %v4869, 0.0
    %v4876 = vadd.f32 %v4874, %v4875
    %v4877 = vrot.slane %v4876, 4
    %v4878 = vadd.f32 %v4876, %v4877
    %v4879 = vrot.slane %v4878, 2
    %v4880 = vadd.f32 %v4878, %v4879
    %v4881 = vrot.slane %v4880, 1
    %v4882 = vadd.f32 %v4880, %v4881
    %v4883 = vrcp.pop %v4865
    %v4884 = vmul.f32 %v4882, %v4883
    %4885 = vst.msk [vmem:[#allocation4] sm:$0x1] %vm226, %v4884
    // Predicated region
    $region18: #{fm_attention.1} parent=1 // pred_check
      _
    $region19: #{fm_attention.1} parent=1 // pred_check_branch
      %4887 = sbr.rel (0) target = $region21
    $region20: #{fm_attention.1} parent=1 // pred_region
      %s4889 = ssub.s32 16, 16
      %4890 = vsyncadd [#allocation5], %s4889
      %s4892 = sshll.u32 [#allocation4], 4
      %s4893 = int_to_ptr.vmem [resolvable:$true] %s4892
      %4895 = dma.vmem_to_hbm [thread:$0]  %s4893, 16, %s4, [#allocation5]
    $region21: #{fm_attention.1} parent=1 // pred_fallthru
      _
    // Predicated region
    $region22: #{fm_attention.1} parent=1 // pred_check
      _
    $region23: #{fm_attention.1} parent=1 // pred_check_branch
      %4897 = sbr.rel (0) target = $region25
    $region24: #{fm_attention.1} parent=1 // pred_region
      %4898 = dma.done [#allocation5], 16
    $region25: #{fm_attention.1} parent=1 // pred_fallthru
      _
    %4899 = vsyncpa [#allocation5], 1

</llo_original>
